<compile_context>
chip_gen: v7x
topology: tpu7x:2x2x1
jax: 0.10.0
libtpu: 0.0.40
codegen_flags: <defaults>
</compile_context>

<pallas_src>
import functools

import jax
import jax.numpy as jnp
from jax import lax
from jax.experimental import pallas as pl
from jax.experimental.pallas import tpu as pltpu


def attention_kernel(enc_ref, attn2_ref, weT_ref, wf_ref,
                     wenc_ref, alpha_ref, *, p_actual, a_chunk):
    TB, P, E = enc_ref.shape
    A = weT_ref.shape[1]
    n_chunks = A // a_chunk

    enc = enc_ref[...]                                        # (TB, P, E) f32
    # bf16 MXU operand is created in VMEM, right before the dot.
    enc2d_bf = enc.astype(jnp.bfloat16).reshape(TB * P, E)    # P % 8 == 0 -> layout free

    def a_step(c, scores):
        if isinstance(c, int):                                # static (single-chunk) path
            a0 = c * a_chunk
        else:                                                 # dynamic (fori_loop) path
            a0 = pl.multiple_of(c * a_chunk, a_chunk)
        w_c = weT_ref[:, pl.ds(a0, a_chunk)]                  # (E, TA) bf16
        attn1_c = jnp.dot(enc2d_bf, w_c,
                          preferred_element_type=jnp.float32)  # (TB*P, TA) f32 acc
        attn2_c = attn2_ref[:, pl.ds(a0, a_chunk)]             # (TB, TA) f32 (biases folded)
        h_c = jnp.maximum(attn1_c.reshape(TB, P, a_chunk)
                          + attn2_c[:, None, :], 0.0)          # (TB, P, TA)
        wf_c = wf_ref[:, pl.ds(a0, a_chunk)]                   # (1, TA)
        # N=1 projection as VPU mul + lane reduce (no degenerate (.,A)@(A,1) matmul).
        return scores + jnp.sum(h_c * wf_c[:, None, :], axis=-1)   # (TB, P)

    scores0 = jnp.zeros((TB, P), jnp.float32)
    if n_chunks == 1:
        scores = a_step(0, scores0)
    else:
        scores = lax.fori_loop(0, n_chunks, a_step, scores0)

    if p_actual != P:   # static: mask padded pixel columns out of the softmax
        lane = lax.broadcasted_iota(jnp.int32, (TB, P), 1)
        scores = jnp.where(lane < p_actual, scores, -jnp.inf)

    # Softmax over pixels, lane-major, f32; divide on the EUP slot.
    m = jnp.max(scores, axis=-1, keepdims=True)
    e = jnp.exp(scores - m)
    alpha = e * pl.reciprocal(jnp.sum(e, axis=-1, keepdims=True), approx=True)

    # Attention-weighted encoding from the f32 enc block already in VMEM.
    wenc = jnp.sum(enc * alpha[:, :, None], axis=1)            # (TB, E) f32

    wenc_ref[...] = wenc.astype(wenc_ref.dtype)
    alpha_ref[...] = alpha.astype(alpha_ref.dtype)


def _round_up(x, m):
    return ((x + m - 1) // m) * m


def _vmem_limit_bytes(TB, Pp, E, A, a_chunk):
    blocks = 2 * (TB * Pp * E * 4 + TB * A * 4)       # enc + attn2 (double-buffered)
    blocks += 2 * (E * A * 2 + A * 4)                 # weT (bf16) + wf
    blocks += 2 * (TB * E * 4 + TB * Pp * 4)          # outputs
    scratch = TB * Pp * E * 2                         # in-kernel bf16 enc copy
    scratch += 4 * TB * Pp * a_chunk * 4              # attn1/h chunk intermediates
    est = blocks + scratch
    return int(min(max(2 * est, 32 * 1024 * 1024), 64 * 1024 * 1024))


@functools.partial(jax.jit, static_argnames=("a_chunk",))
def attention_pallas(encoder_out, decoder_hidden, params, a_chunk=None):
    """encoder_out: (B, P, E) f32, decoder_hidden: (B, D) f32."""
    B, P, E = encoder_out.shape
    A = params["We"].shape[0]

    TB = 8                                   # always a multiple of 8 sublanes
    Bp = _round_up(B, TB)
    Pp = _round_up(P, 8)                     # layout-free reshape (TB,P,E)->(TB*P,E)

    if a_chunk is None:
        if A % 256 == 0:
            a_chunk = 256
        elif A % 128 == 0:
            a_chunk = 128
        else:
            a_chunk = A
    assert A % a_chunk == 0

    enc = encoder_out.astype(jnp.float32)
    dec = decoder_hidden.astype(jnp.float32)
    if Bp != B or Pp != P:
        enc = jnp.pad(enc, ((0, Bp - B), (0, Pp - P), (0, 0)))
    if Bp != B:
        dec = jnp.pad(dec, ((0, Bp - B), (0, 0)))

    # Hoisted decoder projection (one batch-wide matmul), biases folded in.
    # bf (the scalar score bias) is mathematically dead under softmax -> dropped.
    attn2 = jnp.dot(dec, params["Wd"].T.astype(jnp.float32),
                    precision=jax.lax.Precision.HIGHEST)
    attn2 = attn2 + params["bd"].astype(jnp.float32) + params["be"].astype(jnp.float32)

    weT = params["We"].T.astype(jnp.bfloat16)                 # (E, A) MXU operand
    wf = params["Wf"].reshape(1, A).astype(jnp.float32)       # lane-row for the VPU

    kernel = functools.partial(attention_kernel, p_actual=P, a_chunk=a_chunk)

    grid_spec = pltpu.PrefetchScalarGridSpec(
        num_scalar_prefetch=0,
        grid=(Bp // TB,),
        in_specs=[
            pl.BlockSpec((TB, Pp, E), lambda b: (b, 0, 0)),   # encoder block (streamed f32)
            pl.BlockSpec((TB, A), lambda b: (b, 0)),          # precomputed attn2 block
            pl.BlockSpec((E, A), lambda b: (0, 0)),           # We^T (grid-invariant)
            pl.BlockSpec((1, A), lambda b: (0, 0)),           # Wf row (grid-invariant)
        ],
        out_specs=[
            pl.BlockSpec((TB, E), lambda b: (b, 0)),          # weighted encoding
            pl.BlockSpec((TB, Pp), lambda b: (b, 0)),         # alpha
        ],
    )

    wenc, alpha = pl.pallas_call(
        kernel,
        out_shape=(
            jax.ShapeDtypeStruct((Bp, E), jnp.float32),
            jax.ShapeDtypeStruct((Bp, Pp), jnp.float32),
        ),
        grid_spec=grid_spec,
        compiler_params=pltpu.CompilerParams(
            dimension_semantics=("parallel",),
            vmem_limit_bytes=_vmem_limit_bytes(TB, Pp, E, A, a_chunk)),
    )(enc, attn2, weT, wf)

    return wenc[:B], alpha[:B, :P]


def attention_ref(encoder_out, decoder_hidden, params):
    """Pure-JAX f32 reference matching the PyTorch forward exactly."""
    attn1 = encoder_out @ params["We"].T + params["be"]                  # (B, P, A)
    attn2 = decoder_hidden @ params["Wd"].T + params["bd"]               # (B, A)
    attn = jax.nn.relu(attn1 + attn2[:, None, :]) @ params["Wf"].T + params["bf"]
    alpha = jax.nn.softmax(attn, axis=1)                                 # (B, P, 1)
    wenc = (encoder_out * alpha).sum(axis=1)                             # (B, E)
    return wenc, alpha[..., 0]


if __name__ == "__main__":
    # Small dims consistent with the module (real dims 2048/512/512 just scale
    # E/D/A).  B=32 gives a 4-step "parallel" grid (>=2 steps per v7x core);
    # A=256 with a_chunk=128 exercises the in-kernel A-chunking loop.
    B, P = 32, 64
    encoder_dim, decoder_dim, attention_dim = 256, 128, 256

    key = jax.random.PRNGKey(0)
    keys = jax.random.split(key, 8)

    params = {
        "We": jax.random.normal(keys[0], (attention_dim, encoder_dim), jnp.float32) * 0.02,
        "be": jax.random.normal(keys[1], (attention_dim,), jnp.float32) * 0.02,
        "Wd": jax.random.normal(keys[2], (attention_dim, decoder_dim), jnp.float32) * 0.02,
        "bd": jax.random.normal(keys[3], (attention_dim,), jnp.float32) * 0.02,
        "Wf": jax.random.normal(keys[4], (1, attention_dim), jnp.float32) * 0.02,
        "bf": jax.random.normal(keys[5], (1,), jnp.float32) * 0.02,
    }

    encoder_out = jax.random.normal(keys[6], (B, P, encoder_dim), jnp.float32)
    decoder_hidden = jax.random.normal(keys[7], (B, decoder_dim), jnp.float32)

    wenc, alpha = attention_pallas(encoder_out, decoder_hidden, params, a_chunk=128)
    jax.block_until_ready((wenc, alpha))

    wenc_ref, alpha_ref = attention_ref(encoder_out, decoder_hidden, params)
    assert wenc.shape == (B, encoder_dim) and alpha.shape == (B, P)
    # bf16 MXU scores + EUP approx reciprocal -> slightly loosened tolerances.
    assert jnp.allclose(wenc, wenc_ref, atol=1e-2, rtol=1e-2), \
        float(jnp.max(jnp.abs(wenc - wenc_ref)))
    assert jnp.allclose(alpha, alpha_ref, atol=2e-3, rtol=1e-2), \
        float(jnp.max(jnp.abs(alpha - alpha_ref)))

    print("KERNEL_OK")
</pallas_src>

<mosaic_0001>
module attributes {stable_mosaic.version = 11 : i64} {
  func.func @attention_kernel(%arg0: i32, %arg1: memref<8x64x256xf32, #tpu.memory_space<vmem>>, %arg2: memref<8x256xf32, #tpu.memory_space<vmem>>, %arg3: memref<256x256xbf16, #tpu.memory_space<vmem>>, %arg4: memref<1x256xf32, #tpu.memory_space<vmem>>, %arg5: memref<8x256xf32, #tpu.memory_space<vmem>>, %arg6: memref<8x64xf32, #tpu.memory_space<vmem>>) attributes {dimension_semantics = [#tpu.dimension_semantics<parallel>], iteration_bounds = array<i64: 4>, scalar_prefetch = 0 : i64, scratch_operands = 0 : i64, tpu.core_type = #tpu.core_type<tc>, window_params = [{transform_indices = @transform_0, window_bounds = array<i64: 8, 64, 256>}, {transform_indices = @transform_1, window_bounds = array<i64: 8, 256>}, {pipeline_mode = #tpu.pipeline_mode<synchronous>, transform_indices = @transform_2, window_bounds = array<i64: 256, 256>}, {pipeline_mode = #tpu.pipeline_mode<synchronous>, transform_indices = @transform_3, window_bounds = array<i64: 1, 256>}, {transform_indices = @transform_4, window_bounds = array<i64: 8, 256>}, {transform_indices = @transform_5, window_bounds = array<i64: 8, 64>}]} {
    %c0 = arith.constant 0 : index
    %c0_0 = arith.constant 0 : index
    %c0_1 = arith.constant 0 : index
    %0 = vector.load %arg1[%c0, %c0_0, %c0_1] : memref<8x64x256xf32, #tpu.memory_space<vmem>>, vector<8x64x256xf32>
    %1 = arith.truncf %0 : vector<8x64x256xf32> to vector<8x64x256xbf16>
    %2 = vector.shape_cast %1 : vector<8x64x256xbf16> to vector<512x256xbf16>
    %cst = arith.constant 0.000000e+00 : f32
    %3 = vector.broadcast %cst : f32 to vector<8x64xf32>
    %c0_i32 = arith.constant 0 : i32
    %c2_i32 = arith.constant 2 : i32
    %4 = arith.addi %c0_i32, %c2_i32 : i32
    %c1_i32 = arith.constant 1 : i32
    %5 = scf.for %arg7 = %c0_i32 to %4 step %c1_i32 iter_args(%arg8 = %3) -> (vector<8x64xf32>)  : i32 {
      %c128_i32 = arith.constant 128 : i32
      %22 = arith.muli %arg7, %c128_i32 : i32
      %23 = tpu.assume_multiple %22, 128 : i32
      %c0_10 = arith.constant 0 : index
      %24 = arith.index_cast %23 : i32 to index
      %25 = vector.load %arg3[%c0_10, %24] : memref<256x256xbf16, #tpu.memory_space<vmem>>, vector<256x128xbf16>
      %cst_11 = arith.constant dense<0.000000e+00> : vector<512x128xf32>
      %26 = tpu.matmul %2, %25, %cst_11 {dimension_numbers = #tpu.dot_dimension_numbers<[1], [0], [0], [1], [0, 0, 1, 1], [], []>} : vector<512x256xbf16>, vector<256x128xbf16>, vector<512x128xf32> -> vector<512x128xf32>
      %c0_12 = arith.constant 0 : index
      %27 = arith.index_cast %23 : i32 to index
      %28 = vector.load %arg2[%c0_12, %27] : memref<8x256xf32, #tpu.memory_space<vmem>>, vector<8x128xf32>
      %29 = vector.shape_cast %26 : vector<512x128xf32> to vector<8x64x128xf32>
      %30 = vector.shape_cast %28 : vector<8x128xf32> to vector<8x1x128xf32>
      %31 = vector.broadcast %30 : vector<8x1x128xf32> to vector<8x64x128xf32>
      %32 = arith.addf %29, %31 : vector<8x64x128xf32>
      %cst_13 = arith.constant 0.000000e+00 : f32
      %33 = vector.broadcast %cst_13 : f32 to vector<8x64x128xf32>
      %34 = arith.maximumf %32, %33 : vector<8x64x128xf32>
      %c0_14 = arith.constant 0 : index
      %35 = arith.index_cast %23 : i32 to index
      %36 = vector.load %arg4[%c0_14, %35] : memref<1x256xf32, #tpu.memory_space<vmem>>, vector<1x128xf32>
      %37 = vector.shape_cast %36 : vector<1x128xf32> to vector<1x1x128xf32>
      %38 = vector.broadcast %37 : vector<1x1x128xf32> to vector<8x64x128xf32>
      %39 = arith.mulf %34, %38 : vector<8x64x128xf32>
      %cst_15 = arith.constant dense<0.000000e+00> : vector<8x64xf32>
      %40 = vector.multi_reduction <add>, %39, %cst_15 [2] : vector<8x64x128xf32> to vector<8x64xf32>
      %41 = arith.addf %arg8, %40 : vector<8x64xf32>
      scf.yield %41 : vector<8x64xf32>
    }
    %c2_i32_2 = arith.constant 2 : i32
    %cst_3 = arith.constant dense<0xFF800000> : vector<8xf32>
    %6 = vector.multi_reduction <maximumf>, %5, %cst_3 [1] : vector<8x64xf32> to vector<8xf32>
    %7 = vector.shape_cast %6 : vector<8xf32> to vector<8x1xf32>
    %8 = vector.broadcast %7 : vector<8x1xf32> to vector<8x64xf32>
    %9 = arith.subf %5, %8 : vector<8x64xf32>
    %10 = math.exp %9 : vector<8x64xf32>
    %cst_4 = arith.constant dense<0.000000e+00> : vector<8xf32>
    %11 = vector.multi_reduction <add>, %10, %cst_4 [1] : vector<8x64xf32> to vector<8xf32>
    %12 = vector.shape_cast %11 : vector<8xf32> to vector<8x1xf32>
    %13 = tpu.reciprocal %12 {approx = true} : vector<8x1xf32> -> vector<8x1xf32>
    %14 = vector.broadcast %13 : vector<8x1xf32> to vector<8x64xf32>
    %15 = arith.mulf %10, %14 : vector<8x64xf32>
    %16 = vector.shape_cast %15 : vector<8x64xf32> to vector<8x64x1xf32>
    %17 = vector.broadcast %16 : vector<8x64x1xf32> to vector<8x64x256xf32>
    %18 = arith.mulf %0, %17 : vector<8x64x256xf32>
    %cst_5 = arith.constant dense<0.000000e+00> : vector<8x256xf32>
    %19 = vector.multi_reduction <add>, %18, %cst_5 [1] : vector<8x64x256xf32> to vector<8x256xf32>
    %c0_6 = arith.constant 0 : index
    %c0_7 = arith.constant 0 : index
    %20 = vector.load %arg5[%c0_6, %c0_7] : memref<8x256xf32, #tpu.memory_space<vmem>>, vector<8x256xf32>
    tpu.vector_store %arg5[%c0_6, %c0_7], %19 {strides = array<i32>} : memref<8x256xf32, #tpu.memory_space<vmem>>, vector<8x256xf32>,
    %c0_8 = arith.constant 0 : index
    %c0_9 = arith.constant 0 : index
    %21 = vector.load %arg6[%c0_8, %c0_9] : memref<8x64xf32, #tpu.memory_space<vmem>>, vector<8x64xf32>
    tpu.vector_store %arg6[%c0_8, %c0_9], %15 {strides = array<i32>} : memref<8x64xf32, #tpu.memory_space<vmem>>, vector<8x64xf32>,
    return
  }
  func.func @transform_0(%arg0: i32) -> (i32, i32, i32) {
    %c0_i32 = arith.constant 0 : i32
    %c0_i32_0 = arith.constant 0 : i32
    %c0_i32_1 = arith.constant 0 : i32
    return %arg0, %c0_i32, %c0_i32_0 : i32, i32, i32
  }
  func.func @transform_1(%arg0: i32) -> (i32, i32) {
    %c0_i32 = arith.constant 0 : i32
    %c0_i32_0 = arith.constant 0 : i32
    return %arg0, %c0_i32 : i32, i32
  }
  func.func @transform_2(%arg0: i32) -> (i32, i32) {
    %c0_i32 = arith.constant 0 : i32
    %c0_i32_0 = arith.constant 0 : i32
    %c0_i32_1 = arith.constant 0 : i32
    return %c0_i32, %c0_i32_0 : i32, i32
  }
  func.func @transform_3(%arg0: i32) -> (i32, i32) {
    %c0_i32 = arith.constant 0 : i32
    %c0_i32_0 = arith.constant 0 : i32
    %c0_i32_1 = arith.constant 0 : i32
    return %c0_i32, %c0_i32_0 : i32, i32
  }
  func.func @transform_4(%arg0: i32) -> (i32, i32) {
    %c0_i32 = arith.constant 0 : i32
    %c0_i32_0 = arith.constant 0 : i32
    return %arg0, %c0_i32 : i32, i32
  }
  func.func @transform_5(%arg0: i32) -> (i32, i32) {
    %c0_i32 = arith.constant 0 : i32
    %c0_i32_0 = arith.constant 0 : i32
    return %arg0, %c0_i32 : i32, i32
  }
}

</mosaic_0001>

<llo_original>
// kernel: attention_pallas.1
$region0: #{attention_pallas.1}
  #allocation0 [shape = 'u32[]', space=smem, size = 0x4, offset = 0x4, fixed_abs, tag = 'smem constant byte address 0x4 - core index']
  #allocation1 [shape = 'u32[144,128]{1,0:T(1,128)}', space=vmem, size = 0x12000, scoped, tag = 'internal scratch']
  %s0 = inlined_call_operand.hbm [shape: f32[32,64,256], index: 0, kind: input, shape index: {}]
  %s1 = inlined_call_operand.vmem [shape: f32[32,256], index: 1, kind: input, shape index: {}]
  %s2 = inlined_call_operand.vmem [shape: bf16[256,256], index: 2, kind: input, shape index: {}]
  %s3 = inlined_call_operand.hbm [shape: f32[1,256], index: 3, kind: input, shape index: {}]
  %s4 = inlined_call_operand.hbm [shape: f32[32,256], index: 4, kind: output, shape index: {0}]
  %s5 = inlined_call_operand.hbm [shape: f32[32,64], index: 5, kind: output, shape index: {1}]
  %6 = xla_tuple %s4, %s5
  %s7 = sld [smem:[#allocation0]]
  $region72: #{attention_pallas.1} parent=0
    _
  %s9 = ssub.s32 1, %s7
  %s10 = scalar_select 0, %s9, %s7
  $region1: #{attention_pallas.1} parent=0
    #allocation2 [shape = 'u8[1048576]{0}', space=vmem, size = 0x100000, scoped, tag = 'input window, operand 0']
    #allocation3 [shape = 's32[2]{0}', space=sflag, size = 0x8, scoped, tag = 'scoped memory for attention_pallas.1']
    #allocation4 [shape = 's32[2]{0}', space=sflag, size = 0x8, scoped, tag = 'scoped memory for attention_pallas.1']
    #allocation5 [shape = 'u8[1024]{0}', space=vmem, size = 0x400, scoped, tag = 'input window, operand 3, single buffered']
    #allocation6 [shape = 's32[1]{0}', space=sflag, size = 0x4, scoped, tag = 'scoped memory for attention_pallas.1']
    #allocation7 [shape = 'u8[16384]{0}', space=vmem, size = 0x4000, scoped, tag = 'output window, operand 0']
    #allocation8 [shape = 'u8[8192]{0}', space=vmem, size = 0x2000, scoped, tag = 'output window, operand 1']
    #allocation9 [shape = 's32[2]{0}', space=sflag, size = 0x8, scoped, tag = 'scoped memory for attention_pallas.1']
    %11 = vsyncpa [#allocation3], 0
    %s12 = scalar_lea.sflag [#allocation3], 1
    %13 = vsyncpa %s12, 0
    %14 = vsyncpa [#allocation6], 0
    %15 = vsyncpa [#allocation4], 0
    %s16 = scalar_lea.sflag [#allocation4], 1
    %17 = vsyncpa %s16, 0
    %18 = vsyncpa [#allocation9], 0
    %s19 = scalar_lea.sflag [#allocation9], 1
    %20 = vsyncpa %s19, 0
    loop: start=0, step=1, limit=6
    $region2: #{attention_pallas.1} parent=1 // loop_pre_header
      _
    $region3: #{attention_pallas.1} parent=1 // loop_header
      %s22 = sphi 0, %s26
      %p23 = scmp.ge.s32.totalorder %s22, 6
      %s32 = sphi 0, %s34
      %s35 = sphi 0, %s32
      %s36 = sphi 0, %s35
      %s52 = sphi 0, %s36
      %s58 = sphi 0, %s60
      %s61 = sphi 0, %s58
      %s62 = sphi 0, %s61
      %s78 = sphi 0, %s62
      %s82 = sphi 0, %s82
      %s84 = sphi 0, %s82
      %s85 = sphi 0, %s84
      %s99 = sphi 0, %s85
      %s103 = sphi 0, %s103
      %s105 = sphi 0, %s103
      %s106 = sphi 0, %s105
      %s120 = sphi 0, %s106
      %s126 = sphi 0, %s128
      %s129 = sphi 0, %s126
      %s130 = sphi 0, %s129
      %s146 = sphi 0, %s130
      %s152 = sphi 0, %s154
      %s155 = sphi 0, %s152
      %s156 = sphi 0, %s155
      %s172 = sphi 0, %s156
    $region4: #{attention_pallas.1} parent=1 // loop_header_branch
      %25 = sbr.rel (%p23) target = $region8
    $region5: #{attention_pallas.1} parent=1 // loop_body
      %s27 = ssub.s32 %s22, 1
      %s28 = ssub.s32 %s22, 2
      %s29 = sadd.s32 %s22, 1
      %s30 = ssub.s32 %s22, %s29
      %p31 = scmp.eq.s32.totalorder %s30, 0
      %s33 = sadd.s32 %s32, 1
      %s34 = scalar_select %p31, %s32, %s33
      %p37 = pneg %p31
      %p38 = scmp.eq.s32.totalorder %s22, 3
      %p39 = por %p37, %p38
      %p40 = scmp.ne.s32.totalorder %s32, %s35
      %p41 = scmp.eq.s32.totalorder %s22, 0
      %p42 = por %p40, %p41
      %p43 = scmp.ne.s32.totalorder %s32, %s35
      %p44 = scmp.eq.s32.totalorder %s27, 3
      %p45 = por %p43, %p44
      %p46 = scmp.ne.s32.totalorder %s35, %s36
      %p47 = scmp.eq.s32.totalorder %s27, 0
      %p48 = por %p46, %p47
      %p49 = scmp.ne.s32.totalorder %s35, %s36
      %p50 = scmp.eq.s32.totalorder %s28, 3
      %p51 = por %p49, %p50
      %p53 = scmp.ne.s32.totalorder %s36, %s52
      %p54 = scmp.eq.s32.totalorder %s28, 0
      %p55 = por %p53, %p54
      %s56 = ssub.s32 %s22, %s29
      %p57 = scmp.eq.s32.totalorder %s56, 0
      %s59 = sadd.s32 %s58, 1
      %s60 = scalar_select %p57, %s58, %s59
      %p63 = pneg %p57
      %p64 = scmp.eq.s32.totalorder %s22, 3
      %p65 = por %p63, %p64
      %p66 = scmp.ne.s32.totalorder %s58, %s61
      %p67 = scmp.eq.s32.totalorder %s22, 0
      %p68 = por %p66, %p67
      %p69 = scmp.ne.s32.totalorder %s58, %s61
      %p70 = scmp.eq.s32.totalorder %s27, 3
      %p71 = por %p69, %p70
      %p72 = scmp.ne.s32.totalorder %s61, %s62
      %p73 = scmp.eq.s32.totalorder %s27, 0
      %p74 = por %p72, %p73
      %p75 = scmp.ne.s32.totalorder %s61, %s62
      %p76 = scmp.eq.s32.totalorder %s28, 3
      %p77 = por %p75, %p76
      %p79 = scmp.ne.s32.totalorder %s62, %s78
      %p80 = scmp.eq.s32.totalorder %s28, 0
      %p81 = por %p79, %p80
      %s83 = sadd.s32 %s82, 1
      %p86 = scmp.eq.s32.totalorder %s22, 3
      %p87 = scmp.ne.s32.totalorder %s82, %s84
      %p88 = scmp.eq.s32.totalorder %s22, 0
      %p89 = por %p87, %p88
      %p90 = scmp.ne.s32.totalorder %s82, %s84
      %p91 = scmp.eq.s32.totalorder %s27, 3
      %p92 = por %p90, %p91
      %p93 = scmp.ne.s32.totalorder %s84, %s85
      %p94 = scmp.eq.s32.totalorder %s27, 0
      %p95 = por %p93, %p94
      %p96 = scmp.ne.s32.totalorder %s84, %s85
      %p97 = scmp.eq.s32.totalorder %s28, 3
      %p98 = por %p96, %p97
      %p100 = scmp.ne.s32.totalorder %s85, %s99
      %p101 = scmp.eq.s32.totalorder %s28, 0
      %p102 = por %p100, %p101
      %s104 = sadd.s32 %s103, 1
      %p107 = scmp.eq.s32.totalorder %s22, 3
      %p108 = scmp.ne.s32.totalorder %s103, %s105
      %p109 = scmp.eq.s32.totalorder %s22, 0
      %p110 = por %p108, %p109
      %p111 = scmp.ne.s32.totalorder %s103, %s105
      %p112 = scmp.eq.s32.totalorder %s27, 3
      %p113 = por %p111, %p112
      %p114 = scmp.ne.s32.totalorder %s105, %s106
      %p115 = scmp.eq.s32.totalorder %s27, 0
      %p116 = por %p114, %p115
      %p117 = scmp.ne.s32.totalorder %s105, %s106
      %p118 = scmp.eq.s32.totalorder %s28, 3
      %p119 = por %p117, %p118
      %p121 = scmp.ne.s32.totalorder %s106, %s120
      %p122 = scmp.eq.s32.totalorder %s28, 0
      %p123 = por %p121, %p122
      %s124 = ssub.s32 %s22, %s29
      %p125 = scmp.eq.s32.totalorder %s124, 0
      %s127 = sadd.s32 %s126, 1
      %s128 = scalar_select %p125, %s126, %s127
      %p131 = pneg %p125
      %p132 = scmp.eq.s32.totalorder %s22, 3
      %p133 = por %p131, %p132
      %p134 = scmp.ne.s32.totalorder %s126, %s129
      %p135 = scmp.eq.s32.totalorder %s22, 0
      %p136 = por %p134, %p135
      %p137 = scmp.ne.s32.totalorder %s126, %s129
      %p138 = scmp.eq.s32.totalorder %s27, 3
      %p139 = por %p137, %p138
      %p140 = scmp.ne.s32.totalorder %s129, %s130
      %p141 = scmp.eq.s32.totalorder %s27, 0
      %p142 = por %p140, %p141
      %p143 = scmp.ne.s32.totalorder %s129, %s130
      %p144 = scmp.eq.s32.totalorder %s28, 3
      %p145 = por %p143, %p144
      %p147 = scmp.ne.s32.totalorder %s130, %s146
      %p148 = scmp.eq.s32.totalorder %s28, 0
      %p149 = por %p147, %p148
      %s150 = ssub.s32 %s22, %s29
      %p151 = scmp.eq.s32.totalorder %s150, 0
      %s153 = sadd.s32 %s152, 1
      %s154 = scalar_select %p151, %s152, %s153
      %p157 = pneg %p151
      %p158 = scmp.eq.s32.totalorder %s22, 3
      %p159 = por %p157, %p158
      %p160 = scmp.ne.s32.totalorder %s152, %s155
      %p161 = scmp.eq.s32.totalorder %s22, 0
      %p162 = por %p160, %p161
      %p163 = scmp.ne.s32.totalorder %s152, %s155
      %p164 = scmp.eq.s32.totalorder %s27, 3
      %p165 = por %p163, %p164
      %p166 = scmp.ne.s32.totalorder %s155, %s156
      %p167 = scmp.eq.s32.totalorder %s27, 0
      %p168 = por %p166, %p167
      %p169 = scmp.ne.s32.totalorder %s155, %s156
      %p170 = scmp.eq.s32.totalorder %s28, 3
      %p171 = por %p169, %p170
      %p173 = scmp.ne.s32.totalorder %s156, %s172
      %p174 = scmp.eq.s32.totalorder %s28, 0
      %p175 = por %p173, %p174
      %p176 = scmp.le.s32.totalorder 1, %s22
      %p177 = scmp.lt.s32.totalorder %s22, 5
      %p178 = pnand %p176, %p177
      %p179 = pneg %p178
      // Predicated region
      $region9: #{attention_pallas.1} parent=5 // pred_check
        _
      $region10: #{attention_pallas.1} parent=5 // pred_check_branch
        %181 = sbr.rel (%p178) target = $region12
      $region11: #{attention_pallas.1} parent=5 // pred_region
        %s182 = ssub.s32 %s22, 1
        // Predicated region
        $region13: #{attention_pallas.1} parent=11 // pred_check
          %p183 = pneg %p95
        $region14: #{attention_pallas.1} parent=11 // pred_check_branch
          %185 = sbr.rel (%p183) target = $region16
        $region15: #{attention_pallas.1} parent=11 // pred_region
          _
        $region16: #{attention_pallas.1} parent=11 // pred_fallthru
          _
        // Predicated region
        $region17: #{attention_pallas.1} parent=11 // pred_check
          %p186 = pneg %p116
        $region18: #{attention_pallas.1} parent=11 // pred_check_branch
          %188 = sbr.rel (%p186) target = $region20
        $region19: #{attention_pallas.1} parent=11 // pred_region
          %s190 = ssub.s32 32, 32
          %191 = vsyncadd [#allocation6], %s190
          %s193 = sshll.u32 [#allocation5], 4
          %s194 = int_to_ptr.vmem [resolvable:$true] %s193
          %196 = dma.hbm_to_vmem [thread:$0]  %s3, 32, %s194, [#allocation6]
        $region20: #{attention_pallas.1} parent=11 // pred_fallthru
          _
      $region12: #{attention_pallas.1} parent=5 // pred_fallthru
        _
      %p197 = scmp.lt.s32.totalorder %s22, 4
      // Predicated region
      $region21: #{attention_pallas.1} parent=5 // pred_check
        %p198 = pneg %p197
      $region22: #{attention_pallas.1} parent=5 // pred_check_branch
        %200 = sbr.rel (%p198) target = $region24
      $region23: #{attention_pallas.1} parent=5 // pred_region
        // Predicated region
        $region25: #{attention_pallas.1} parent=23 // pred_check
          %p201 = pneg %p42
        $region26: #{attention_pallas.1} parent=23 // pred_check_branch
          %203 = sbr.rel (%p201) target = $region28
        $region27: #{attention_pallas.1} parent=23 // pred_region
          %s204 = sand.u32 %s32, 1
          %s205 = scalar_lea.sflag [#allocation3], %s204
          %s206 = sand.u32 %s32, 1
          %s207 = smul.addr %s206, 1024
          %s208 = scalar_lea.vmem [#allocation2], %s207
          %s209 = smul.u32 8, %s22
          %s211 = ssub.s32 16384, 16384
          %212 = vsyncadd %s205, %s211
          %s213 = smul.addr %s209, 16
          %s214 = smul.addr %s213, 128
          %s215 = scalar_lea.hbm %s0, %s214
          %s216 = sshll.u32 %s208, 4
          %s217 = int_to_ptr.vmem [resolvable:$true] %s216
          %222 = dma.hbm_to_vmem [thread:$0]  %s215, 16384, %s217, %s205, 256, 256, 16
        $region28: #{attention_pallas.1} parent=23 // pred_fallthru
          _
        // Predicated region
        $region29: #{attention_pallas.1} parent=23 // pred_check
          %p223 = pneg %p68
        $region30: #{attention_pallas.1} parent=23 // pred_check_branch
          %225 = sbr.rel (%p223) target = $region32
        $region31: #{attention_pallas.1} parent=23 // pred_region
          %p226 = scmp.lt.s32.totalorder %s22, 3
          %s227 = scalar_select %p226, %s22, 3
          %s228 = smul.addr %s227, 2
          %s229 = smul.addr %s228, 8
          %s230 = scalar_lea.vmem %s1, %s229
        $region32: #{attention_pallas.1} parent=23 // pred_fallthru
          _
      $region24: #{attention_pallas.1} parent=5 // pred_fallthru
        _
      %p231 = scmp.le.s32.totalorder 1, %s22
      %p232 = scmp.lt.s32.totalorder %s22, 5
      %p233 = pnand %p231, %p232
      %p234 = pneg %p233
      // Predicated region
      $region33: #{attention_pallas.1} parent=5 // pred_check
        _
      $region34: #{attention_pallas.1} parent=5 // pred_check_branch
        %236 = sbr.rel (%p233) target = $region36
      $region35: #{attention_pallas.1} parent=5 // pred_region
        %s237 = ssub.s32 %s22, 1
        %s238 = sand.u32 %s35, 1
        %s239 = scalar_lea.sflag [#allocation3], %s238
        %s240 = sand.u32 %s35, 1
        %s241 = smul.addr %s240, 1024
        %s242 = scalar_lea.vmem [#allocation2], %s241
        // Predicated region
        $region37: #{attention_pallas.1} parent=35 // pred_check
          %p243 = pneg %p48
        $region38: #{attention_pallas.1} parent=35 // pred_check_branch
          %245 = sbr.rel (%p243) target = $region40
        $region39: #{attention_pallas.1} parent=35 // pred_region
          %246 = dma.done %s239, 16384
        $region40: #{attention_pallas.1} parent=35 // pred_fallthru
          _
        // Predicated region
        $region41: #{attention_pallas.1} parent=35 // pred_check
          %p247 = pneg %p116
        $region42: #{attention_pallas.1} parent=35 // pred_check_branch
          %249 = sbr.rel (%p247) target = $region44
        $region43: #{attention_pallas.1} parent=35 // pred_region
          %250 = dma.done [#allocation6], 32
        $region44: #{attention_pallas.1} parent=35 // pred_fallthru
          _
        %s251 = sand.u32 %s35, 1
        %s252 = scalar_lea.sflag [#allocation3], %s251
        %s253 = sand.u32 %s35, 1
        %s254 = smul.addr %s253, 1024
        %s255 = scalar_lea.vmem [#allocation2], %s254
        %p256 = pneg %p48
        %p257 = pneg %p45
        %p258 = scmp.lt.s32.totalorder %s27, 3
        %s259 = scalar_select %p258, %s27, 3
        %s260 = smul.addr %s259, 2
        %s261 = smul.addr %s260, 8
        %s262 = scalar_lea.vmem %s1, %s261
        %p263 = pneg %p74
        %p264 = pneg %p71
        %p265 = pneg %p95
        %p266 = pneg %p92
        %p267 = pneg %p116
        %p268 = pneg %p113
        %p269 = pneg %p142
        %p270 = pneg %p139
        %s271 = sand.u32 %s129, 1
        %s272 = scalar_lea.sflag [#allocation4], %s271
        %s273 = sand.u32 %s129, 1
        %s274 = smul.addr %s273, 16
        %s275 = scalar_lea.vmem [#allocation7], %s274
        %p276 = pneg %p168
        %p277 = pneg %p165
        %s278 = sand.u32 %s155, 1
        %s279 = scalar_lea.sflag [#allocation9], %s278
        %s280 = sand.u32 %s155, 1
        %s281 = smul.addr %s280, 8
        %s282 = scalar_lea.vmem [#allocation8], %s281
        %s283 = smul.u32 8, %s27
        %p284 = scmp.lt.s32.totalorder %s27, 3
        %s285 = scalar_select %p284, %s27, 3
        %s286 = smul.addr %s285, 2
        %s287 = smul.addr %s286, 8
        %s288 = scalar_lea.vmem %s1, %s287
        %v290 = vld [vmem:[%s242] sm:$0xff]
        %v291 = vld [vmem:[%s242 + $0x8] sm:$0xff]
        %v292 = vld [vmem:[%s242 + $0x10] sm:$0xff]
        %v293 = vld [vmem:[%s242 + $0x18] sm:$0xff]
        %v294 = vld [vmem:[%s242 + $0x20] sm:$0xff]
        %v295 = vld [vmem:[%s242 + $0x28] sm:$0xff]
        %v296 = vld [vmem:[%s242 + $0x30] sm:$0xff]
        %v297 = vld [vmem:[%s242 + $0x38] sm:$0xff]
        %v298 = vld [vmem:[%s242 + $0x40] sm:$0xff]
        %v299 = vld [vmem:[%s242 + $0x48] sm:$0xff]
        %v300 = vld [vmem:[%s242 + $0x50] sm:$0xff]
        %v301 = vld [vmem:[%s242 + $0x58] sm:$0xff]
        %v302 = vld [vmem:[%s242 + $0x60] sm:$0xff]
        %v303 = vld [vmem:[%s242 + $0x68] sm:$0xff]
        %v304 = vld [vmem:[%s242 + $0x70] sm:$0xff]
        %v305 = vld [vmem:[%s242 + $0x78] sm:$0xff]
        %v306 = vld [vmem:[%s242 + $0x80] sm:$0xff]
        %v307 = vld [vmem:[%s242 + $0x88] sm:$0xff]
        %v308 = vld [vmem:[%s242 + $0x90] sm:$0xff]
        %v309 = vld [vmem:[%s242 + $0x98] sm:$0xff]
        %v310 = vld [vmem:[%s242 + $0xa0] sm:$0xff]
        %v311 = vld [vmem:[%s242 + $0xa8] sm:$0xff]
        %v312 = vld [vmem:[%s242 + $0xb0] sm:$0xff]
        %v313 = vld [vmem:[%s242 + $0xb8] sm:$0xff]
        %v314 = vld [vmem:[%s242 + $0xc0] sm:$0xff]
        %v315 = vld [vmem:[%s242 + $0xc8] sm:$0xff]
        %v316 = vld [vmem:[%s242 + $0xd0] sm:$0xff]
        %v317 = vld [vmem:[%s242 + $0xd8] sm:$0xff]
        %v318 = vld [vmem:[%s242 + $0xe0] sm:$0xff]
        %v319 = vld [vmem:[%s242 + $0xe8] sm:$0xff]
        %v320 = vld [vmem:[%s242 + $0xf0] sm:$0xff]
        %v321 = vld [vmem:[%s242 + $0xf8] sm:$0xff]
        %v322 = vld [vmem:[%s242 + $0x100] sm:$0xff]
        %v323 = vld [vmem:[%s242 + $0x108] sm:$0xff]
        %v324 = vld [vmem:[%s242 + $0x110] sm:$0xff]
        %v325 = vld [vmem:[%s242 + $0x118] sm:$0xff]
        %v326 = vld [vmem:[%s242 + $0x120] sm:$0xff]
        %v327 = vld [vmem:[%s242 + $0x128] sm:$0xff]
        %v328 = vld [vmem:[%s242 + $0x130] sm:$0xff]
        %v329 = vld [vmem:[%s242 + $0x138] sm:$0xff]
        %v330 = vld [vmem:[%s242 + $0x140] sm:$0xff]
        %v331 = vld [vmem:[%s242 + $0x148] sm:$0xff]
        %v332 = vld [vmem:[%s242 + $0x150] sm:$0xff]
        %v333 = vld [vmem:[%s242 + $0x158] sm:$0xff]
        %v334 = vld [vmem:[%s242 + $0x160] sm:$0xff]
        %v335 = vld [vmem:[%s242 + $0x168] sm:$0xff]
        %v336 = vld [vmem:[%s242 + $0x170] sm:$0xff]
        %v337 = vld [vmem:[%s242 + $0x178] sm:$0xff]
        %v338 = vld [vmem:[%s242 + $0x180] sm:$0xff]
        %v339 = vld [vmem:[%s242 + $0x188] sm:$0xff]
        %v340 = vld [vmem:[%s242 + $0x190] sm:$0xff]
        %v341 = vld [vmem:[%s242 + $0x198] sm:$0xff]
        %v342 = vld [vmem:[%s242 + $0x1a0] sm:$0xff]
        %v343 = vld [vmem:[%s242 + $0x1a8] sm:$0xff]
        %v344 = vld [vmem:[%s242 + $0x1b0] sm:$0xff]
        %v345 = vld [vmem:[%s242 + $0x1b8] sm:$0xff]
        %v346 = vld [vmem:[%s242 + $0x1c0] sm:$0xff]
        %v347 = vld [vmem:[%s242 + $0x1c8] sm:$0xff]
        %v348 = vld [vmem:[%s242 + $0x1d0] sm:$0xff]
        %v349 = vld [vmem:[%s242 + $0x1d8] sm:$0xff]
        %v350 = vld [vmem:[%s242 + $0x1e0] sm:$0xff]
        %v351 = vld [vmem:[%s242 + $0x1e8] sm:$0xff]
        %v352 = vld [vmem:[%s242 + $0x1f0] sm:$0xff]
        %v353 = vld [vmem:[%s242 + $0x1f8] sm:$0xff]
        %v354 = vld [vmem:[%s242 + $0x200] sm:$0xff]
        %v355 = vld [vmem:[%s242 + $0x208] sm:$0xff]
        %v356 = vld [vmem:[%s242 + $0x210] sm:$0xff]
        %v357 = vld [vmem:[%s242 + $0x218] sm:$0xff]
        %v358 = vld [vmem:[%s242 + $0x220] sm:$0xff]
        %v359 = vld [vmem:[%s242 + $0x228] sm:$0xff]
        %v360 = vld [vmem:[%s242 + $0x230] sm:$0xff]
        %v361 = vld [vmem:[%s242 + $0x238] sm:$0xff]
        %v362 = vld [vmem:[%s242 + $0x240] sm:$0xff]
        %v363 = vld [vmem:[%s242 + $0x248] sm:$0xff]
        %v364 = vld [vmem:[%s242 + $0x250] sm:$0xff]
        %v365 = vld [vmem:[%s242 + $0x258] sm:$0xff]
        %v366 = vld [vmem:[%s242 + $0x260] sm:$0xff]
        %v367 = vld [vmem:[%s242 + $0x268] sm:$0xff]
        %v368 = vld [vmem:[%s242 + $0x270] sm:$0xff]
        %v369 = vld [vmem:[%s242 + $0x278] sm:$0xff]
        %v370 = vld [vmem:[%s242 + $0x280] sm:$0xff]
        %v371 = vld [vmem:[%s242 + $0x288] sm:$0xff]
        %v372 = vld [vmem:[%s242 + $0x290] sm:$0xff]
        %v373 = vld [vmem:[%s242 + $0x298] sm:$0xff]
        %v374 = vld [vmem:[%s242 + $0x2a0] sm:$0xff]
        %v375 = vld [vmem:[%s242 + $0x2a8] sm:$0xff]
        %v376 = vld [vmem:[%s242 + $0x2b0] sm:$0xff]
        %v377 = vld [vmem:[%s242 + $0x2b8] sm:$0xff]
        %v378 = vld [vmem:[%s242 + $0x2c0] sm:$0xff]
        %v379 = vld [vmem:[%s242 + $0x2c8] sm:$0xff]
        %v380 = vld [vmem:[%s242 + $0x2d0] sm:$0xff]
        %v381 = vld [vmem:[%s242 + $0x2d8] sm:$0xff]
        %v382 = vld [vmem:[%s242 + $0x2e0] sm:$0xff]
        %v383 = vld [vmem:[%s242 + $0x2e8] sm:$0xff]
        %v384 = vld [vmem:[%s242 + $0x2f0] sm:$0xff]
        %v385 = vld [vmem:[%s242 + $0x2f8] sm:$0xff]
        %v386 = vld [vmem:[%s242 + $0x300] sm:$0xff]
        %v387 = vld [vmem:[%s242 + $0x308] sm:$0xff]
        %v388 = vld [vmem:[%s242 + $0x310] sm:$0xff]
        %v389 = vld [vmem:[%s242 + $0x318] sm:$0xff]
        %v390 = vld [vmem:[%s242 + $0x320] sm:$0xff]
        %v391 = vld [vmem:[%s242 + $0x328] sm:$0xff]
        %v392 = vld [vmem:[%s242 + $0x330] sm:$0xff]
        %v393 = vld [vmem:[%s242 + $0x338] sm:$0xff]
        %v394 = vld [vmem:[%s242 + $0x340] sm:$0xff]
        %v395 = vld [vmem:[%s242 + $0x348] sm:$0xff]
        %v396 = vld [vmem:[%s242 + $0x350] sm:$0xff]
        %v397 = vld [vmem:[%s242 + $0x358] sm:$0xff]
        %v398 = vld [vmem:[%s242 + $0x360] sm:$0xff]
        %v399 = vld [vmem:[%s242 + $0x368] sm:$0xff]
        %v400 = vld [vmem:[%s242 + $0x370] sm:$0xff]
        %v401 = vld [vmem:[%s242 + $0x378] sm:$0xff]
        %v402 = vld [vmem:[%s242 + $0x380] sm:$0xff]
        %v403 = vld [vmem:[%s242 + $0x388] sm:$0xff]
        %v404 = vld [vmem:[%s242 + $0x390] sm:$0xff]
        %v405 = vld [vmem:[%s242 + $0x398] sm:$0xff]
        %v406 = vld [vmem:[%s242 + $0x3a0] sm:$0xff]
        %v407 = vld [vmem:[%s242 + $0x3a8] sm:$0xff]
        %v408 = vld [vmem:[%s242 + $0x3b0] sm:$0xff]
        %v409 = vld [vmem:[%s242 + $0x3b8] sm:$0xff]
        %v410 = vld [vmem:[%s242 + $0x3c0] sm:$0xff]
        %v411 = vld [vmem:[%s242 + $0x3c8] sm:$0xff]
        %v412 = vld [vmem:[%s242 + $0x3d0] sm:$0xff]
        %v413 = vld [vmem:[%s242 + $0x3d8] sm:$0xff]
        %v414 = vld [vmem:[%s242 + $0x3e0] sm:$0xff]
        %v415 = vld [vmem:[%s242 + $0x3e8] sm:$0xff]
        %v416 = vld [vmem:[%s242 + $0x3f0] sm:$0xff]
        %v417 = vld [vmem:[%s242 + $0x3f8] sm:$0xff]
        %v418 = vpack.c.bf16 %v292, %v290
        %v419 = vpack.c.bf16 %v293, %v291
        %v420 = vpack.c.bf16 %v296, %v294
        %v421 = vpack.c.bf16 %v297, %v295
        %v422 = vpack.c.bf16 %v300, %v298
        %v423 = vpack.c.bf16 %v301, %v299
        %v424 = vpack.c.bf16 %v304, %v302
        %v425 = vpack.c.bf16 %v305, %v303
        %v426 = vpack.c.bf16 %v308, %v306
        %v427 = vpack.c.bf16 %v309, %v307
        %v428 = vpack.c.bf16 %v312, %v310
        %v429 = vpack.c.bf16 %v313, %v311
        %v430 = vpack.c.bf16 %v316, %v314
        %v431 = vpack.c.bf16 %v317, %v315
        %v432 = vpack.c.bf16 %v320, %v318
        %v433 = vpack.c.bf16 %v321, %v319
        %v434 = vpack.c.bf16 %v324, %v322
        %v435 = vpack.c.bf16 %v325, %v323
        %v436 = vpack.c.bf16 %v328, %v326
        %v437 = vpack.c.bf16 %v329, %v327
        %v438 = vpack.c.bf16 %v332, %v330
        %v439 = vpack.c.bf16 %v333, %v331
        %v440 = vpack.c.bf16 %v336, %v334
        %v441 = vpack.c.bf16 %v337, %v335
        %v442 = vpack.c.bf16 %v340, %v338
        %v443 = vpack.c.bf16 %v341, %v339
        %v444 = vpack.c.bf16 %v344, %v342
        %v445 = vpack.c.bf16 %v345, %v343
        %v446 = vpack.c.bf16 %v348, %v346
        %v447 = vpack.c.bf16 %v349, %v347
        %v448 = vpack.c.bf16 %v352, %v350
        %v449 = vpack.c.bf16 %v353, %v351
        %v450 = vpack.c.bf16 %v356, %v354
        %v451 = vpack.c.bf16 %v357, %v355
        %v452 = vpack.c.bf16 %v360, %v358
        %v453 = vpack.c.bf16 %v361, %v359
        %v454 = vpack.c.bf16 %v364, %v362
        %v455 = vpack.c.bf16 %v365, %v363
        %v456 = vpack.c.bf16 %v368, %v366
        %v457 = vpack.c.bf16 %v369, %v367
        %v458 = vpack.c.bf16 %v372, %v370
        %v459 = vpack.c.bf16 %v373, %v371
        %v460 = vpack.c.bf16 %v376, %v374
        %v461 = vpack.c.bf16 %v377, %v375
        %v462 = vpack.c.bf16 %v380, %v378
        %v463 = vpack.c.bf16 %v381, %v379
        %v464 = vpack.c.bf16 %v384, %v382
        %v465 = vpack.c.bf16 %v385, %v383
        %v466 = vpack.c.bf16 %v388, %v386
        %v467 = vpack.c.bf16 %v389, %v387
        %v468 = vpack.c.bf16 %v392, %v390
        %v469 = vpack.c.bf16 %v393, %v391
        %v470 = vpack.c.bf16 %v396, %v394
        %v471 = vpack.c.bf16 %v397, %v395
        %v472 = vpack.c.bf16 %v400, %v398
        %v473 = vpack.c.bf16 %v401, %v399
        %v474 = vpack.c.bf16 %v404, %v402
        %v475 = vpack.c.bf16 %v405, %v403
        %v476 = vpack.c.bf16 %v408, %v406
        %v477 = vpack.c.bf16 %v409, %v407
        %v478 = vpack.c.bf16 %v412, %v410
        %v479 = vpack.c.bf16 %v413, %v411
        %v480 = vpack.c.bf16 %v416, %v414
        %v481 = vpack.c.bf16 %v417, %v415
        loop: start=0, step=1, limit=2
        $region45: #{attention_pallas.1} parent=35 // loop_pre_header
          _
        $region46: #{attention_pallas.1} parent=35 // loop_header
          %s483 = sphi 0, %s487
          %p484 = scmp.ge.s32.totalorder %s483, 2
          %v488 = vphi 0.0, %v1395
          %v489 = vphi 0.0, %v1396
          %v490 = vphi 0.0, %v1397
          %v491 = vphi 0.0, %v1398
          %v492 = vphi 0.0, %v1399
          %v493 = vphi 0.0, %v1400
          %v494 = vphi 0.0, %v1401
          %v495 = vphi 0.0, %v1402
          %v496 = vphi 0.0, %v1403
          %v497 = vphi 0.0, %v1404
          %v498 = vphi 0.0, %v1405
          %v499 = vphi 0.0, %v1406
          %v500 = vphi 0.0, %v1407
          %v501 = vphi 0.0, %v1408
          %v502 = vphi 0.0, %v1409
          %v503 = vphi 0.0, %v1410
          %v504 = vphi 0.0, %v1411
          %v505 = vphi 0.0, %v1412
          %v506 = vphi 0.0, %v1413
          %v507 = vphi 0.0, %v1414
          %v508 = vphi 0.0, %v1415
          %v509 = vphi 0.0, %v1416
          %v510 = vphi 0.0, %v1417
          %v511 = vphi 0.0, %v1418
          %v512 = vphi 0.0, %v1419
          %v513 = vphi 0.0, %v1420
          %v514 = vphi 0.0, %v1421
          %v515 = vphi 0.0, %v1422
          %v516 = vphi 0.0, %v1423
          %v517 = vphi 0.0, %v1424
          %v518 = vphi 0.0, %v1425
          %v519 = vphi 0.0, %v1426
          %v520 = vphi 0.0, %v1427
          %v521 = vphi 0.0, %v1428
          %v522 = vphi 0.0, %v1429
          %v523 = vphi 0.0, %v1430
          %v524 = vphi 0.0, %v1431
          %v525 = vphi 0.0, %v1432
          %v526 = vphi 0.0, %v1433
          %v527 = vphi 0.0, %v1434
          %v528 = vphi 0.0, %v1435
          %v529 = vphi 0.0, %v1436
          %v530 = vphi 0.0, %v1437
          %v531 = vphi 0.0, %v1438
          %v532 = vphi 0.0, %v1439
          %v533 = vphi 0.0, %v1440
          %v534 = vphi 0.0, %v1441
          %v535 = vphi 0.0, %v1442
          %v536 = vphi 0.0, %v1443
          %v537 = vphi 0.0, %v1444
          %v538 = vphi 0.0, %v1445
          %v539 = vphi 0.0, %v1446
          %v540 = vphi 0.0, %v1447
          %v541 = vphi 0.0, %v1448
          %v542 = vphi 0.0, %v1449
          %v543 = vphi 0.0, %v1450
          %v544 = vphi 0.0, %v1451
          %v545 = vphi 0.0, %v1452
          %v546 = vphi 0.0, %v1453
          %v547 = vphi 0.0, %v1454
          %v548 = vphi 0.0, %v1455
          %v549 = vphi 0.0, %v1456
          %v550 = vphi 0.0, %v1457
          %v551 = vphi 0.0, %v1458
        $region47: #{attention_pallas.1} parent=35 // loop_header_branch
          %486 = sbr.rel (%p484) target = $region51
        $region48: #{attention_pallas.1} parent=35 // loop_body
          %s552 = smul.u32 %s483, 128
          %s553 = sshra.s32 %s552, 7
          %s554 = sand.u32 %s552, 127
          %s555 = smul.addr %s553, 4
          %s556 = scalar_lea.vmem %s2, %s555
          %v557 = vld [vmem:[%s556] sm:$0xf]
          %v558 = vld [vmem:[%s556 + $0x8] sm:$0xf]
          %v559 = vld [vmem:[%s556 + $0x10] sm:$0xf]
          %v560 = vld [vmem:[%s556 + $0x18] sm:$0xf]
          %v561 = vld [vmem:[%s556 + $0x20] sm:$0xf]
          %v562 = vld [vmem:[%s556 + $0x28] sm:$0xf]
          %v563 = vld [vmem:[%s556 + $0x30] sm:$0xf]
          %v564 = vld [vmem:[%s556 + $0x38] sm:$0xf]
          %v565 = vld [vmem:[%s556 + $0x40] sm:$0xf]
          %v566 = vld [vmem:[%s556 + $0x48] sm:$0xf]
          %v567 = vld [vmem:[%s556 + $0x50] sm:$0xf]
          %v568 = vld [vmem:[%s556 + $0x58] sm:$0xf]
          %v569 = vld [vmem:[%s556 + $0x60] sm:$0xf]
          %v570 = vld [vmem:[%s556 + $0x68] sm:$0xf]
          %v571 = vld [vmem:[%s556 + $0x70] sm:$0xf]
          %v572 = vld [vmem:[%s556 + $0x78] sm:$0xf]
          %v573 = vld [vmem:[%s556 + $0x80] sm:$0xf]
          %v574 = vld [vmem:[%s556 + $0x88] sm:$0xf]
          %v575 = vld [vmem:[%s556 + $0x90] sm:$0xf]
          %v576 = vld [vmem:[%s556 + $0x98] sm:$0xf]
          %v577 = vld [vmem:[%s556 + $0xa0] sm:$0xf]
          %v578 = vld [vmem:[%s556 + $0xa8] sm:$0xf]
          %v579 = vld [vmem:[%s556 + $0xb0] sm:$0xf]
          %v580 = vld [vmem:[%s556 + $0xb8] sm:$0xf]
          %v581 = vld [vmem:[%s556 + $0xc0] sm:$0xf]
          %v582 = vld [vmem:[%s556 + $0xc8] sm:$0xf]
          %v583 = vld [vmem:[%s556 + $0xd0] sm:$0xf]
          %v584 = vld [vmem:[%s556 + $0xd8] sm:$0xf]
          %v585 = vld [vmem:[%s556 + $0xe0] sm:$0xf]
          %v586 = vld [vmem:[%s556 + $0xe8] sm:$0xf]
          %v587 = vld [vmem:[%s556 + $0xf0] sm:$0xf]
          %v588 = vld [vmem:[%s556 + $0xf8] sm:$0xf]
          %v621 = vunpack.c.l.b16 %v557
          %v622 = vunpack.c.l.b16 %v558
          %v623 = vunpack.c.l.b16 %v559
          %v624 = vunpack.c.l.b16 %v560
          %v625 = vunpack.c.l.b16 %v561
          %v626 = vunpack.c.l.b16 %v562
          %v627 = vunpack.c.l.b16 %v563
          %v628 = vunpack.c.l.b16 %v564
          %v629 = vunpack.c.l.b16 %v565
          %v630 = vunpack.c.l.b16 %v566
          %v631 = vunpack.c.l.b16 %v567
          %v632 = vunpack.c.l.b16 %v568
          %v633 = vunpack.c.l.b16 %v569
          %v634 = vunpack.c.l.b16 %v570
          %v635 = vunpack.c.l.b16 %v571
          %v636 = vunpack.c.l.b16 %v572
          %v637 = vunpack.c.l.b16 %v573
          %v638 = vunpack.c.l.b16 %v574
          %v639 = vunpack.c.l.b16 %v575
          %v640 = vunpack.c.l.b16 %v576
          %v641 = vunpack.c.l.b16 %v577
          %v642 = vunpack.c.l.b16 %v578
          %v643 = vunpack.c.l.b16 %v579
          %v644 = vunpack.c.l.b16 %v580
          %v645 = vunpack.c.l.b16 %v581
          %v646 = vunpack.c.l.b16 %v582
          %v647 = vunpack.c.l.b16 %v583
          %v648 = vunpack.c.l.b16 %v584
          %v649 = vunpack.c.l.b16 %v585
          %v650 = vunpack.c.l.b16 %v586
          %v651 = vunpack.c.l.b16 %v587
          %v652 = vunpack.c.l.b16 %v588
          %v653 = vpack.c.b16 %v622, %v621
          %v654 = vpack.c.b16 %v624, %v623
          %v655 = vpack.c.b16 %v626, %v625
          %v656 = vpack.c.b16 %v628, %v627
          %v657 = vpack.c.b16 %v630, %v629
          %v658 = vpack.c.b16 %v632, %v631
          %v659 = vpack.c.b16 %v634, %v633
          %v660 = vpack.c.b16 %v636, %v635
          %v661 = vpack.c.b16 %v638, %v637
          %v662 = vpack.c.b16 %v640, %v639
          %v663 = vpack.c.b16 %v642, %v641
          %v664 = vpack.c.b16 %v644, %v643
          %v665 = vpack.c.b16 %v646, %v645
          %v666 = vpack.c.b16 %v648, %v647
          %v667 = vpack.c.b16 %v650, %v649
          %v668 = vpack.c.b16 %v652, %v651
          %685 = vmatprep.subr.bf16.mxu0 0
          %686 = vmatpush1.bf16.msra.mxu0 %v653
          %687 = vmatprep.subr.bf16.mxu0 0
          %688 = vmatpush1.bf16.msra.mxu0 %v654
          %689 = vmatprep.subr.bf16.mxu0 0
          %690 = vmatpush1.bf16.msra.mxu0 %v655
          %691 = vmatprep.subr.bf16.mxu0 0
          %692 = vmatpush1.bf16.msra.mxu0 %v656
          %693 = vmatprep.subr.bf16.mxu0 0
          %694 = vmatpush1.bf16.msra.mxu0 %v657
          %695 = vmatprep.subr.bf16.mxu0 0
          %696 = vmatpush1.bf16.msra.mxu0 %v658
          %697 = vmatprep.subr.bf16.mxu0 0
          %698 = vmatpush1.bf16.msra.mxu0 %v659
          %699 = vmatprep.subr.bf16.mxu0 0
          %700 = vmatpush1.bf16.msra.mxu0 %v660
          %701 = vmatprep.subr.bf16.mxu0 0
          %702 = vmatpush1.bf16.msra.mxu0 %v661
          %703 = vmatprep.subr.bf16.mxu0 0
          %704 = vmatpush1.bf16.msra.mxu0 %v662
          %705 = vmatprep.subr.bf16.mxu0 0
          %706 = vmatpush1.bf16.msra.mxu0 %v663
          %707 = vmatprep.subr.bf16.mxu0 0
          %708 = vmatpush1.bf16.msra.mxu0 %v664
          %709 = vmatprep.subr.bf16.mxu0 0
          %710 = vmatpush1.bf16.msra.mxu0 %v665
          %711 = vmatprep.subr.bf16.mxu0 0
          %712 = vmatpush1.bf16.msra.mxu0 %v666
          %713 = vmatprep.subr.bf16.mxu0 0
          %714 = vmatpush1.bf16.msra.mxu0 %v667
          %715 = vmatprep.subr.bf16.mxu0 0
          %716 = vmatpush1.bf16.msra.mxu0 %v668
          %717 = vmatprep.mubr.bf16.mxu0 %v419
          %718 = vmatmul.mubr.bf16.gmra.mrb[0].mxu0 %v418
          %v719 = vpop.f32.mrb[0].mxu0
          %v720 = vadd.f32 0.0, %v719
          %v721 = vpop.f32.mrb[0].mxu0
          %v722 = vpop.f32.mrb[0].mxu0
          %v723 = vadd.f32 0.0, %v722
          %v724 = vpop.f32.mrb[0].mxu0
          %725 = vmatprep.mubr.bf16.mxu0 %v421
          %726 = vmatmul.mubr.bf16.gmra.mrb[0].mxu0 %v420
          %v727 = vpop.f32.mrb[0].mxu0
          %v728 = vadd.f32 0.0, %v727
          %v729 = vpop.f32.mrb[0].mxu0
          %v730 = vpop.f32.mrb[0].mxu0
          %v731 = vadd.f32 0.0, %v730
          %v732 = vpop.f32.mrb[0].mxu0
          %733 = vmatprep.mubr.bf16.mxu0 %v423
          %734 = vmatmul.mubr.bf16.gmra.mrb[0].mxu0 %v422
          %v735 = vpop.f32.mrb[0].mxu0
          %v736 = vadd.f32 0.0, %v735
          %v737 = vpop.f32.mrb[0].mxu0
          %v738 = vpop.f32.mrb[0].mxu0
          %v739 = vadd.f32 0.0, %v738
          %v740 = vpop.f32.mrb[0].mxu0
          %741 = vmatprep.mubr.bf16.mxu0 %v425
          %742 = vmatmul.mubr.bf16.gmra.mrb[0].mxu0 %v424
          %v743 = vpop.f32.mrb[0].mxu0
          %v744 = vadd.f32 0.0, %v743
          %v745 = vpop.f32.mrb[0].mxu0
          %v746 = vpop.f32.mrb[0].mxu0
          %v747 = vadd.f32 0.0, %v746
          %v748 = vpop.f32.mrb[0].mxu0
          %749 = vmatprep.mubr.bf16.mxu0 %v427
          %750 = vmatmul.mubr.bf16.gmra.mrb[0].mxu0 %v426
          %v751 = vpop.f32.mrb[0].mxu0
          %v752 = vadd.f32 0.0, %v751
          %v753 = vpop.f32.mrb[0].mxu0
          %v754 = vpop.f32.mrb[0].mxu0
          %v755 = vadd.f32 0.0, %v754
          %v756 = vpop.f32.mrb[0].mxu0
          %757 = vmatprep.mubr.bf16.mxu0 %v429
          %758 = vmatmul.mubr.bf16.gmra.mrb[0].mxu0 %v428
          %v759 = vpop.f32.mrb[0].mxu0
          %v760 = vadd.f32 0.0, %v759
          %v761 = vpop.f32.mrb[0].mxu0
          %v762 = vpop.f32.mrb[0].mxu0
          %v763 = vadd.f32 0.0, %v762
          %v764 = vpop.f32.mrb[0].mxu0
          %765 = vmatprep.mubr.bf16.mxu0 %v431
          %766 = vmatmul.mubr.bf16.gmra.mrb[0].mxu0 %v430
          %v767 = vpop.f32.mrb[0].mxu0
          %v768 = vadd.f32 0.0, %v767
          %v769 = vpop.f32.mrb[0].mxu0
          %v770 = vpop.f32.mrb[0].mxu0
          %v771 = vadd.f32 0.0, %v770
          %v772 = vpop.f32.mrb[0].mxu0
          %773 = vmatprep.mubr.bf16.mxu0 %v433
          %774 = vmatmul.mubr.bf16.gmra.mrb[0].mxu0 %v432
          %v775 = vpop.f32.mrb[0].mxu0
          %v776 = vadd.f32 0.0, %v775
          %v777 = vpop.f32.mrb[0].mxu0
          %v778 = vpop.f32.mrb[0].mxu0
          %v779 = vadd.f32 0.0, %v778
          %v780 = vpop.f32.mrb[0].mxu0
          %781 = vmatprep.mubr.bf16.mxu0 %v435
          %782 = vmatmul.mubr.bf16.gmra.mrb[0].mxu0 %v434
          %v783 = vpop.f32.mrb[0].mxu0
          %v784 = vadd.f32 0.0, %v783
          %v785 = vpop.f32.mrb[0].mxu0
          %v786 = vpop.f32.mrb[0].mxu0
          %v787 = vadd.f32 0.0, %v786
          %v788 = vpop.f32.mrb[0].mxu0
          %789 = vmatprep.mubr.bf16.mxu0 %v437
          %790 = vmatmul.mubr.bf16.gmra.mrb[0].mxu0 %v436
          %v791 = vpop.f32.mrb[0].mxu0
          %v792 = vadd.f32 0.0, %v791
          %v793 = vpop.f32.mrb[0].mxu0
          %v794 = vpop.f32.mrb[0].mxu0
          %v795 = vadd.f32 0.0, %v794
          %v796 = vpop.f32.mrb[0].mxu0
          %797 = vmatprep.mubr.bf16.mxu0 %v439
          %798 = vmatmul.mubr.bf16.gmra.mrb[0].mxu0 %v438
          %v799 = vpop.f32.mrb[0].mxu0
          %v800 = vadd.f32 0.0, %v799
          %v801 = vpop.f32.mrb[0].mxu0
          %v802 = vpop.f32.mrb[0].mxu0
          %v803 = vadd.f32 0.0, %v802
          %v804 = vpop.f32.mrb[0].mxu0
          %805 = vmatprep.mubr.bf16.mxu0 %v441
          %806 = vmatmul.mubr.bf16.gmra.mrb[0].mxu0 %v440
          %v807 = vpop.f32.mrb[0].mxu0
          %v808 = vadd.f32 0.0, %v807
          %v809 = vpop.f32.mrb[0].mxu0
          %v810 = vpop.f32.mrb[0].mxu0
          %v811 = vadd.f32 0.0, %v810
          %v812 = vpop.f32.mrb[0].mxu0
          %813 = vmatprep.mubr.bf16.mxu0 %v443
          %814 = vmatmul.mubr.bf16.gmra.mrb[0].mxu0 %v442
          %v815 = vpop.f32.mrb[0].mxu0
          %v816 = vadd.f32 0.0, %v815
          %v817 = vpop.f32.mrb[0].mxu0
          %v818 = vpop.f32.mrb[0].mxu0
          %v819 = vadd.f32 0.0, %v818
          %v820 = vpop.f32.mrb[0].mxu0
          %821 = vmatprep.mubr.bf16.mxu0 %v445
          %822 = vmatmul.mubr.bf16.gmra.mrb[0].mxu0 %v444
          %v823 = vpop.f32.mrb[0].mxu0
          %v824 = vadd.f32 0.0, %v823
          %v825 = vpop.f32.mrb[0].mxu0
          %v826 = vpop.f32.mrb[0].mxu0
          %v827 = vadd.f32 0.0, %v826
          %v828 = vpop.f32.mrb[0].mxu0
          %829 = vmatprep.mubr.bf16.mxu0 %v447
          %830 = vmatmul.mubr.bf16.gmra.mrb[0].mxu0 %v446
          %v831 = vpop.f32.mrb[0].mxu0
          %v832 = vadd.f32 0.0, %v831
          %v833 = vpop.f32.mrb[0].mxu0
          %v834 = vpop.f32.mrb[0].mxu0
          %v835 = vadd.f32 0.0, %v834
          %v836 = vpop.f32.mrb[0].mxu0
          %837 = vmatprep.mubr.bf16.mxu0 %v449
          %838 = vmatmul.mubr.bf16.gmra.mrb[0].mxu0 %v448
          %v839 = vpop.f32.mrb[0].mxu0
          %v840 = vadd.f32 0.0, %v839
          %v841 = vpop.f32.mrb[0].mxu0
          %v842 = vpop.f32.mrb[0].mxu0
          %v843 = vadd.f32 0.0, %v842
          %v844 = vpop.f32.mrb[0].mxu0
          %845 = vmatprep.mubr.bf16.mxu0 %v451
          %846 = vmatmul.mubr.bf16.gmra.mrb[0].mxu0 %v450
          %v847 = vpop.f32.mrb[0].mxu0
          %v848 = vadd.f32 0.0, %v847
          %v849 = vpop.f32.mrb[0].mxu0
          %v850 = vpop.f32.mrb[0].mxu0
          %v851 = vadd.f32 0.0, %v850
          %v852 = vpop.f32.mrb[0].mxu0
          %853 = vmatprep.mubr.bf16.mxu0 %v453
          %854 = vmatmul.mubr.bf16.gmra.mrb[0].mxu0 %v452
          %v855 = vpop.f32.mrb[0].mxu0
          %v856 = vadd.f32 0.0, %v855
          %v857 = vpop.f32.mrb[0].mxu0
          %v858 = vpop.f32.mrb[0].mxu0
          %v859 = vadd.f32 0.0, %v858
          %v860 = vpop.f32.mrb[0].mxu0
          %861 = vmatprep.mubr.bf16.mxu0 %v455
          %862 = vmatmul.mubr.bf16.gmra.mrb[0].mxu0 %v454
          %v863 = vpop.f32.mrb[0].mxu0
          %v864 = vadd.f32 0.0, %v863
          %v865 = vpop.f32.mrb[0].mxu0
          %v866 = vpop.f32.mrb[0].mxu0
          %v867 = vadd.f32 0.0, %v866
          %v868 = vpop.f32.mrb[0].mxu0
          %869 = vmatprep.mubr.bf16.mxu0 %v457
          %870 = vmatmul.mubr.bf16.gmra.mrb[0].mxu0 %v456
          %v871 = vpop.f32.mrb[0].mxu0
          %v872 = vadd.f32 0.0, %v871
          %v873 = vpop.f32.mrb[0].mxu0
          %v874 = vpop.f32.mrb[0].mxu0
          %v875 = vadd.f32 0.0, %v874
          %v876 = vpop.f32.mrb[0].mxu0
          %877 = vmatprep.mubr.bf16.mxu0 %v459
          %878 = vmatmul.mubr.bf16.gmra.mrb[0].mxu0 %v458
          %v879 = vpop.f32.mrb[0].mxu0
          %v880 = vadd.f32 0.0, %v879
          %v881 = vpop.f32.mrb[0].mxu0
          %v882 = vpop.f32.mrb[0].mxu0
          %v883 = vadd.f32 0.0, %v882
          %v884 = vpop.f32.mrb[0].mxu0
          %885 = vmatprep.mubr.bf16.mxu0 %v461
          %886 = vmatmul.mubr.bf16.gmra.mrb[0].mxu0 %v460
          %v887 = vpop.f32.mrb[0].mxu0
          %v888 = vadd.f32 0.0, %v887
          %v889 = vpop.f32.mrb[0].mxu0
          %v890 = vpop.f32.mrb[0].mxu0
          %v891 = vadd.f32 0.0, %v890
          %v892 = vpop.f32.mrb[0].mxu0
          %893 = vmatprep.mubr.bf16.mxu0 %v463
          %894 = vmatmul.mubr.bf16.gmra.mrb[0].mxu0 %v462
          %v895 = vpop.f32.mrb[0].mxu0
          %v896 = vadd.f32 0.0, %v895
          %v897 = vpop.f32.mrb[0].mxu0
          %v898 = vpop.f32.mrb[0].mxu0
          %v899 = vadd.f32 0.0, %v898
          %v900 = vpop.f32.mrb[0].mxu0
          %901 = vmatprep.mubr.bf16.mxu0 %v465
          %902 = vmatmul.mubr.bf16.gmra.mrb[0].mxu0 %v464
          %v903 = vpop.f32.mrb[0].mxu0
          %v904 = vadd.f32 0.0, %v903
          %v905 = vpop.f32.mrb[0].mxu0
          %v906 = vpop.f32.mrb[0].mxu0
          %v907 = vadd.f32 0.0, %v906
          %v908 = vpop.f32.mrb[0].mxu0
          %909 = vmatprep.mubr.bf16.mxu0 %v467
          %910 = vmatmul.mubr.bf16.gmra.mrb[0].mxu0 %v466
          %v911 = vpop.f32.mrb[0].mxu0
          %v912 = vadd.f32 0.0, %v911
          %v913 = vpop.f32.mrb[0].mxu0
          %v914 = vpop.f32.mrb[0].mxu0
          %v915 = vadd.f32 0.0, %v914
          %v916 = vpop.f32.mrb[0].mxu0
          %917 = vmatprep.mubr.bf16.mxu0 %v469
          %918 = vmatmul.mubr.bf16.gmra.mrb[0].mxu0 %v468
          %v919 = vpop.f32.mrb[0].mxu0
          %v920 = vadd.f32 0.0, %v919
          %v921 = vpop.f32.mrb[0].mxu0
          %v922 = vpop.f32.mrb[0].mxu0
          %v923 = vadd.f32 0.0, %v922
          %v924 = vpop.f32.mrb[0].mxu0
          %925 = vmatprep.mubr.bf16.mxu0 %v471
          %926 = vmatmul.mubr.bf16.gmra.mrb[0].mxu0 %v470
          %v927 = vpop.f32.mrb[0].mxu0
          %v928 = vadd.f32 0.0, %v927
          %v929 = vpop.f32.mrb[0].mxu0
          %v930 = vpop.f32.mrb[0].mxu0
          %v931 = vadd.f32 0.0, %v930
          %v932 = vpop.f32.mrb[0].mxu0
          %933 = vmatprep.mubr.bf16.mxu0 %v473
          %934 = vmatmul.mubr.bf16.gmra.mrb[0].mxu0 %v472
          %v935 = vpop.f32.mrb[0].mxu0
          %v936 = vadd.f32 0.0, %v935
          %v937 = vpop.f32.mrb[0].mxu0
          %v938 = vpop.f32.mrb[0].mxu0
          %v939 = vadd.f32 0.0, %v938
          %v940 = vpop.f32.mrb[0].mxu0
          %941 = vmatprep.mubr.bf16.mxu0 %v475
          %942 = vmatmul.mubr.bf16.gmra.mrb[0].mxu0 %v474
          %v943 = vpop.f32.mrb[0].mxu0
          %v944 = vadd.f32 0.0, %v943
          %v945 = vpop.f32.mrb[0].mxu0
          %v946 = vpop.f32.mrb[0].mxu0
          %v947 = vadd.f32 0.0, %v946
          %v948 = vpop.f32.mrb[0].mxu0
          %949 = vmatprep.mubr.bf16.mxu0 %v477
          %950 = vmatmul.mubr.bf16.gmra.mrb[0].mxu0 %v476
          %v951 = vpop.f32.mrb[0].mxu0
          %v952 = vadd.f32 0.0, %v951
          %v953 = vpop.f32.mrb[0].mxu0
          %v954 = vpop.f32.mrb[0].mxu0
          %v955 = vadd.f32 0.0, %v954
          %v956 = vpop.f32.mrb[0].mxu0
          %957 = vmatprep.mubr.bf16.mxu0 %v479
          %958 = vmatmul.mubr.bf16.gmra.mrb[0].mxu0 %v478
          %v959 = vpop.f32.mrb[0].mxu0
          %v960 = vadd.f32 0.0, %v959
          %v961 = vpop.f32.mrb[0].mxu0
          %v962 = vpop.f32.mrb[0].mxu0
          %v963 = vadd.f32 0.0, %v962
          %v964 = vpop.f32.mrb[0].mxu0
          %965 = vmatprep.mubr.bf16.mxu0 %v481
          %966 = vmatmul.mubr.bf16.gmra.mrb[0].mxu0 %v480
          %v967 = vpop.f32.mrb[0].mxu0
          %v968 = vadd.f32 0.0, %v967
          %v969 = vpop.f32.mrb[0].mxu0
          %v970 = vpop.f32.mrb[0].mxu0
          %v971 = vadd.f32 0.0, %v970
          %v972 = vpop.f32.mrb[0].mxu0
          %973 = vdwg.mxu0
          %s974 = smul.addr %s553, 8
          %s975 = scalar_lea.vmem %s288, %s974
          %v976 = vld [vmem:[%s975] sm:$0xff]
          %v978 = vcombine.high %v976, %v976
          %v980 = vunpack.c.l.s4 1966171168
          %v981 = vunpack.c.0.s8 %v980
          %v982 = vlaneseq
          %v983 = vshrl.u32 %v982, 7
          %v984 = vsub.s32 %v981, %v983
          %v985 = vrot.slane %v976, %v984
          %v987 = vunpack.c.l.s4 1966171168
          %v988 = vunpack.c.0.s8 %v987
          %v989 = vlaneseq
          %v990 = vshrl.u32 %v989, 7
          %v991 = vsub.s32 %v988, %v990
          %v992 = vrot.slane %v978, %v991
          %v993 = vcombine.high %v985, %v985
          %v994 = vcombine.high %v992, %v992
          %v996 = vunpack.c.l.s4 1966171168
          %v997 = vunpack.c.0.s8 %v996
          %v998 = vlaneseq
          %v999 = vshrl.u32 %v998, 7
          %v1000 = vsub.s32 %v997, %v999
          %v1001 = vrot.slane %v985, %v1000
          %v1003 = vunpack.c.l.s4 1966171168
          %v1004 = vunpack.c.0.s8 %v1003
          %v1005 = vlaneseq
          %v1006 = vshrl.u32 %v1005, 7
          %v1007 = vsub.s32 %v1004, %v1006
          %v1008 = vrot.slane %v992, %v1007
          %v1010 = vunpack.c.l.s4 1966171168
          %v1011 = vunpack.c.0.s8 %v1010
          %v1012 = vlaneseq
          %v1013 = vshrl.u32 %v1012, 7
          %v1014 = vsub.s32 %v1011, %v1013
          %v1015 = vrot.slane %v993, %v1014
          %v1017 = vunpack.c.l.s4 1966171168
          %v1018 = vunpack.c.0.s8 %v1017
          %v1019 = vlaneseq
          %v1020 = vshrl.u32 %v1019, 7
          %v1021 = vsub.s32 %v1018, %v1020
          %v1022 = vrot.slane %v994, %v1021
          %v1023 = vcombine.high %v1001, %v1001
          %v1024 = vcombine.high %v1008, %v1008
          %v1025 = vcombine.high %v1015, %v1015
          %v1026 = vcombine.high %v1022, %v1022
          %v1027 = vlaneseq
          %v1028 = vshrl.u32 %v1027, 7
          %v1029 = vsub.s32 0, %v1028
          %v1030 = vrot.slane %v1001, %v1029
          %v1031 = vlaneseq
          %v1032 = vshrl.u32 %v1031, 7
          %v1033 = vsub.s32 0, %v1032
          %v1034 = vrot.slane %v1015, %v1033
          %v1035 = vlaneseq
          %v1036 = vshrl.u32 %v1035, 7
          %v1037 = vsub.s32 0, %v1036
          %v1038 = vrot.slane %v1023, %v1037
          %v1039 = vlaneseq
          %v1040 = vshrl.u32 %v1039, 7
          %v1041 = vsub.s32 0, %v1040
          %v1042 = vrot.slane %v1025, %v1041
          %v1043 = vlaneseq
          %v1044 = vshrl.u32 %v1043, 7
          %v1045 = vsub.s32 0, %v1044
          %v1046 = vrot.slane %v1008, %v1045
          %v1047 = vlaneseq
          %v1048 = vshrl.u32 %v1047, 7
          %v1049 = vsub.s32 0, %v1048
          %v1050 = vrot.slane %v1022, %v1049
          %v1051 = vlaneseq
          %v1052 = vshrl.u32 %v1051, 7
          %v1053 = vsub.s32 0, %v1052
          %v1054 = vrot.slane %v1024, %v1053
          %v1055 = vlaneseq
          %v1056 = vshrl.u32 %v1055, 7
          %v1057 = vsub.s32 0, %v1056
          %v1058 = vrot.slane %v1026, %v1057
          %v1067 = vadd.f32 %v720, %v1030
          %v1068 = vadd.f32 %v723, %v1030
          %v1069 = vadd.f32 %v728, %v1030
          %v1070 = vadd.f32 %v731, %v1030
          %v1071 = vadd.f32 %v736, %v1030
          %v1072 = vadd.f32 %v739, %v1030
          %v1073 = vadd.f32 %v744, %v1030
          %v1074 = vadd.f32 %v747, %v1030
          %v1075 = vadd.f32 %v752, %v1034
          %v1076 = vadd.f32 %v755, %v1034
          %v1077 = vadd.f32 %v760, %v1034
          %v1078 = vadd.f32 %v763, %v1034
          %v1079 = vadd.f32 %v768, %v1034
          %v1080 = vadd.f32 %v771, %v1034
          %v1081 = vadd.f32 %v776, %v1034
          %v1082 = vadd.f32 %v779, %v1034
          %v1083 = vadd.f32 %v784, %v1038
          %v1084 = vadd.f32 %v787, %v1038
          %v1085 = vadd.f32 %v792, %v1038
          %v1086 = vadd.f32 %v795, %v1038
          %v1087 = vadd.f32 %v800, %v1038
          %v1088 = vadd.f32 %v803, %v1038
          %v1089 = vadd.f32 %v808, %v1038
          %v1090 = vadd.f32 %v811, %v1038
          %v1091 = vadd.f32 %v816, %v1042
          %v1092 = vadd.f32 %v819, %v1042
          %v1093 = vadd.f32 %v824, %v1042
          %v1094 = vadd.f32 %v827, %v1042
          %v1095 = vadd.f32 %v832, %v1042
          %v1096 = vadd.f32 %v835, %v1042
          %v1097 = vadd.f32 %v840, %v1042
          %v1098 = vadd.f32 %v843, %v1042
          %v1099 = vadd.f32 %v848, %v1046
          %v1100 = vadd.f32 %v851, %v1046
          %v1101 = vadd.f32 %v856, %v1046
          %v1102 = vadd.f32 %v859, %v1046
          %v1103 = vadd.f32 %v864, %v1046
          %v1104 = vadd.f32 %v867, %v1046
          %v1105 = vadd.f32 %v872, %v1046
          %v1106 = vadd.f32 %v875, %v1046
          %v1107 = vadd.f32 %v880, %v1050
          %v1108 = vadd.f32 %v883, %v1050
          %v1109 = vadd.f32 %v888, %v1050
          %v1110 = vadd.f32 %v891, %v1050
          %v1111 = vadd.f32 %v896, %v1050
          %v1112 = vadd.f32 %v899, %v1050
          %v1113 = vadd.f32 %v904, %v1050
          %v1114 = vadd.f32 %v907, %v1050
          %v1115 = vadd.f32 %v912, %v1054
          %v1116 = vadd.f32 %v915, %v1054
          %v1117 = vadd.f32 %v920, %v1054
          %v1118 = vadd.f32 %v923, %v1054
          %v1119 = vadd.f32 %v928, %v1054
          %v1120 = vadd.f32 %v931, %v1054
          %v1121 = vadd.f32 %v936, %v1054
          %v1122 = vadd.f32 %v939, %v1054
          %v1123 = vadd.f32 %v944, %v1058
          %v1124 = vadd.f32 %v947, %v1058
          %v1125 = vadd.f32 %v952, %v1058
          %v1126 = vadd.f32 %v955, %v1058
          %v1127 = vadd.f32 %v960, %v1058
          %v1128 = vadd.f32 %v963, %v1058
          %v1129 = vadd.f32 %v968, %v1058
          %v1130 = vadd.f32 %v971, %v1058
          %v1131 = vmax.f32 %v1067, 0.0
          %v1132 = vmax.f32 %v1068, 0.0
          %v1133 = vmax.f32 %v1069, 0.0
          %v1134 = vmax.f32 %v1070, 0.0
          %v1135 = vmax.f32 %v1071, 0.0
          %v1136 = vmax.f32 %v1072, 0.0
          %v1137 = vmax.f32 %v1073, 0.0
          %v1138 = vmax.f32 %v1074, 0.0
          %v1139 = vmax.f32 %v1075, 0.0
          %v1140 = vmax.f32 %v1076, 0.0
          %v1141 = vmax.f32 %v1077, 0.0
          %v1142 = vmax.f32 %v1078, 0.0
          %v1143 = vmax.f32 %v1079, 0.0
          %v1144 = vmax.f32 %v1080, 0.0
          %v1145 = vmax.f32 %v1081, 0.0
          %v1146 = vmax.f32 %v1082, 0.0
          %v1147 = vmax.f32 %v1083, 0.0
          %v1148 = vmax.f32 %v1084, 0.0
          %v1149 = vmax.f32 %v1085, 0.0
          %v1150 = vmax.f32 %v1086, 0.0
          %v1151 = vmax.f32 %v1087, 0.0
          %v1152 = vmax.f32 %v1088, 0.0
          %v1153 = vmax.f32 %v1089, 0.0
          %v1154 = vmax.f32 %v1090, 0.0
          %v1155 = vmax.f32 %v1091, 0.0
          %v1156 = vmax.f32 %v1092, 0.0
          %v1157 = vmax.f32 %v1093, 0.0
          %v1158 = vmax.f32 %v1094, 0.0
          %v1159 = vmax.f32 %v1095, 0.0
          %v1160 = vmax.f32 %v1096, 0.0
          %v1161 = vmax.f32 %v1097, 0.0
          %v1162 = vmax.f32 %v1098, 0.0
          %v1163 = vmax.f32 %v1099, 0.0
          %v1164 = vmax.f32 %v1100, 0.0
          %v1165 = vmax.f32 %v1101, 0.0
          %v1166 = vmax.f32 %v1102, 0.0
          %v1167 = vmax.f32 %v1103, 0.0
          %v1168 = vmax.f32 %v1104, 0.0
          %v1169 = vmax.f32 %v1105, 0.0
          %v1170 = vmax.f32 %v1106, 0.0
          %v1171 = vmax.f32 %v1107, 0.0
          %v1172 = vmax.f32 %v1108, 0.0
          %v1173 = vmax.f32 %v1109, 0.0
          %v1174 = vmax.f32 %v1110, 0.0
          %v1175 = vmax.f32 %v1111, 0.0
          %v1176 = vmax.f32 %v1112, 0.0
          %v1177 = vmax.f32 %v1113, 0.0
          %v1178 = vmax.f32 %v1114, 0.0
          %v1179 = vmax.f32 %v1115, 0.0
          %v1180 = vmax.f32 %v1116, 0.0
          %v1181 = vmax.f32 %v1117, 0.0
          %v1182 = vmax.f32 %v1118, 0.0
          %v1183 = vmax.f32 %v1119, 0.0
          %v1184 = vmax.f32 %v1120, 0.0
          %v1185 = vmax.f32 %v1121, 0.0
          %v1186 = vmax.f32 %v1122, 0.0
          %v1187 = vmax.f32 %v1123, 0.0
          %v1188 = vmax.f32 %v1124, 0.0
          %v1189 = vmax.f32 %v1125, 0.0
          %v1190 = vmax.f32 %v1126, 0.0
          %v1191 = vmax.f32 %v1127, 0.0
          %v1192 = vmax.f32 %v1128, 0.0
          %v1193 = vmax.f32 %v1129, 0.0
          %v1194 = vmax.f32 %v1130, 0.0
          %s1195 = scalar_lea.vmem [#allocation5], %s553
          %v1196 = vld [vmem:[%s1195] sm:$0x1]
          %v1198 = vlaneseq
          %v1199 = vshrl.u32 %v1198, 7
          %v1200 = vsub.s32 0, %v1199
          %v1201 = vrot.slane %v1196, %v1200
          %v1203 = vmul.f32 %v1131, %v1201
          %v1204 = vmul.f32 %v1132, %v1201
          %v1205 = vmul.f32 %v1133, %v1201
          %v1206 = vmul.f32 %v1134, %v1201
          %v1207 = vmul.f32 %v1135, %v1201
          %v1208 = vmul.f32 %v1136, %v1201
          %v1209 = vmul.f32 %v1137, %v1201
          %v1210 = vmul.f32 %v1138, %v1201
          %v1211 = vmul.f32 %v1139, %v1201
          %v1212 = vmul.f32 %v1140, %v1201
          %v1213 = vmul.f32 %v1141, %v1201
          %v1214 = vmul.f32 %v1142, %v1201
          %v1215 = vmul.f32 %v1143, %v1201
          %v1216 = vmul.f32 %v1144, %v1201
          %v1217 = vmul.f32 %v1145, %v1201
          %v1218 = vmul.f32 %v1146, %v1201
          %v1219 = vmul.f32 %v1147, %v1201
          %v1220 = vmul.f32 %v1148, %v1201
          %v1221 = vmul.f32 %v1149, %v1201
          %v1222 = vmul.f32 %v1150, %v1201
          %v1223 = vmul.f32 %v1151, %v1201
          %v1224 = vmul.f32 %v1152, %v1201
          %v1225 = vmul.f32 %v1153, %v1201
          %v1226 = vmul.f32 %v1154, %v1201
          %v1227 = vmul.f32 %v1155, %v1201
          %v1228 = vmul.f32 %v1156, %v1201
          %v1229 = vmul.f32 %v1157, %v1201
          %v1230 = vmul.f32 %v1158, %v1201
          %v1231 = vmul.f32 %v1159, %v1201
          %v1232 = vmul.f32 %v1160, %v1201
          %v1233 = vmul.f32 %v1161, %v1201
          %v1234 = vmul.f32 %v1162, %v1201
          %v1235 = vmul.f32 %v1163, %v1201
          %v1236 = vmul.f32 %v1164, %v1201
          %v1237 = vmul.f32 %v1165, %v1201
          %v1238 = vmul.f32 %v1166, %v1201
          %v1239 = vmul.f32 %v1167, %v1201
          %v1240 = vmul.f32 %v1168, %v1201
          %v1241 = vmul.f32 %v1169, %v1201
          %v1242 = vmul.f32 %v1170, %v1201
          %v1243 = vmul.f32 %v1171, %v1201
          %v1244 = vmul.f32 %v1172, %v1201
          %v1245 = vmul.f32 %v1173, %v1201
          %v1246 = vmul.f32 %v1174, %v1201
          %v1247 = vmul.f32 %v1175, %v1201
          %v1248 = vmul.f32 %v1176, %v1201
          %v1249 = vmul.f32 %v1177, %v1201
          %v1250 = vmul.f32 %v1178, %v1201
          %v1251 = vmul.f32 %v1179, %v1201
          %v1252 = vmul.f32 %v1180, %v1201
          %v1253 = vmul.f32 %v1181, %v1201
          %v1254 = vmul.f32 %v1182, %v1201
          %v1255 = vmul.f32 %v1183, %v1201
          %v1256 = vmul.f32 %v1184, %v1201
          %v1257 = vmul.f32 %v1185, %v1201
          %v1258 = vmul.f32 %v1186, %v1201
          %v1259 = vmul.f32 %v1187, %v1201
          %v1260 = vmul.f32 %v1188, %v1201
          %v1261 = vmul.f32 %v1189, %v1201
          %v1262 = vmul.f32 %v1190, %v1201
          %v1263 = vmul.f32 %v1191, %v1201
          %v1264 = vmul.f32 %v1192, %v1201
          %v1265 = vmul.f32 %v1193, %v1201
          %v1266 = vmul.f32 %v1194, %v1201
          %1267 = vadd.xlane.f32.xlu0 %v1203
          %v1268 = vpop.xlane.xlu0 %1267
          %1269 = vadd.xlane.f32.xlu0 %v1204
          %v1270 = vpop.xlane.xlu0 %1269
          %1271 = vadd.xlane.f32.xlu0 %v1205
          %v1272 = vpop.xlane.xlu0 %1271
          %1273 = vadd.xlane.f32.xlu0 %v1206
          %v1274 = vpop.xlane.xlu0 %1273
          %1275 = vadd.xlane.f32.xlu0 %v1207
          %v1276 = vpop.xlane.xlu0 %1275
          %1277 = vadd.xlane.f32.xlu0 %v1208
          %v1278 = vpop.xlane.xlu0 %1277
          %1279 = vadd.xlane.f32.xlu0 %v1209
          %v1280 = vpop.xlane.xlu0 %1279
          %1281 = vadd.xlane.f32.xlu0 %v1210
          %v1282 = vpop.xlane.xlu0 %1281
          %1283 = vadd.xlane.f32.xlu0 %v1211
          %v1284 = vpop.xlane.xlu0 %1283
          %1285 = vadd.xlane.f32.xlu0 %v1212
          %v1286 = vpop.xlane.xlu0 %1285
          %1287 = vadd.xlane.f32.xlu0 %v1213
          %v1288 = vpop.xlane.xlu0 %1287
          %1289 = vadd.xlane.f32.xlu0 %v1214
          %v1290 = vpop.xlane.xlu0 %1289
          %1291 = vadd.xlane.f32.xlu0 %v1215
          %v1292 = vpop.xlane.xlu0 %1291
          %1293 = vadd.xlane.f32.xlu0 %v1216
          %v1294 = vpop.xlane.xlu0 %1293
          %1295 = vadd.xlane.f32.xlu0 %v1217
          %v1296 = vpop.xlane.xlu0 %1295
          %1297 = vadd.xlane.f32.xlu0 %v1218
          %v1298 = vpop.xlane.xlu0 %1297
          %1299 = vadd.xlane.f32.xlu0 %v1219
          %v1300 = vpop.xlane.xlu0 %1299
          %1301 = vadd.xlane.f32.xlu0 %v1220
          %v1302 = vpop.xlane.xlu0 %1301
          %1303 = vadd.xlane.f32.xlu0 %v1221
          %v1304 = vpop.xlane.xlu0 %1303
          %1305 = vadd.xlane.f32.xlu0 %v1222
          %v1306 = vpop.xlane.xlu0 %1305
          %1307 = vadd.xlane.f32.xlu0 %v1223
          %v1308 = vpop.xlane.xlu0 %1307
          %1309 = vadd.xlane.f32.xlu0 %v1224
          %v1310 = vpop.xlane.xlu0 %1309
          %1311 = vadd.xlane.f32.xlu0 %v1225
          %v1312 = vpop.xlane.xlu0 %1311
          %1313 = vadd.xlane.f32.xlu0 %v1226
          %v1314 = vpop.xlane.xlu0 %1313
          %1315 = vadd.xlane.f32.xlu0 %v1227
          %v1316 = vpop.xlane.xlu0 %1315
          %1317 = vadd.xlane.f32.xlu0 %v1228
          %v1318 = vpop.xlane.xlu0 %1317
          %1319 = vadd.xlane.f32.xlu0 %v1229
          %v1320 = vpop.xlane.xlu0 %1319
          %1321 = vadd.xlane.f32.xlu0 %v1230
          %v1322 = vpop.xlane.xlu0 %1321
          %1323 = vadd.xlane.f32.xlu0 %v1231
          %v1324 = vpop.xlane.xlu0 %1323
          %1325 = vadd.xlane.f32.xlu0 %v1232
          %v1326 = vpop.xlane.xlu0 %1325
          %1327 = vadd.xlane.f32.xlu0 %v1233
          %v1328 = vpop.xlane.xlu0 %1327
          %1329 = vadd.xlane.f32.xlu0 %v1234
          %v1330 = vpop.xlane.xlu0 %1329
          %1331 = vadd.xlane.f32.xlu0 %v1235
          %v1332 = vpop.xlane.xlu0 %1331
          %1333 = vadd.xlane.f32.xlu0 %v1236
          %v1334 = vpop.xlane.xlu0 %1333
          %1335 = vadd.xlane.f32.xlu0 %v1237
          %v1336 = vpop.xlane.xlu0 %1335
          %1337 = vadd.xlane.f32.xlu0 %v1238
          %v1338 = vpop.xlane.xlu0 %1337
          %1339 = vadd.xlane.f32.xlu0 %v1239
          %v1340 = vpop.xlane.xlu0 %1339
          %1341 = vadd.xlane.f32.xlu0 %v1240
          %v1342 = vpop.xlane.xlu0 %1341
          %1343 = vadd.xlane.f32.xlu0 %v1241
          %v1344 = vpop.xlane.xlu0 %1343
          %1345 = vadd.xlane.f32.xlu0 %v1242
          %v1346 = vpop.xlane.xlu0 %1345
          %1347 = vadd.xlane.f32.xlu0 %v1243
          %v1348 = vpop.xlane.xlu0 %1347
          %1349 = vadd.xlane.f32.xlu0 %v1244
          %v1350 = vpop.xlane.xlu0 %1349
          %1351 = vadd.xlane.f32.xlu0 %v1245
          %v1352 = vpop.xlane.xlu0 %1351
          %1353 = vadd.xlane.f32.xlu0 %v1246
          %v1354 = vpop.xlane.xlu0 %1353
          %1355 = vadd.xlane.f32.xlu0 %v1247
          %v1356 = vpop.xlane.xlu0 %1355
          %1357 = vadd.xlane.f32.xlu0 %v1248
          %v1358 = vpop.xlane.xlu0 %1357
          %1359 = vadd.xlane.f32.xlu0 %v1249
          %v1360 = vpop.xlane.xlu0 %1359
          %1361 = vadd.xlane.f32.xlu0 %v1250
          %v1362 = vpop.xlane.xlu0 %1361
          %1363 = vadd.xlane.f32.xlu0 %v1251
          %v1364 = vpop.xlane.xlu0 %1363
          %1365 = vadd.xlane.f32.xlu0 %v1252
          %v1366 = vpop.xlane.xlu0 %1365
          %1367 = vadd.xlane.f32.xlu0 %v1253
          %v1368 = vpop.xlane.xlu0 %1367
          %1369 = vadd.xlane.f32.xlu0 %v1254
          %v1370 = vpop.xlane.xlu0 %1369
          %1371 = vadd.xlane.f32.xlu0 %v1255
          %v1372 = vpop.xlane.xlu0 %1371
          %1373 = vadd.xlane.f32.xlu0 %v1256
          %v1374 = vpop.xlane.xlu0 %1373
          %1375 = vadd.xlane.f32.xlu0 %v1257
          %v1376 = vpop.xlane.xlu0 %1375
          %1377 = vadd.xlane.f32.xlu0 %v1258
          %v1378 = vpop.xlane.xlu0 %1377
          %1379 = vadd.xlane.f32.xlu0 %v1259
          %v1380 = vpop.xlane.xlu0 %1379
          %1381 = vadd.xlane.f32.xlu0 %v1260
          %v1382 = vpop.xlane.xlu0 %1381
          %1383 = vadd.xlane.f32.xlu0 %v1261
          %v1384 = vpop.xlane.xlu0 %1383
          %1385 = vadd.xlane.f32.xlu0 %v1262
          %v1386 = vpop.xlane.xlu0 %1385
          %1387 = vadd.xlane.f32.xlu0 %v1263
          %v1388 = vpop.xlane.xlu0 %1387
          %1389 = vadd.xlane.f32.xlu0 %v1264
          %v1390 = vpop.xlane.xlu0 %1389
          %1391 = vadd.xlane.f32.xlu0 %v1265
          %v1392 = vpop.xlane.xlu0 %1391
          %1393 = vadd.xlane.f32.xlu0 %v1266
          %v1394 = vpop.xlane.xlu0 %1393
          %v1395 = vadd.f32 %v488, %v1268
          %v1396 = vadd.f32 %v489, %v1270
          %v1397 = vadd.f32 %v490, %v1272
          %v1398 = vadd.f32 %v491, %v1274
          %v1399 = vadd.f32 %v492, %v1276
          %v1400 = vadd.f32 %v493, %v1278
          %v1401 = vadd.f32 %v494, %v1280
          %v1402 = vadd.f32 %v495, %v1282
          %v1403 = vadd.f32 %v496, %v1284
          %v1404 = vadd.f32 %v497, %v1286
          %v1405 = vadd.f32 %v498, %v1288
          %v1406 = vadd.f32 %v499, %v1290
          %v1407 = vadd.f32 %v500, %v1292
          %v1408 = vadd.f32 %v501, %v1294
          %v1409 = vadd.f32 %v502, %v1296
          %v1410 = vadd.f32 %v503, %v1298
          %v1411 = vadd.f32 %v504, %v1300
          %v1412 = vadd.f32 %v505, %v1302
          %v1413 = vadd.f32 %v506, %v1304
          %v1414 = vadd.f32 %v507, %v1306
          %v1415 = vadd.f32 %v508, %v1308
          %v1416 = vadd.f32 %v509, %v1310
          %v1417 = vadd.f32 %v510, %v1312
          %v1418 = vadd.f32 %v511, %v1314
          %v1419 = vadd.f32 %v512, %v1316
          %v1420 = vadd.f32 %v513, %v1318
          %v1421 = vadd.f32 %v514, %v1320
          %v1422 = vadd.f32 %v515, %v1322
          %v1423 = vadd.f32 %v516, %v1324
          %v1424 = vadd.f32 %v517, %v1326
          %v1425 = vadd.f32 %v518, %v1328
          %v1426 = vadd.f32 %v519, %v1330
          %v1427 = vadd.f32 %v520, %v1332
          %v1428 = vadd.f32 %v521, %v1334
          %v1429 = vadd.f32 %v522, %v1336
          %v1430 = vadd.f32 %v523, %v1338
          %v1431 = vadd.f32 %v524, %v1340
          %v1432 = vadd.f32 %v525, %v1342
          %v1433 = vadd.f32 %v526, %v1344
          %v1434 = vadd.f32 %v527, %v1346
          %v1435 = vadd.f32 %v528, %v1348
          %v1436 = vadd.f32 %v529, %v1350
          %v1437 = vadd.f32 %v530, %v1352
          %v1438 = vadd.f32 %v531, %v1354
          %v1439 = vadd.f32 %v532, %v1356
          %v1440 = vadd.f32 %v533, %v1358
          %v1441 = vadd.f32 %v534, %v1360
          %v1442 = vadd.f32 %v535, %v1362
          %v1443 = vadd.f32 %v536, %v1364
          %v1444 = vadd.f32 %v537, %v1366
          %v1445 = vadd.f32 %v538, %v1368
          %v1446 = vadd.f32 %v539, %v1370
          %v1447 = vadd.f32 %v540, %v1372
          %v1448 = vadd.f32 %v541, %v1374
          %v1449 = vadd.f32 %v542, %v1376
          %v1450 = vadd.f32 %v543, %v1378
          %v1451 = vadd.f32 %v544, %v1380
          %v1452 = vadd.f32 %v545, %v1382
          %v1453 = vadd.f32 %v546, %v1384
          %v1454 = vadd.f32 %v547, %v1386
          %v1455 = vadd.f32 %v548, %v1388
          %v1456 = vadd.f32 %v549, %v1390
          %v1457 = vadd.f32 %v550, %v1392
          %v1458 = vadd.f32 %v551, %v1394
        $region49: #{attention_pallas.1} parent=35 // loop_footer
          %s487 = sadd.s32 1, %s483
        $region50: #{attention_pallas.1} parent=35 // loop_footer_branch
          %482 = sbr.rel target = $region46
        $region51: #{attention_pallas.1} parent=35 // loop_exit
          _
        %v1523 = vlaneseq
        %v1524 = vand.u32 %v1523, 127
        %v1525 = vlaneseq
        %v1526 = vshrl.u32 %v1525, 7
        %v1527 = vsub.s32 %v1524, %v1526
        %v1528 = vrot.slane %v488, %v1527
        %v1529 = vadd.s32 %v1524, 4294967288
        %v1530 = vlaneseq
        %v1531 = vshrl.u32 %v1530, 7
        %v1532 = vsub.s32 %v1529, %v1531
        %v1533 = vrot.slane %v489, %v1532
        %vm1534 = vcmask 130112
        %v1535 = vsel %vm1534, %v1533, %v1528
        %v1536 = vadd.s32 %v1524, 4294967280
        %v1537 = vlaneseq
        %v1538 = vshrl.u32 %v1537, 7
        %v1539 = vsub.s32 %v1536, %v1538
        %v1540 = vrot.slane %v490, %v1539
        %vm1541 = vcmask 195712
        %v1542 = vsel %vm1541, %v1540, %v1535
        %v1543 = vadd.s32 %v1524, 4294967272
        %v1544 = vlaneseq
        %v1545 = vshrl.u32 %v1544, 7
        %v1546 = vsub.s32 %v1543, %v1545
        %v1547 = vrot.slane %v491, %v1546
        %vm1548 = vcmask 261312
        %v1549 = vsel %vm1548, %v1547, %v1542
        %v1550 = vadd.s32 %v1524, 4294967264
        %v1551 = vlaneseq
        %v1552 = vshrl.u32 %v1551, 7
        %v1553 = vsub.s32 %v1550, %v1552
        %v1554 = vrot.slane %v492, %v1553
        %vm1555 = vcmask 326912
        %v1556 = vsel %vm1555, %v1554, %v1549
        %v1557 = vadd.s32 %v1524, 4294967256
        %v1558 = vlaneseq
        %v1559 = vshrl.u32 %v1558, 7
        %v1560 = vsub.s32 %v1557, %v1559
        %v1561 = vrot.slane %v493, %v1560
        %vm1562 = vcmask 392512
        %v1563 = vsel %vm1562, %v1561, %v1556
        %v1564 = vadd.s32 %v1524, 4294967248
        %v1565 = vlaneseq
        %v1566 = vshrl.u32 %v1565, 7
        %v1567 = vsub.s32 %v1564, %v1566
        %v1568 = vrot.slane %v494, %v1567
        %vm1569 = vcmask 458112
        %v1570 = vsel %vm1569, %v1568, %v1563
        %v1571 = vadd.s32 %v1524, 4294967240
        %v1572 = vlaneseq
        %v1573 = vshrl.u32 %v1572, 7
        %v1574 = vsub.s32 %v1571, %v1573
        %v1575 = vrot.slane %v495, %v1574
        %vm1576 = vcmask 523712
        %v1577 = vsel %vm1576, %v1575, %v1570
        %v1578 = vlaneseq
        %v1579 = vshrl.u32 %v1578, 7
        %v1580 = vsub.s32 %v1524, %v1579
        %v1581 = vrot.slane %v496, %v1580
        %v1582 = vlaneseq
        %v1583 = vshrl.u32 %v1582, 7
        %v1584 = vsub.s32 %v1529, %v1583
        %v1585 = vrot.slane %v497, %v1584
        %v1586 = vsel %vm1534, %v1585, %v1581
        %v1587 = vlaneseq
        %v1588 = vshrl.u32 %v1587, 7
        %v1589 = vsub.s32 %v1536, %v1588
        %v1590 = vrot.slane %v498, %v1589
        %v1591 = vsel %vm1541, %v1590, %v1586
        %v1592 = vlaneseq
        %v1593 = vshrl.u32 %v1592, 7
        %v1594 = vsub.s32 %v1543, %v1593
        %v1595 = vrot.slane %v499, %v1594
        %v1596 = vsel %vm1548, %v1595, %v1591
        %v1597 = vlaneseq
        %v1598 = vshrl.u32 %v1597, 7
        %v1599 = vsub.s32 %v1550, %v1598
        %v1600 = vrot.slane %v500, %v1599
        %v1601 = vsel %vm1555, %v1600, %v1596
        %v1602 = vlaneseq
        %v1603 = vshrl.u32 %v1602, 7
        %v1604 = vsub.s32 %v1557, %v1603
        %v1605 = vrot.slane %v501, %v1604
        %v1606 = vsel %vm1562, %v1605, %v1601
        %v1607 = vlaneseq
        %v1608 = vshrl.u32 %v1607, 7
        %v1609 = vsub.s32 %v1564, %v1608
        %v1610 = vrot.slane %v502, %v1609
        %v1611 = vsel %vm1569, %v1610, %v1606
        %v1612 = vlaneseq
        %v1613 = vshrl.u32 %v1612, 7
        %v1614 = vsub.s32 %v1571, %v1613
        %v1615 = vrot.slane %v503, %v1614
        %v1616 = vsel %vm1576, %v1615, %v1611
        %v1617 = vlaneseq
        %v1618 = vshrl.u32 %v1617, 7
        %v1619 = vsub.s32 %v1524, %v1618
        %v1620 = vrot.slane %v504, %v1619
        %v1621 = vlaneseq
        %v1622 = vshrl.u32 %v1621, 7
        %v1623 = vsub.s32 %v1529, %v1622
        %v1624 = vrot.slane %v505, %v1623
        %v1625 = vsel %vm1534, %v1624, %v1620
        %v1626 = vlaneseq
        %v1627 = vshrl.u32 %v1626, 7
        %v1628 = vsub.s32 %v1536, %v1627
        %v1629 = vrot.slane %v506, %v1628
        %v1630 = vsel %vm1541, %v1629, %v1625
        %v1631 = vlaneseq
        %v1632 = vshrl.u32 %v1631, 7
        %v1633 = vsub.s32 %v1543, %v1632
        %v1634 = vrot.slane %v507, %v1633
        %v1635 = vsel %vm1548, %v1634, %v1630
        %v1636 = vlaneseq
        %v1637 = vshrl.u32 %v1636, 7
        %v1638 = vsub.s32 %v1550, %v1637
        %v1639 = vrot.slane %v508, %v1638
        %v1640 = vsel %vm1555, %v1639, %v1635
        %v1641 = vlaneseq
        %v1642 = vshrl.u32 %v1641, 7
        %v1643 = vsub.s32 %v1557, %v1642
        %v1644 = vrot.slane %v509, %v1643
        %v1645 = vsel %vm1562, %v1644, %v1640
        %v1646 = vlaneseq
        %v1647 = vshrl.u32 %v1646, 7
        %v1648 = vsub.s32 %v1564, %v1647
        %v1649 = vrot.slane %v510, %v1648
        %v1650 = vsel %vm1569, %v1649, %v1645
        %v1651 = vlaneseq
        %v1652 = vshrl.u32 %v1651, 7
        %v1653 = vsub.s32 %v1571, %v1652
        %v1654 = vrot.slane %v511, %v1653
        %v1655 = vsel %vm1576, %v1654, %v1650
        %v1656 = vlaneseq
        %v1657 = vshrl.u32 %v1656, 7
        %v1658 = vsub.s32 %v1524, %v1657
        %v1659 = vrot.slane %v512, %v1658
        %v1660 = vlaneseq
        %v1661 = vshrl.u32 %v1660, 7
        %v1662 = vsub.s32 %v1529, %v1661
        %v1663 = vrot.slane %v513, %v1662
        %v1664 = vsel %vm1534, %v1663, %v1659
        %v1665 = vlaneseq
        %v1666 = vshrl.u32 %v1665, 7
        %v1667 = vsub.s32 %v1536, %v1666
        %v1668 = vrot.slane %v514, %v1667
        %v1669 = vsel %vm1541, %v1668, %v1664
        %v1670 = vlaneseq
        %v1671 = vshrl.u32 %v1670, 7
        %v1672 = vsub.s32 %v1543, %v1671
        %v1673 = vrot.slane %v515, %v1672
        %v1674 = vsel %vm1548, %v1673, %v1669
        %v1675 = vlaneseq
        %v1676 = vshrl.u32 %v1675, 7
        %v1677 = vsub.s32 %v1550, %v1676
        %v1678 = vrot.slane %v516, %v1677
        %v1679 = vsel %vm1555, %v1678, %v1674
        %v1680 = vlaneseq
        %v1681 = vshrl.u32 %v1680, 7
        %v1682 = vsub.s32 %v1557, %v1681
        %v1683 = vrot.slane %v517, %v1682
        %v1684 = vsel %vm1562, %v1683, %v1679
        %v1685 = vlaneseq
        %v1686 = vshrl.u32 %v1685, 7
        %v1687 = vsub.s32 %v1564, %v1686
        %v1688 = vrot.slane %v518, %v1687
        %v1689 = vsel %vm1569, %v1688, %v1684
        %v1690 = vlaneseq
        %v1691 = vshrl.u32 %v1690, 7
        %v1692 = vsub.s32 %v1571, %v1691
        %v1693 = vrot.slane %v519, %v1692
        %v1694 = vsel %vm1576, %v1693, %v1689
        %v1695 = vlaneseq
        %v1696 = vshrl.u32 %v1695, 7
        %v1697 = vsub.s32 %v1524, %v1696
        %v1698 = vrot.slane %v520, %v1697
        %v1699 = vlaneseq
        %v1700 = vshrl.u32 %v1699, 7
        %v1701 = vsub.s32 %v1529, %v1700
        %v1702 = vrot.slane %v521, %v1701
        %v1703 = vsel %vm1534, %v1702, %v1698
        %v1704 = vlaneseq
        %v1705 = vshrl.u32 %v1704, 7
        %v1706 = vsub.s32 %v1536, %v1705
        %v1707 = vrot.slane %v522, %v1706
        %v1708 = vsel %vm1541, %v1707, %v1703
        %v1709 = vlaneseq
        %v1710 = vshrl.u32 %v1709, 7
        %v1711 = vsub.s32 %v1543, %v1710
        %v1712 = vrot.slane %v523, %v1711
        %v1713 = vsel %vm1548, %v1712, %v1708
        %v1714 = vlaneseq
        %v1715 = vshrl.u32 %v1714, 7
        %v1716 = vsub.s32 %v1550, %v1715
        %v1717 = vrot.slane %v524, %v1716
        %v1718 = vsel %vm1555, %v1717, %v1713
        %v1719 = vlaneseq
        %v1720 = vshrl.u32 %v1719, 7
        %v1721 = vsub.s32 %v1557, %v1720
        %v1722 = vrot.slane %v525, %v1721
        %v1723 = vsel %vm1562, %v1722, %v1718
        %v1724 = vlaneseq
        %v1725 = vshrl.u32 %v1724, 7
        %v1726 = vsub.s32 %v1564, %v1725
        %v1727 = vrot.slane %v526, %v1726
        %v1728 = vsel %vm1569, %v1727, %v1723
        %v1729 = vlaneseq
        %v1730 = vshrl.u32 %v1729, 7
        %v1731 = vsub.s32 %v1571, %v1730
        %v1732 = vrot.slane %v527, %v1731
        %v1733 = vsel %vm1576, %v1732, %v1728
        %v1734 = vlaneseq
        %v1735 = vshrl.u32 %v1734, 7
        %v1736 = vsub.s32 %v1524, %v1735
        %v1737 = vrot.slane %v528, %v1736
        %v1738 = vlaneseq
        %v1739 = vshrl.u32 %v1738, 7
        %v1740 = vsub.s32 %v1529, %v1739
        %v1741 = vrot.slane %v529, %v1740
        %v1742 = vsel %vm1534, %v1741, %v1737
        %v1743 = vlaneseq
        %v1744 = vshrl.u32 %v1743, 7
        %v1745 = vsub.s32 %v1536, %v1744
        %v1746 = vrot.slane %v530, %v1745
        %v1747 = vsel %vm1541, %v1746, %v1742
        %v1748 = vlaneseq
        %v1749 = vshrl.u32 %v1748, 7
        %v1750 = vsub.s32 %v1543, %v1749
        %v1751 = vrot.slane %v531, %v1750
        %v1752 = vsel %vm1548, %v1751, %v1747
        %v1753 = vlaneseq
        %v1754 = vshrl.u32 %v1753, 7
        %v1755 = vsub.s32 %v1550, %v1754
        %v1756 = vrot.slane %v532, %v1755
        %v1757 = vsel %vm1555, %v1756, %v1752
        %v1758 = vlaneseq
        %v1759 = vshrl.u32 %v1758, 7
        %v1760 = vsub.s32 %v1557, %v1759
        %v1761 = vrot.slane %v533, %v1760
        %v1762 = vsel %vm1562, %v1761, %v1757
        %v1763 = vlaneseq
        %v1764 = vshrl.u32 %v1763, 7
        %v1765 = vsub.s32 %v1564, %v1764
        %v1766 = vrot.slane %v534, %v1765
        %v1767 = vsel %vm1569, %v1766, %v1762
        %v1768 = vlaneseq
        %v1769 = vshrl.u32 %v1768, 7
        %v1770 = vsub.s32 %v1571, %v1769
        %v1771 = vrot.slane %v535, %v1770
        %v1772 = vsel %vm1576, %v1771, %v1767
        %v1773 = vlaneseq
        %v1774 = vshrl.u32 %v1773, 7
        %v1775 = vsub.s32 %v1524, %v1774
        %v1776 = vrot.slane %v536, %v1775
        %v1777 = vlaneseq
        %v1778 = vshrl.u32 %v1777, 7
        %v1779 = vsub.s32 %v1529, %v1778
        %v1780 = vrot.slane %v537, %v1779
        %v1781 = vsel %vm1534, %v1780, %v1776
        %v1782 = vlaneseq
        %v1783 = vshrl.u32 %v1782, 7
        %v1784 = vsub.s32 %v1536, %v1783
        %v1785 = vrot.slane %v538, %v1784
        %v1786 = vsel %vm1541, %v1785, %v1781
        %v1787 = vlaneseq
        %v1788 = vshrl.u32 %v1787, 7
        %v1789 = vsub.s32 %v1543, %v1788
        %v1790 = vrot.slane %v539, %v1789
        %v1791 = vsel %vm1548, %v1790, %v1786
        %v1792 = vlaneseq
        %v1793 = vshrl.u32 %v1792, 7
        %v1794 = vsub.s32 %v1550, %v1793
        %v1795 = vrot.slane %v540, %v1794
        %v1796 = vsel %vm1555, %v1795, %v1791
        %v1797 = vlaneseq
        %v1798 = vshrl.u32 %v1797, 7
        %v1799 = vsub.s32 %v1557, %v1798
        %v1800 = vrot.slane %v541, %v1799
        %v1801 = vsel %vm1562, %v1800, %v1796
        %v1802 = vlaneseq
        %v1803 = vshrl.u32 %v1802, 7
        %v1804 = vsub.s32 %v1564, %v1803
        %v1805 = vrot.slane %v542, %v1804
        %v1806 = vsel %vm1569, %v1805, %v1801
        %v1807 = vlaneseq
        %v1808 = vshrl.u32 %v1807, 7
        %v1809 = vsub.s32 %v1571, %v1808
        %v1810 = vrot.slane %v543, %v1809
        %v1811 = vsel %vm1576, %v1810, %v1806
        %v1812 = vlaneseq
        %v1813 = vshrl.u32 %v1812, 7
        %v1814 = vsub.s32 %v1524, %v1813
        %v1815 = vrot.slane %v544, %v1814
        %v1816 = vlaneseq
        %v1817 = vshrl.u32 %v1816, 7
        %v1818 = vsub.s32 %v1529, %v1817
        %v1819 = vrot.slane %v545, %v1818
        %v1820 = vsel %vm1534, %v1819, %v1815
        %v1821 = vlaneseq
        %v1822 = vshrl.u32 %v1821, 7
        %v1823 = vsub.s32 %v1536, %v1822
        %v1824 = vrot.slane %v546, %v1823
        %v1825 = vsel %vm1541, %v1824, %v1820
        %v1826 = vlaneseq
        %v1827 = vshrl.u32 %v1826, 7
        %v1828 = vsub.s32 %v1543, %v1827
        %v1829 = vrot.slane %v547, %v1828
        %v1830 = vsel %vm1548, %v1829, %v1825
        %v1831 = vlaneseq
        %v1832 = vshrl.u32 %v1831, 7
        %v1833 = vsub.s32 %v1550, %v1832
        %v1834 = vrot.slane %v548, %v1833
        %v1835 = vsel %vm1555, %v1834, %v1830
        %v1836 = vlaneseq
        %v1837 = vshrl.u32 %v1836, 7
        %v1838 = vsub.s32 %v1557, %v1837
        %v1839 = vrot.slane %v549, %v1838
        %v1840 = vsel %vm1562, %v1839, %v1835
        %v1841 = vlaneseq
        %v1842 = vshrl.u32 %v1841, 7
        %v1843 = vsub.s32 %v1564, %v1842
        %v1844 = vrot.slane %v550, %v1843
        %v1845 = vsel %vm1569, %v1844, %v1840
        %v1846 = vlaneseq
        %v1847 = vshrl.u32 %v1846, 7
        %v1848 = vsub.s32 %v1571, %v1847
        %v1849 = vrot.slane %v551, %v1848
        %v1850 = vsel %vm1576, %v1849, %v1845
        %vm1851 = vcmask 1041409
        %v1852 = vsel %vm1851, %v1616, %v1577
        %vm1853 = vcmask 1042434
        %v1854 = vsel %vm1853, %v1655, %v1852
        %vm1855 = vcmask 1043459
        %v1856 = vsel %vm1855, %v1694, %v1854
        %vm1857 = vcmask 1044484
        %v1858 = vsel %vm1857, %v1733, %v1856
        %vm1859 = vcmask 1045509
        %v1860 = vsel %vm1859, %v1772, %v1858
        %vm1861 = vcmask 1046534
        %v1862 = vsel %vm1861, %v1811, %v1860
        %vm1863 = vcmask 1047559
        %v1864 = vsel %vm1863, %v1850, %v1862
        %vm1866 = vcmask 523264
        %v1867 = vsel %vm1866, %v1864, -inf
        %1868 = vmax.xlane.f32.xlu0 %v1867
        %v1869 = vpop.xlane.xlu0 %1868
        %v1871 = vlaneseq
        %v1872 = vshrl.u32 %v1871, 7
        %v1873 = vsub.s32 0, %v1872
        %v1874 = vrot.slane %v1869, %v1873
        %v1875 = vlaneseq
        %v1876 = vshrl.u32 %v1875, 7
        %v1877 = vsub.s32 1, %v1876
        %v1878 = vrot.slane %v1869, %v1877
        %v1879 = vlaneseq
        %v1880 = vshrl.u32 %v1879, 7
        %v1881 = vsub.s32 2, %v1880
        %v1882 = vrot.slane %v1869, %v1881
        %v1883 = vlaneseq
        %v1884 = vshrl.u32 %v1883, 7
        %v1885 = vsub.s32 3, %v1884
        %v1886 = vrot.slane %v1869, %v1885
        %v1887 = vlaneseq
        %v1888 = vshrl.u32 %v1887, 7
        %v1889 = vsub.s32 4, %v1888
        %v1890 = vrot.slane %v1869, %v1889
        %v1891 = vlaneseq
        %v1892 = vshrl.u32 %v1891, 7
        %v1893 = vsub.s32 5, %v1892
        %v1894 = vrot.slane %v1869, %v1893
        %v1895 = vlaneseq
        %v1896 = vshrl.u32 %v1895, 7
        %v1897 = vsub.s32 6, %v1896
        %v1898 = vrot.slane %v1869, %v1897
        %v1899 = vlaneseq
        %v1900 = vshrl.u32 %v1899, 7
        %v1901 = vsub.s32 7, %v1900
        %v1902 = vrot.slane %v1869, %v1901
        %v1911 = vsub.f32 %v488, %v1874
        %v1912 = vsub.f32 %v489, %v1874
        %v1913 = vsub.f32 %v490, %v1874
        %v1914 = vsub.f32 %v491, %v1874
        %v1915 = vsub.f32 %v492, %v1874
        %v1916 = vsub.f32 %v493, %v1874
        %v1917 = vsub.f32 %v494, %v1874
        %v1918 = vsub.f32 %v495, %v1874
        %v1919 = vsub.f32 %v496, %v1878
        %v1920 = vsub.f32 %v497, %v1878
        %v1921 = vsub.f32 %v498, %v1878
        %v1922 = vsub.f32 %v499, %v1878
        %v1923 = vsub.f32 %v500, %v1878
        %v1924 = vsub.f32 %v501, %v1878
        %v1925 = vsub.f32 %v502, %v1878
        %v1926 = vsub.f32 %v503, %v1878
        %v1927 = vsub.f32 %v504, %v1882
        %v1928 = vsub.f32 %v505, %v1882
        %v1929 = vsub.f32 %v506, %v1882
        %v1930 = vsub.f32 %v507, %v1882
        %v1931 = vsub.f32 %v508, %v1882
        %v1932 = vsub.f32 %v509, %v1882
        %v1933 = vsub.f32 %v510, %v1882
        %v1934 = vsub.f32 %v511, %v1882
        %v1935 = vsub.f32 %v512, %v1886
        %v1936 = vsub.f32 %v513, %v1886
        %v1937 = vsub.f32 %v514, %v1886
        %v1938 = vsub.f32 %v515, %v1886
        %v1939 = vsub.f32 %v516, %v1886
        %v1940 = vsub.f32 %v517, %v1886
        %v1941 = vsub.f32 %v518, %v1886
        %v1942 = vsub.f32 %v519, %v1886
        %v1943 = vsub.f32 %v520, %v1890
        %v1944 = vsub.f32 %v521, %v1890
        %v1945 = vsub.f32 %v522, %v1890
        %v1946 = vsub.f32 %v523, %v1890
        %v1947 = vsub.f32 %v524, %v1890
        %v1948 = vsub.f32 %v525, %v1890
        %v1949 = vsub.f32 %v526, %v1890
        %v1950 = vsub.f32 %v527, %v1890
        %v1951 = vsub.f32 %v528, %v1894
        %v1952 = vsub.f32 %v529, %v1894
        %v1953 = vsub.f32 %v530, %v1894
        %v1954 = vsub.f32 %v531, %v1894
        %v1955 = vsub.f32 %v532, %v1894
        %v1956 = vsub.f32 %v533, %v1894
        %v1957 = vsub.f32 %v534, %v1894
        %v1958 = vsub.f32 %v535, %v1894
        %v1959 = vsub.f32 %v536, %v1898
        %v1960 = vsub.f32 %v537, %v1898
        %v1961 = vsub.f32 %v538, %v1898
        %v1962 = vsub.f32 %v539, %v1898
        %v1963 = vsub.f32 %v540, %v1898
        %v1964 = vsub.f32 %v541, %v1898
        %v1965 = vsub.f32 %v542, %v1898
        %v1966 = vsub.f32 %v543, %v1898
        %v1967 = vsub.f32 %v544, %v1902
        %v1968 = vsub.f32 %v545, %v1902
        %v1969 = vsub.f32 %v546, %v1902
        %v1970 = vsub.f32 %v547, %v1902
        %v1971 = vsub.f32 %v548, %v1902
        %v1972 = vsub.f32 %v549, %v1902
        %v1973 = vsub.f32 %v550, %v1902
        %v1974 = vsub.f32 %v551, %v1902
        %v1975 = vmul.f32 %v1911, 1.442695
        %v1976 = vpow.pop %v1975
        %v1977 = vmul.f32 %v1912, 1.442695
        %v1978 = vpow.pop %v1977
        %v1979 = vmul.f32 %v1913, 1.442695
        %v1980 = vpow.pop %v1979
        %v1981 = vmul.f32 %v1914, 1.442695
        %v1982 = vpow.pop %v1981
        %v1983 = vmul.f32 %v1915, 1.442695
        %v1984 = vpow.pop %v1983
        %v1985 = vmul.f32 %v1916, 1.442695
        %v1986 = vpow.pop %v1985
        %v1987 = vmul.f32 %v1917, 1.442695
        %v1988 = vpow.pop %v1987
        %v1989 = vmul.f32 %v1918, 1.442695
        %v1990 = vpow.pop %v1989
        %v1991 = vmul.f32 %v1919, 1.442695
        %v1992 = vpow.pop %v1991
        %v1993 = vmul.f32 %v1920, 1.442695
        %v1994 = vpow.pop %v1993
        %v1995 = vmul.f32 %v1921, 1.442695
        %v1996 = vpow.pop %v1995
        %v1997 = vmul.f32 %v1922, 1.442695
        %v1998 = vpow.pop %v1997
        %v1999 = vmul.f32 %v1923, 1.442695
        %v2000 = vpow.pop %v1999
        %v2001 = vmul.f32 %v1924, 1.442695
        %v2002 = vpow.pop %v2001
        %v2003 = vmul.f32 %v1925, 1.442695
        %v2004 = vpow.pop %v2003
        %v2005 = vmul.f32 %v1926, 1.442695
        %v2006 = vpow.pop %v2005
        %v2007 = vmul.f32 %v1927, 1.442695
        %v2008 = vpow.pop %v2007
        %v2009 = vmul.f32 %v1928, 1.442695
        %v2010 = vpow.pop %v2009
        %v2011 = vmul.f32 %v1929, 1.442695
        %v2012 = vpow.pop %v2011
        %v2013 = vmul.f32 %v1930, 1.442695
        %v2014 = vpow.pop %v2013
        %v2015 = vmul.f32 %v1931, 1.442695
        %v2016 = vpow.pop %v2015
        %v2017 = vmul.f32 %v1932, 1.442695
        %v2018 = vpow.pop %v2017
        %v2019 = vmul.f32 %v1933, 1.442695
        %v2020 = vpow.pop %v2019
        %v2021 = vmul.f32 %v1934, 1.442695
        %v2022 = vpow.pop %v2021
        %v2023 = vmul.f32 %v1935, 1.442695
        %v2024 = vpow.pop %v2023
        %v2025 = vmul.f32 %v1936, 1.442695
        %v2026 = vpow.pop %v2025
        %v2027 = vmul.f32 %v1937, 1.442695
        %v2028 = vpow.pop %v2027
        %v2029 = vmul.f32 %v1938, 1.442695
        %v2030 = vpow.pop %v2029
        %v2031 = vmul.f32 %v1939, 1.442695
        %v2032 = vpow.pop %v2031
        %v2033 = vmul.f32 %v1940, 1.442695
        %v2034 = vpow.pop %v2033
        %v2035 = vmul.f32 %v1941, 1.442695
        %v2036 = vpow.pop %v2035
        %v2037 = vmul.f32 %v1942, 1.442695
        %v2038 = vpow.pop %v2037
        %v2039 = vmul.f32 %v1943, 1.442695
        %v2040 = vpow.pop %v2039
        %v2041 = vmul.f32 %v1944, 1.442695
        %v2042 = vpow.pop %v2041
        %v2043 = vmul.f32 %v1945, 1.442695
        %v2044 = vpow.pop %v2043
        %v2045 = vmul.f32 %v1946, 1.442695
        %v2046 = vpow.pop %v2045
        %v2047 = vmul.f32 %v1947, 1.442695
        %v2048 = vpow.pop %v2047
        %v2049 = vmul.f32 %v1948, 1.442695
        %v2050 = vpow.pop %v2049
        %v2051 = vmul.f32 %v1949, 1.442695
        %v2052 = vpow.pop %v2051
        %v2053 = vmul.f32 %v1950, 1.442695
        %v2054 = vpow.pop %v2053
        %v2055 = vmul.f32 %v1951, 1.442695
        %v2056 = vpow.pop %v2055
        %v2057 = vmul.f32 %v1952, 1.442695
        %v2058 = vpow.pop %v2057
        %v2059 = vmul.f32 %v1953, 1.442695
        %v2060 = vpow.pop %v2059
        %v2061 = vmul.f32 %v1954, 1.442695
        %v2062 = vpow.pop %v2061
        %v2063 = vmul.f32 %v1955, 1.442695
        %v2064 = vpow.pop %v2063
        %v2065 = vmul.f32 %v1956, 1.442695
        %v2066 = vpow.pop %v2065
        %v2067 = vmul.f32 %v1957, 1.442695
        %v2068 = vpow.pop %v2067
        %v2069 = vmul.f32 %v1958, 1.442695
        %v2070 = vpow.pop %v2069
        %v2071 = vmul.f32 %v1959, 1.442695
        %v2072 = vpow.pop %v2071
        %v2073 = vmul.f32 %v1960, 1.442695
        %v2074 = vpow.pop %v2073
        %v2075 = vmul.f32 %v1961, 1.442695
        %v2076 = vpow.pop %v2075
        %v2077 = vmul.f32 %v1962, 1.442695
        %v2078 = vpow.pop %v2077
        %v2079 = vmul.f32 %v1963, 1.442695
        %v2080 = vpow.pop %v2079
        %v2081 = vmul.f32 %v1964, 1.442695
        %v2082 = vpow.pop %v2081
        %v2083 = vmul.f32 %v1965, 1.442695
        %v2084 = vpow.pop %v2083
        %v2085 = vmul.f32 %v1966, 1.442695
        %v2086 = vpow.pop %v2085
        %v2087 = vmul.f32 %v1967, 1.442695
        %v2088 = vpow.pop %v2087
        %v2089 = vmul.f32 %v1968, 1.442695
        %v2090 = vpow.pop %v2089
        %v2091 = vmul.f32 %v1969, 1.442695
        %v2092 = vpow.pop %v2091
        %v2093 = vmul.f32 %v1970, 1.442695
        %v2094 = vpow.pop %v2093
        %v2095 = vmul.f32 %v1971, 1.442695
        %v2096 = vpow.pop %v2095
        %v2097 = vmul.f32 %v1972, 1.442695
        %v2098 = vpow.pop %v2097
        %v2099 = vmul.f32 %v1973, 1.442695
        %v2100 = vpow.pop %v2099
        %v2101 = vmul.f32 %v1974, 1.442695
        %v2102 = vpow.pop %v2101
        %2167 = vset.pattern.permute.xlu0 0
        %2168 = vperm.xlu0 %2167, %v1976
        %v2169 = vpop.permute.xlu0 %2168
        %2170 = vset.pattern.permute.xlu0 0
        %2171 = vperm.xlu0 %2170, %v1978
        %v2172 = vpop.permute.xlu0 %2171
        %2173 = vset.pattern.permute.xlu0 0
        %2174 = vperm.xlu0 %2173, %v1980
        %v2175 = vpop.permute.xlu0 %2174
        %2176 = vset.pattern.permute.xlu0 0
        %2177 = vperm.xlu0 %2176, %v1982
        %v2178 = vpop.permute.xlu0 %2177
        %2179 = vset.pattern.permute.xlu0 0
        %2180 = vperm.xlu0 %2179, %v1984
        %v2181 = vpop.permute.xlu0 %2180
        %2182 = vset.pattern.permute.xlu0 0
        %2183 = vperm.xlu0 %2182, %v1986
        %v2184 = vpop.permute.xlu0 %2183
        %2185 = vset.pattern.permute.xlu0 0
        %2186 = vperm.xlu0 %2185, %v1988
        %v2187 = vpop.permute.xlu0 %2186
        %2188 = vset.pattern.permute.xlu0 0
        %2189 = vperm.xlu0 %2188, %v1990
        %v2190 = vpop.permute.xlu0 %2189
        %2191 = vset.pattern.permute.xlu0 0
        %2192 = vperm.xlu0 %2191, %v1992
        %v2193 = vpop.permute.xlu0 %2192
        %2194 = vset.pattern.permute.xlu0 0
        %2195 = vperm.xlu0 %2194, %v1994
        %v2196 = vpop.permute.xlu0 %2195
        %2197 = vset.pattern.permute.xlu0 0
        %2198 = vperm.xlu0 %2197, %v1996
        %v2199 = vpop.permute.xlu0 %2198
        %2200 = vset.pattern.permute.xlu0 0
        %2201 = vperm.xlu0 %2200, %v1998
        %v2202 = vpop.permute.xlu0 %2201
        %2203 = vset.pattern.permute.xlu0 0
        %2204 = vperm.xlu0 %2203, %v2000
        %v2205 = vpop.permute.xlu0 %2204
        %2206 = vset.pattern.permute.xlu0 0
        %2207 = vperm.xlu0 %2206, %v2002
        %v2208 = vpop.permute.xlu0 %2207
        %2209 = vset.pattern.permute.xlu0 0
        %2210 = vperm.xlu0 %2209, %v2004
        %v2211 = vpop.permute.xlu0 %2210
        %2212 = vset.pattern.permute.xlu0 0
        %2213 = vperm.xlu0 %2212, %v2006
        %v2214 = vpop.permute.xlu0 %2213
        %2215 = vset.pattern.permute.xlu0 0
        %2216 = vperm.xlu0 %2215, %v2008
        %v2217 = vpop.permute.xlu0 %2216
        %2218 = vset.pattern.permute.xlu0 0
        %2219 = vperm.xlu0 %2218, %v2010
        %v2220 = vpop.permute.xlu0 %2219
        %2221 = vset.pattern.permute.xlu0 0
        %2222 = vperm.xlu0 %2221, %v2012
        %v2223 = vpop.permute.xlu0 %2222
        %2224 = vset.pattern.permute.xlu0 0
        %2225 = vperm.xlu0 %2224, %v2014
        %v2226 = vpop.permute.xlu0 %2225
        %2227 = vset.pattern.permute.xlu0 0
        %2228 = vperm.xlu0 %2227, %v2016
        %v2229 = vpop.permute.xlu0 %2228
        %2230 = vset.pattern.permute.xlu0 0
        %2231 = vperm.xlu0 %2230, %v2018
        %v2232 = vpop.permute.xlu0 %2231
        %2233 = vset.pattern.permute.xlu0 0
        %2234 = vperm.xlu0 %2233, %v2020
        %v2235 = vpop.permute.xlu0 %2234
        %2236 = vset.pattern.permute.xlu0 0
        %2237 = vperm.xlu0 %2236, %v2022
        %v2238 = vpop.permute.xlu0 %2237
        %2239 = vset.pattern.permute.xlu0 0
        %2240 = vperm.xlu0 %2239, %v2024
        %v2241 = vpop.permute.xlu0 %2240
        %2242 = vset.pattern.permute.xlu0 0
        %2243 = vperm.xlu0 %2242, %v2026
        %v2244 = vpop.permute.xlu0 %2243
        %2245 = vset.pattern.permute.xlu0 0
        %2246 = vperm.xlu0 %2245, %v2028
        %v2247 = vpop.permute.xlu0 %2246
        %2248 = vset.pattern.permute.xlu0 0
        %2249 = vperm.xlu0 %2248, %v2030
        %v2250 = vpop.permute.xlu0 %2249
        %2251 = vset.pattern.permute.xlu0 0
        %2252 = vperm.xlu0 %2251, %v2032
        %v2253 = vpop.permute.xlu0 %2252
        %2254 = vset.pattern.permute.xlu0 0
        %2255 = vperm.xlu0 %2254, %v2034
        %v2256 = vpop.permute.xlu0 %2255
        %2257 = vset.pattern.permute.xlu0 0
        %2258 = vperm.xlu0 %2257, %v2036
        %v2259 = vpop.permute.xlu0 %2258
        %2260 = vset.pattern.permute.xlu0 0
        %2261 = vperm.xlu0 %2260, %v2038
        %v2262 = vpop.permute.xlu0 %2261
        %2263 = vset.pattern.permute.xlu0 0
        %2264 = vperm.xlu0 %2263, %v2040
        %v2265 = vpop.permute.xlu0 %2264
        %2266 = vset.pattern.permute.xlu0 0
        %2267 = vperm.xlu0 %2266, %v2042
        %v2268 = vpop.permute.xlu0 %2267
        %2269 = vset.pattern.permute.xlu0 0
        %2270 = vperm.xlu0 %2269, %v2044
        %v2271 = vpop.permute.xlu0 %2270
        %2272 = vset.pattern.permute.xlu0 0
        %2273 = vperm.xlu0 %2272, %v2046
        %v2274 = vpop.permute.xlu0 %2273
        %2275 = vset.pattern.permute.xlu0 0
        %2276 = vperm.xlu0 %2275, %v2048
        %v2277 = vpop.permute.xlu0 %2276
        %2278 = vset.pattern.permute.xlu0 0
        %2279 = vperm.xlu0 %2278, %v2050
        %v2280 = vpop.permute.xlu0 %2279
        %2281 = vset.pattern.permute.xlu0 0
        %2282 = vperm.xlu0 %2281, %v2052
        %v2283 = vpop.permute.xlu0 %2282
        %2284 = vset.pattern.permute.xlu0 0
        %2285 = vperm.xlu0 %2284, %v2054
        %v2286 = vpop.permute.xlu0 %2285
        %2287 = vset.pattern.permute.xlu0 0
        %2288 = vperm.xlu0 %2287, %v2056
        %v2289 = vpop.permute.xlu0 %2288
        %2290 = vset.pattern.permute.xlu0 0
        %2291 = vperm.xlu0 %2290, %v2058
        %v2292 = vpop.permute.xlu0 %2291
        %2293 = vset.pattern.permute.xlu0 0
        %2294 = vperm.xlu0 %2293, %v2060
        %v2295 = vpop.permute.xlu0 %2294
        %2296 = vset.pattern.permute.xlu0 0
        %2297 = vperm.xlu0 %2296, %v2062
        %v2298 = vpop.permute.xlu0 %2297
        %2299 = vset.pattern.permute.xlu0 0
        %2300 = vperm.xlu0 %2299, %v2064
        %v2301 = vpop.permute.xlu0 %2300
        %2302 = vset.pattern.permute.xlu0 0
        %2303 = vperm.xlu0 %2302, %v2066
        %v2304 = vpop.permute.xlu0 %2303
        %2305 = vset.pattern.permute.xlu0 0
        %2306 = vperm.xlu0 %2305, %v2068
        %v2307 = vpop.permute.xlu0 %2306
        %2308 = vset.pattern.permute.xlu0 0
        %2309 = vperm.xlu0 %2308, %v2070
        %v2310 = vpop.permute.xlu0 %2309
        %2311 = vset.pattern.permute.xlu0 0
        %2312 = vperm.xlu0 %2311, %v2072
        %v2313 = vpop.permute.xlu0 %2312
        %2314 = vset.pattern.permute.xlu0 0
        %2315 = vperm.xlu0 %2314, %v2074
        %v2316 = vpop.permute.xlu0 %2315
        %2317 = vset.pattern.permute.xlu0 0
        %2318 = vperm.xlu0 %2317, %v2076
        %v2319 = vpop.permute.xlu0 %2318
        %2320 = vset.pattern.permute.xlu0 0
        %2321 = vperm.xlu0 %2320, %v2078
        %v2322 = vpop.permute.xlu0 %2321
        %2323 = vset.pattern.permute.xlu0 0
        %2324 = vperm.xlu0 %2323, %v2080
        %v2325 = vpop.permute.xlu0 %2324
        %2326 = vset.pattern.permute.xlu0 0
        %2327 = vperm.xlu0 %2326, %v2082
        %v2328 = vpop.permute.xlu0 %2327
        %2329 = vset.pattern.permute.xlu0 0
        %2330 = vperm.xlu0 %2329, %v2084
        %v2331 = vpop.permute.xlu0 %2330
        %2332 = vset.pattern.permute.xlu0 0
        %2333 = vperm.xlu0 %2332, %v2086
        %v2334 = vpop.permute.xlu0 %2333
        %2335 = vset.pattern.permute.xlu0 0
        %2336 = vperm.xlu0 %2335, %v2088
        %v2337 = vpop.permute.xlu0 %2336
        %2338 = vset.pattern.permute.xlu0 0
        %2339 = vperm.xlu0 %2338, %v2090
        %v2340 = vpop.permute.xlu0 %2339
        %2341 = vset.pattern.permute.xlu0 0
        %2342 = vperm.xlu0 %2341, %v2092
        %v2343 = vpop.permute.xlu0 %2342
        %2344 = vset.pattern.permute.xlu0 0
        %2345 = vperm.xlu0 %2344, %v2094
        %v2346 = vpop.permute.xlu0 %2345
        %2347 = vset.pattern.permute.xlu0 0
        %2348 = vperm.xlu0 %2347, %v2096
        %v2349 = vpop.permute.xlu0 %2348
        %2350 = vset.pattern.permute.xlu0 0
        %2351 = vperm.xlu0 %2350, %v2098
        %v2352 = vpop.permute.xlu0 %2351
        %2353 = vset.pattern.permute.xlu0 0
        %2354 = vperm.xlu0 %2353, %v2100
        %v2355 = vpop.permute.xlu0 %2354
        %2356 = vset.pattern.permute.xlu0 0
        %2357 = vperm.xlu0 %2356, %v2102
        %v2358 = vpop.permute.xlu0 %2357
        %v2359 = vlaneseq
        %v2360 = vshrl.u32 %v2359, 7
        %v2361 = vsub.s32 %v1524, %v2360
        %v2362 = vrot.slane %v2169, %v2361
        %v2363 = vlaneseq
        %v2364 = vshrl.u32 %v2363, 7
        %v2365 = vsub.s32 %v1529, %v2364
        %v2366 = vrot.slane %v2172, %v2365
        %v2367 = vsel %vm1534, %v2366, %v2362
        %v2368 = vlaneseq
        %v2369 = vshrl.u32 %v2368, 7
        %v2370 = vsub.s32 %v1536, %v2369
        %v2371 = vrot.slane %v2175, %v2370
        %v2372 = vsel %vm1541, %v2371, %v2367
        %v2373 = vlaneseq
        %v2374 = vshrl.u32 %v2373, 7
        %v2375 = vsub.s32 %v1543, %v2374
        %v2376 = vrot.slane %v2178, %v2375
        %v2377 = vsel %vm1548, %v2376, %v2372
        %v2378 = vlaneseq
        %v2379 = vshrl.u32 %v2378, 7
        %v2380 = vsub.s32 %v1550, %v2379
        %v2381 = vrot.slane %v2181, %v2380
        %v2382 = vsel %vm1555, %v2381, %v2377
        %v2383 = vlaneseq
        %v2384 = vshrl.u32 %v2383, 7
        %v2385 = vsub.s32 %v1557, %v2384
        %v2386 = vrot.slane %v2184, %v2385
        %v2387 = vsel %vm1562, %v2386, %v2382
        %v2388 = vlaneseq
        %v2389 = vshrl.u32 %v2388, 7
        %v2390 = vsub.s32 %v1564, %v2389
        %v2391 = vrot.slane %v2187, %v2390
        %v2392 = vsel %vm1569, %v2391, %v2387
        %v2393 = vlaneseq
        %v2394 = vshrl.u32 %v2393, 7
        %v2395 = vsub.s32 %v1571, %v2394
        %v2396 = vrot.slane %v2190, %v2395
        %v2397 = vsel %vm1576, %v2396, %v2392
        %v2398 = vlaneseq
        %v2399 = vshrl.u32 %v2398, 7
        %v2400 = vsub.s32 %v1524, %v2399
        %v2401 = vrot.slane %v2193, %v2400
        %v2402 = vlaneseq
        %v2403 = vshrl.u32 %v2402, 7
        %v2404 = vsub.s32 %v1529, %v2403
        %v2405 = vrot.slane %v2196, %v2404
        %v2406 = vsel %vm1534, %v2405, %v2401
        %v2407 = vlaneseq
        %v2408 = vshrl.u32 %v2407, 7
        %v2409 = vsub.s32 %v1536, %v2408
        %v2410 = vrot.slane %v2199, %v2409
        %v2411 = vsel %vm1541, %v2410, %v2406
        %v2412 = vlaneseq
        %v2413 = vshrl.u32 %v2412, 7
        %v2414 = vsub.s32 %v1543, %v2413
        %v2415 = vrot.slane %v2202, %v2414
        %v2416 = vsel %vm1548, %v2415, %v2411
        %v2417 = vlaneseq
        %v2418 = vshrl.u32 %v2417, 7
        %v2419 = vsub.s32 %v1550, %v2418
        %v2420 = vrot.slane %v2205, %v2419
        %v2421 = vsel %vm1555, %v2420, %v2416
        %v2422 = vlaneseq
        %v2423 = vshrl.u32 %v2422, 7
        %v2424 = vsub.s32 %v1557, %v2423
        %v2425 = vrot.slane %v2208, %v2424
        %v2426 = vsel %vm1562, %v2425, %v2421
        %v2427 = vlaneseq
        %v2428 = vshrl.u32 %v2427, 7
        %v2429 = vsub.s32 %v1564, %v2428
        %v2430 = vrot.slane %v2211, %v2429
        %v2431 = vsel %vm1569, %v2430, %v2426
        %v2432 = vlaneseq
        %v2433 = vshrl.u32 %v2432, 7
        %v2434 = vsub.s32 %v1571, %v2433
        %v2435 = vrot.slane %v2214, %v2434
        %v2436 = vsel %vm1576, %v2435, %v2431
        %v2437 = vlaneseq
        %v2438 = vshrl.u32 %v2437, 7
        %v2439 = vsub.s32 %v1524, %v2438
        %v2440 = vrot.slane %v2217, %v2439
        %v2441 = vlaneseq
        %v2442 = vshrl.u32 %v2441, 7
        %v2443 = vsub.s32 %v1529, %v2442
        %v2444 = vrot.slane %v2220, %v2443
        %v2445 = vsel %vm1534, %v2444, %v2440
        %v2446 = vlaneseq
        %v2447 = vshrl.u32 %v2446, 7
        %v2448 = vsub.s32 %v1536, %v2447
        %v2449 = vrot.slane %v2223, %v2448
        %v2450 = vsel %vm1541, %v2449, %v2445
        %v2451 = vlaneseq
        %v2452 = vshrl.u32 %v2451, 7
        %v2453 = vsub.s32 %v1543, %v2452
        %v2454 = vrot.slane %v2226, %v2453
        %v2455 = vsel %vm1548, %v2454, %v2450
        %v2456 = vlaneseq
        %v2457 = vshrl.u32 %v2456, 7
        %v2458 = vsub.s32 %v1550, %v2457
        %v2459 = vrot.slane %v2229, %v2458
        %v2460 = vsel %vm1555, %v2459, %v2455
        %v2461 = vlaneseq
        %v2462 = vshrl.u32 %v2461, 7
        %v2463 = vsub.s32 %v1557, %v2462
        %v2464 = vrot.slane %v2232, %v2463
        %v2465 = vsel %vm1562, %v2464, %v2460
        %v2466 = vlaneseq
        %v2467 = vshrl.u32 %v2466, 7
        %v2468 = vsub.s32 %v1564, %v2467
        %v2469 = vrot.slane %v2235, %v2468
        %v2470 = vsel %vm1569, %v2469, %v2465
        %v2471 = vlaneseq
        %v2472 = vshrl.u32 %v2471, 7
        %v2473 = vsub.s32 %v1571, %v2472
        %v2474 = vrot.slane %v2238, %v2473
        %v2475 = vsel %vm1576, %v2474, %v2470
        %v2476 = vlaneseq
        %v2477 = vshrl.u32 %v2476, 7
        %v2478 = vsub.s32 %v1524, %v2477
        %v2479 = vrot.slane %v2241, %v2478
        %v2480 = vlaneseq
        %v2481 = vshrl.u32 %v2480, 7
        %v2482 = vsub.s32 %v1529, %v2481
        %v2483 = vrot.slane %v2244, %v2482
        %v2484 = vsel %vm1534, %v2483, %v2479
        %v2485 = vlaneseq
        %v2486 = vshrl.u32 %v2485, 7
        %v2487 = vsub.s32 %v1536, %v2486
        %v2488 = vrot.slane %v2247, %v2487
        %v2489 = vsel %vm1541, %v2488, %v2484
        %v2490 = vlaneseq
        %v2491 = vshrl.u32 %v2490, 7
        %v2492 = vsub.s32 %v1543, %v2491
        %v2493 = vrot.slane %v2250, %v2492
        %v2494 = vsel %vm1548, %v2493, %v2489
        %v2495 = vlaneseq
        %v2496 = vshrl.u32 %v2495, 7
        %v2497 = vsub.s32 %v1550, %v2496
        %v2498 = vrot.slane %v2253, %v2497
        %v2499 = vsel %vm1555, %v2498, %v2494
        %v2500 = vlaneseq
        %v2501 = vshrl.u32 %v2500, 7
        %v2502 = vsub.s32 %v1557, %v2501
        %v2503 = vrot.slane %v2256, %v2502
        %v2504 = vsel %vm1562, %v2503, %v2499
        %v2505 = vlaneseq
        %v2506 = vshrl.u32 %v2505, 7
        %v2507 = vsub.s32 %v1564, %v2506
        %v2508 = vrot.slane %v2259, %v2507
        %v2509 = vsel %vm1569, %v2508, %v2504
        %v2510 = vlaneseq
        %v2511 = vshrl.u32 %v2510, 7
        %v2512 = vsub.s32 %v1571, %v2511
        %v2513 = vrot.slane %v2262, %v2512
        %v2514 = vsel %vm1576, %v2513, %v2509
        %v2515 = vlaneseq
        %v2516 = vshrl.u32 %v2515, 7
        %v2517 = vsub.s32 %v1524, %v2516
        %v2518 = vrot.slane %v2265, %v2517
        %v2519 = vlaneseq
        %v2520 = vshrl.u32 %v2519, 7
        %v2521 = vsub.s32 %v1529, %v2520
        %v2522 = vrot.slane %v2268, %v2521
        %v2523 = vsel %vm1534, %v2522, %v2518
        %v2524 = vlaneseq
        %v2525 = vshrl.u32 %v2524, 7
        %v2526 = vsub.s32 %v1536, %v2525
        %v2527 = vrot.slane %v2271, %v2526
        %v2528 = vsel %vm1541, %v2527, %v2523
        %v2529 = vlaneseq
        %v2530 = vshrl.u32 %v2529, 7
        %v2531 = vsub.s32 %v1543, %v2530
        %v2532 = vrot.slane %v2274, %v2531
        %v2533 = vsel %vm1548, %v2532, %v2528
        %v2534 = vlaneseq
        %v2535 = vshrl.u32 %v2534, 7
        %v2536 = vsub.s32 %v1550, %v2535
        %v2537 = vrot.slane %v2277, %v2536
        %v2538 = vsel %vm1555, %v2537, %v2533
        %v2539 = vlaneseq
        %v2540 = vshrl.u32 %v2539, 7
        %v2541 = vsub.s32 %v1557, %v2540
        %v2542 = vrot.slane %v2280, %v2541
        %v2543 = vsel %vm1562, %v2542, %v2538
        %v2544 = vlaneseq
        %v2545 = vshrl.u32 %v2544, 7
        %v2546 = vsub.s32 %v1564, %v2545
        %v2547 = vrot.slane %v2283, %v2546
        %v2548 = vsel %vm1569, %v2547, %v2543
        %v2549 = vlaneseq
        %v2550 = vshrl.u32 %v2549, 7
        %v2551 = vsub.s32 %v1571, %v2550
        %v2552 = vrot.slane %v2286, %v2551
        %v2553 = vsel %vm1576, %v2552, %v2548
        %v2554 = vlaneseq
        %v2555 = vshrl.u32 %v2554, 7
        %v2556 = vsub.s32 %v1524, %v2555
        %v2557 = vrot.slane %v2289, %v2556
        %v2558 = vlaneseq
        %v2559 = vshrl.u32 %v2558, 7
        %v2560 = vsub.s32 %v1529, %v2559
        %v2561 = vrot.slane %v2292, %v2560
        %v2562 = vsel %vm1534, %v2561, %v2557
        %v2563 = vlaneseq
        %v2564 = vshrl.u32 %v2563, 7
        %v2565 = vsub.s32 %v1536, %v2564
        %v2566 = vrot.slane %v2295, %v2565
        %v2567 = vsel %vm1541, %v2566, %v2562
        %v2568 = vlaneseq
        %v2569 = vshrl.u32 %v2568, 7
        %v2570 = vsub.s32 %v1543, %v2569
        %v2571 = vrot.slane %v2298, %v2570
        %v2572 = vsel %vm1548, %v2571, %v2567
        %v2573 = vlaneseq
        %v2574 = vshrl.u32 %v2573, 7
        %v2575 = vsub.s32 %v1550, %v2574
        %v2576 = vrot.slane %v2301, %v2575
        %v2577 = vsel %vm1555, %v2576, %v2572
        %v2578 = vlaneseq
        %v2579 = vshrl.u32 %v2578, 7
        %v2580 = vsub.s32 %v1557, %v2579
        %v2581 = vrot.slane %v2304, %v2580
        %v2582 = vsel %vm1562, %v2581, %v2577
        %v2583 = vlaneseq
        %v2584 = vshrl.u32 %v2583, 7
        %v2585 = vsub.s32 %v1564, %v2584
        %v2586 = vrot.slane %v2307, %v2585
        %v2587 = vsel %vm1569, %v2586, %v2582
        %v2588 = vlaneseq
        %v2589 = vshrl.u32 %v2588, 7
        %v2590 = vsub.s32 %v1571, %v2589
        %v2591 = vrot.slane %v2310, %v2590
        %v2592 = vsel %vm1576, %v2591, %v2587
        %v2593 = vlaneseq
        %v2594 = vshrl.u32 %v2593, 7
        %v2595 = vsub.s32 %v1524, %v2594
        %v2596 = vrot.slane %v2313, %v2595
        %v2597 = vlaneseq
        %v2598 = vshrl.u32 %v2597, 7
        %v2599 = vsub.s32 %v1529, %v2598
        %v2600 = vrot.slane %v2316, %v2599
        %v2601 = vsel %vm1534, %v2600, %v2596
        %v2602 = vlaneseq
        %v2603 = vshrl.u32 %v2602, 7
        %v2604 = vsub.s32 %v1536, %v2603
        %v2605 = vrot.slane %v2319, %v2604
        %v2606 = vsel %vm1541, %v2605, %v2601
        %v2607 = vlaneseq
        %v2608 = vshrl.u32 %v2607, 7
        %v2609 = vsub.s32 %v1543, %v2608
        %v2610 = vrot.slane %v2322, %v2609
        %v2611 = vsel %vm1548, %v2610, %v2606
        %v2612 = vlaneseq
        %v2613 = vshrl.u32 %v2612, 7
        %v2614 = vsub.s32 %v1550, %v2613
        %v2615 = vrot.slane %v2325, %v2614
        %v2616 = vsel %vm1555, %v2615, %v2611
        %v2617 = vlaneseq
        %v2618 = vshrl.u32 %v2617, 7
        %v2619 = vsub.s32 %v1557, %v2618
        %v2620 = vrot.slane %v2328, %v2619
        %v2621 = vsel %vm1562, %v2620, %v2616
        %v2622 = vlaneseq
        %v2623 = vshrl.u32 %v2622, 7
        %v2624 = vsub.s32 %v1564, %v2623
        %v2625 = vrot.slane %v2331, %v2624
        %v2626 = vsel %vm1569, %v2625, %v2621
        %v2627 = vlaneseq
        %v2628 = vshrl.u32 %v2627, 7
        %v2629 = vsub.s32 %v1571, %v2628
        %v2630 = vrot.slane %v2334, %v2629
        %v2631 = vsel %vm1576, %v2630, %v2626
        %v2632 = vlaneseq
        %v2633 = vshrl.u32 %v2632, 7
        %v2634 = vsub.s32 %v1524, %v2633
        %v2635 = vrot.slane %v2337, %v2634
        %v2636 = vlaneseq
        %v2637 = vshrl.u32 %v2636, 7
        %v2638 = vsub.s32 %v1529, %v2637
        %v2639 = vrot.slane %v2340, %v2638
        %v2640 = vsel %vm1534, %v2639, %v2635
        %v2641 = vlaneseq
        %v2642 = vshrl.u32 %v2641, 7
        %v2643 = vsub.s32 %v1536, %v2642
        %v2644 = vrot.slane %v2343, %v2643
        %v2645 = vsel %vm1541, %v2644, %v2640
        %v2646 = vlaneseq
        %v2647 = vshrl.u32 %v2646, 7
        %v2648 = vsub.s32 %v1543, %v2647
        %v2649 = vrot.slane %v2346, %v2648
        %v2650 = vsel %vm1548, %v2649, %v2645
        %v2651 = vlaneseq
        %v2652 = vshrl.u32 %v2651, 7
        %v2653 = vsub.s32 %v1550, %v2652
        %v2654 = vrot.slane %v2349, %v2653
        %v2655 = vsel %vm1555, %v2654, %v2650
        %v2656 = vlaneseq
        %v2657 = vshrl.u32 %v2656, 7
        %v2658 = vsub.s32 %v1557, %v2657
        %v2659 = vrot.slane %v2352, %v2658
        %v2660 = vsel %vm1562, %v2659, %v2655
        %v2661 = vlaneseq
        %v2662 = vshrl.u32 %v2661, 7
        %v2663 = vsub.s32 %v1564, %v2662
        %v2664 = vrot.slane %v2355, %v2663
        %v2665 = vsel %vm1569, %v2664, %v2660
        %v2666 = vlaneseq
        %v2667 = vshrl.u32 %v2666, 7
        %v2668 = vsub.s32 %v1571, %v2667
        %v2669 = vrot.slane %v2358, %v2668
        %v2670 = vsel %vm1576, %v2669, %v2665
        %v2671 = vsel %vm1851, %v2436, %v2397
        %v2672 = vsel %vm1853, %v2475, %v2671
        %v2673 = vsel %vm1855, %v2514, %v2672
        %v2674 = vsel %vm1857, %v2553, %v2673
        %v2675 = vsel %vm1859, %v2592, %v2674
        %v2676 = vsel %vm1861, %v2631, %v2675
        %v2677 = vsel %vm1863, %v2670, %v2676
        %v2679 = vsel %vm1866, %v2677, 0.0
        %2680 = vadd.xlane.f32.xlu0 %v2679
        %v2681 = vpop.xlane.xlu0 %2680
        %v2682 = vrcp.pop %v2681
        %v2684 = vlaneseq
        %v2685 = vshrl.u32 %v2684, 7
        %v2686 = vsub.s32 0, %v2685
        %v2687 = vrot.slane %v2682, %v2686
        %v2688 = vlaneseq
        %v2689 = vshrl.u32 %v2688, 7
        %v2690 = vsub.s32 1, %v2689
        %v2691 = vrot.slane %v2682, %v2690
        %v2692 = vlaneseq
        %v2693 = vshrl.u32 %v2692, 7
        %v2694 = vsub.s32 2, %v2693
        %v2695 = vrot.slane %v2682, %v2694
        %v2696 = vlaneseq
        %v2697 = vshrl.u32 %v2696, 7
        %v2698 = vsub.s32 3, %v2697
        %v2699 = vrot.slane %v2682, %v2698
        %v2700 = vlaneseq
        %v2701 = vshrl.u32 %v2700, 7
        %v2702 = vsub.s32 4, %v2701
        %v2703 = vrot.slane %v2682, %v2702
        %v2704 = vlaneseq
        %v2705 = vshrl.u32 %v2704, 7
        %v2706 = vsub.s32 5, %v2705
        %v2707 = vrot.slane %v2682, %v2706
        %v2708 = vlaneseq
        %v2709 = vshrl.u32 %v2708, 7
        %v2710 = vsub.s32 6, %v2709
        %v2711 = vrot.slane %v2682, %v2710
        %v2712 = vlaneseq
        %v2713 = vshrl.u32 %v2712, 7
        %v2714 = vsub.s32 7, %v2713
        %v2715 = vrot.slane %v2682, %v2714
        %v2724 = vmul.f32 %v1976, %v2687
        %v2725 = vmul.f32 %v1978, %v2687
        %v2726 = vmul.f32 %v1980, %v2687
        %v2727 = vmul.f32 %v1982, %v2687
        %v2728 = vmul.f32 %v1984, %v2687
        %v2729 = vmul.f32 %v1986, %v2687
        %v2730 = vmul.f32 %v1988, %v2687
        %v2731 = vmul.f32 %v1990, %v2687
        %v2732 = vmul.f32 %v1992, %v2691
        %v2733 = vmul.f32 %v1994, %v2691
        %v2734 = vmul.f32 %v1996, %v2691
        %v2735 = vmul.f32 %v1998, %v2691
        %v2736 = vmul.f32 %v2000, %v2691
        %v2737 = vmul.f32 %v2002, %v2691
        %v2738 = vmul.f32 %v2004, %v2691
        %v2739 = vmul.f32 %v2006, %v2691
        %v2740 = vmul.f32 %v2008, %v2695
        %v2741 = vmul.f32 %v2010, %v2695
        %v2742 = vmul.f32 %v2012, %v2695
        %v2743 = vmul.f32 %v2014, %v2695
        %v2744 = vmul.f32 %v2016, %v2695
        %v2745 = vmul.f32 %v2018, %v2695
        %v2746 = vmul.f32 %v2020, %v2695
        %v2747 = vmul.f32 %v2022, %v2695
        %v2748 = vmul.f32 %v2024, %v2699
        %v2749 = vmul.f32 %v2026, %v2699
        %v2750 = vmul.f32 %v2028, %v2699
        %v2751 = vmul.f32 %v2030, %v2699
        %v2752 = vmul.f32 %v2032, %v2699
        %v2753 = vmul.f32 %v2034, %v2699
        %v2754 = vmul.f32 %v2036, %v2699
        %v2755 = vmul.f32 %v2038, %v2699
        %v2756 = vmul.f32 %v2040, %v2703
        %v2757 = vmul.f32 %v2042, %v2703
        %v2758 = vmul.f32 %v2044, %v2703
        %v2759 = vmul.f32 %v2046, %v2703
        %v2760 = vmul.f32 %v2048, %v2703
        %v2761 = vmul.f32 %v2050, %v2703
        %v2762 = vmul.f32 %v2052, %v2703
        %v2763 = vmul.f32 %v2054, %v2703
        %v2764 = vmul.f32 %v2056, %v2707
        %v2765 = vmul.f32 %v2058, %v2707
        %v2766 = vmul.f32 %v2060, %v2707
        %v2767 = vmul.f32 %v2062, %v2707
        %v2768 = vmul.f32 %v2064, %v2707
        %v2769 = vmul.f32 %v2066, %v2707
        %v2770 = vmul.f32 %v2068, %v2707
        %v2771 = vmul.f32 %v2070, %v2707
        %v2772 = vmul.f32 %v2072, %v2711
        %v2773 = vmul.f32 %v2074, %v2711
        %v2774 = vmul.f32 %v2076, %v2711
        %v2775 = vmul.f32 %v2078, %v2711
        %v2776 = vmul.f32 %v2080, %v2711
        %v2777 = vmul.f32 %v2082, %v2711
        %v2778 = vmul.f32 %v2084, %v2711
        %v2779 = vmul.f32 %v2086, %v2711
        %v2780 = vmul.f32 %v2088, %v2715
        %v2781 = vmul.f32 %v2090, %v2715
        %v2782 = vmul.f32 %v2092, %v2715
        %v2783 = vmul.f32 %v2094, %v2715
        %v2784 = vmul.f32 %v2096, %v2715
        %v2785 = vmul.f32 %v2098, %v2715
        %v2786 = vmul.f32 %v2100, %v2715
        %v2787 = vmul.f32 %v2102, %v2715
        %2789 = vset.pattern.permute.xlu0 0
        %2790 = vperm.xlu0 %2789, %v2724
        %v2791 = vpop.permute.xlu0 %2790
        %2794 = vset.pattern.permute.xlu0 0
        %2795 = vperm.xlu0 %2794, %v2725
        %v2796 = vpop.permute.xlu0 %2795
        %2799 = vset.pattern.permute.xlu0 0
        %2800 = vperm.xlu0 %2799, %v2726
        %v2801 = vpop.permute.xlu0 %2800
        %2804 = vset.pattern.permute.xlu0 0
        %2805 = vperm.xlu0 %2804, %v2727
        %v2806 = vpop.permute.xlu0 %2805
        %2809 = vset.pattern.permute.xlu0 0
        %2810 = vperm.xlu0 %2809, %v2728
        %v2811 = vpop.permute.xlu0 %2810
        %2814 = vset.pattern.permute.xlu0 0
        %2815 = vperm.xlu0 %2814, %v2729
        %v2816 = vpop.permute.xlu0 %2815
        %2819 = vset.pattern.permute.xlu0 0
        %2820 = vperm.xlu0 %2819, %v2730
        %v2821 = vpop.permute.xlu0 %2820
        %2824 = vset.pattern.permute.xlu0 0
        %2825 = vperm.xlu0 %2824, %v2731
        %v2826 = vpop.permute.xlu0 %2825
        %2829 = vset.pattern.permute.xlu0 0
        %2830 = vperm.xlu0 %2829, %v2732
        %v2831 = vpop.permute.xlu0 %2830
        %2834 = vset.pattern.permute.xlu0 0
        %2835 = vperm.xlu0 %2834, %v2733
        %v2836 = vpop.permute.xlu0 %2835
        %2839 = vset.pattern.permute.xlu0 0
        %2840 = vperm.xlu0 %2839, %v2734
        %v2841 = vpop.permute.xlu0 %2840
        %2844 = vset.pattern.permute.xlu0 0
        %2845 = vperm.xlu0 %2844, %v2735
        %v2846 = vpop.permute.xlu0 %2845
        %2849 = vset.pattern.permute.xlu0 0
        %2850 = vperm.xlu0 %2849, %v2736
        %v2851 = vpop.permute.xlu0 %2850
        %2854 = vset.pattern.permute.xlu0 0
        %2855 = vperm.xlu0 %2854, %v2737
        %v2856 = vpop.permute.xlu0 %2855
        %2859 = vset.pattern.permute.xlu0 0
        %2860 = vperm.xlu0 %2859, %v2738
        %v2861 = vpop.permute.xlu0 %2860
        %2864 = vset.pattern.permute.xlu0 0
        %2865 = vperm.xlu0 %2864, %v2739
        %v2866 = vpop.permute.xlu0 %2865
        %2869 = vset.pattern.permute.xlu0 0
        %2870 = vperm.xlu0 %2869, %v2740
        %v2871 = vpop.permute.xlu0 %2870
        %2874 = vset.pattern.permute.xlu0 0
        %2875 = vperm.xlu0 %2874, %v2741
        %v2876 = vpop.permute.xlu0 %2875
        %2879 = vset.pattern.permute.xlu0 0
        %2880 = vperm.xlu0 %2879, %v2742
        %v2881 = vpop.permute.xlu0 %2880
        %2884 = vset.pattern.permute.xlu0 0
        %2885 = vperm.xlu0 %2884, %v2743
        %v2886 = vpop.permute.xlu0 %2885
        %2889 = vset.pattern.permute.xlu0 0
        %2890 = vperm.xlu0 %2889, %v2744
        %v2891 = vpop.permute.xlu0 %2890
        %2894 = vset.pattern.permute.xlu0 0
        %2895 = vperm.xlu0 %2894, %v2745
        %v2896 = vpop.permute.xlu0 %2895
        %2899 = vset.pattern.permute.xlu0 0
        %2900 = vperm.xlu0 %2899, %v2746
        %v2901 = vpop.permute.xlu0 %2900
        %2904 = vset.pattern.permute.xlu0 0
        %2905 = vperm.xlu0 %2904, %v2747
        %v2906 = vpop.permute.xlu0 %2905
        %2909 = vset.pattern.permute.xlu0 0
        %2910 = vperm.xlu0 %2909, %v2748
        %v2911 = vpop.permute.xlu0 %2910
        %2914 = vset.pattern.permute.xlu0 0
        %2915 = vperm.xlu0 %2914, %v2749
        %v2916 = vpop.permute.xlu0 %2915
        %2919 = vset.pattern.permute.xlu0 0
        %2920 = vperm.xlu0 %2919, %v2750
        %v2921 = vpop.permute.xlu0 %2920
        %2924 = vset.pattern.permute.xlu0 0
        %2925 = vperm.xlu0 %2924, %v2751
        %v2926 = vpop.permute.xlu0 %2925
        %2929 = vset.pattern.permute.xlu0 0
        %2930 = vperm.xlu0 %2929, %v2752
        %v2931 = vpop.permute.xlu0 %2930
        %2934 = vset.pattern.permute.xlu0 0
        %2935 = vperm.xlu0 %2934, %v2753
        %v2936 = vpop.permute.xlu0 %2935
        %2939 = vset.pattern.permute.xlu0 0
        %2940 = vperm.xlu0 %2939, %v2754
        %v2941 = vpop.permute.xlu0 %2940
        %2944 = vset.pattern.permute.xlu0 0
        %2945 = vperm.xlu0 %2944, %v2755
        %v2946 = vpop.permute.xlu0 %2945
        %2949 = vset.pattern.permute.xlu0 0
        %2950 = vperm.xlu0 %2949, %v2756
        %v2951 = vpop.permute.xlu0 %2950
        %2954 = vset.pattern.permute.xlu0 0
        %2955 = vperm.xlu0 %2954, %v2757
        %v2956 = vpop.permute.xlu0 %2955
        %2959 = vset.pattern.permute.xlu0 0
        %2960 = vperm.xlu0 %2959, %v2758
        %v2961 = vpop.permute.xlu0 %2960
        %2964 = vset.pattern.permute.xlu0 0
        %2965 = vperm.xlu0 %2964, %v2759
        %v2966 = vpop.permute.xlu0 %2965
        %2969 = vset.pattern.permute.xlu0 0
        %2970 = vperm.xlu0 %2969, %v2760
        %v2971 = vpop.permute.xlu0 %2970
        %2974 = vset.pattern.permute.xlu0 0
        %2975 = vperm.xlu0 %2974, %v2761
        %v2976 = vpop.permute.xlu0 %2975
        %2979 = vset.pattern.permute.xlu0 0
        %2980 = vperm.xlu0 %2979, %v2762
        %v2981 = vpop.permute.xlu0 %2980
        %2984 = vset.pattern.permute.xlu0 0
        %2985 = vperm.xlu0 %2984, %v2763
        %v2986 = vpop.permute.xlu0 %2985
        %2989 = vset.pattern.permute.xlu0 0
        %2990 = vperm.xlu0 %2989, %v2764
        %v2991 = vpop.permute.xlu0 %2990
        %2994 = vset.pattern.permute.xlu0 0
        %2995 = vperm.xlu0 %2994, %v2765
        %v2996 = vpop.permute.xlu0 %2995
        %2999 = vset.pattern.permute.xlu0 0
        %3000 = vperm.xlu0 %2999, %v2766
        %v3001 = vpop.permute.xlu0 %3000
        %3004 = vset.pattern.permute.xlu0 0
        %3005 = vperm.xlu0 %3004, %v2767
        %v3006 = vpop.permute.xlu0 %3005
        %3009 = vset.pattern.permute.xlu0 0
        %3010 = vperm.xlu0 %3009, %v2768
        %v3011 = vpop.permute.xlu0 %3010
        %3014 = vset.pattern.permute.xlu0 0
        %3015 = vperm.xlu0 %3014, %v2769
        %v3016 = vpop.permute.xlu0 %3015
        %3019 = vset.pattern.permute.xlu0 0
        %3020 = vperm.xlu0 %3019, %v2770
        %v3021 = vpop.permute.xlu0 %3020
        %3024 = vset.pattern.permute.xlu0 0
        %3025 = vperm.xlu0 %3024, %v2771
        %v3026 = vpop.permute.xlu0 %3025
        %3029 = vset.pattern.permute.xlu0 0
        %3030 = vperm.xlu0 %3029, %v2772
        %v3031 = vpop.permute.xlu0 %3030
        %3034 = vset.pattern.permute.xlu0 0
        %3035 = vperm.xlu0 %3034, %v2773
        %v3036 = vpop.permute.xlu0 %3035
        %3039 = vset.pattern.permute.xlu0 0
        %3040 = vperm.xlu0 %3039, %v2774
        %v3041 = vpop.permute.xlu0 %3040
        %3044 = vset.pattern.permute.xlu0 0
        %3045 = vperm.xlu0 %3044, %v2775
        %v3046 = vpop.permute.xlu0 %3045
        %3049 = vset.pattern.permute.xlu0 0
        %3050 = vperm.xlu0 %3049, %v2776
        %v3051 = vpop.permute.xlu0 %3050
        %3054 = vset.pattern.permute.xlu0 0
        %3055 = vperm.xlu0 %3054, %v2777
        %v3056 = vpop.permute.xlu0 %3055
        %3059 = vset.pattern.permute.xlu0 0
        %3060 = vperm.xlu0 %3059, %v2778
        %v3061 = vpop.permute.xlu0 %3060
        %3064 = vset.pattern.permute.xlu0 0
        %3065 = vperm.xlu0 %3064, %v2779
        %v3066 = vpop.permute.xlu0 %3065
        %3069 = vset.pattern.permute.xlu0 0
        %3070 = vperm.xlu0 %3069, %v2780
        %v3071 = vpop.permute.xlu0 %3070
        %3074 = vset.pattern.permute.xlu0 0
        %3075 = vperm.xlu0 %3074, %v2781
        %v3076 = vpop.permute.xlu0 %3075
        %3079 = vset.pattern.permute.xlu0 0
        %3080 = vperm.xlu0 %3079, %v2782
        %v3081 = vpop.permute.xlu0 %3080
        %3084 = vset.pattern.permute.xlu0 0
        %3085 = vperm.xlu0 %3084, %v2783
        %v3086 = vpop.permute.xlu0 %3085
        %3089 = vset.pattern.permute.xlu0 0
        %3090 = vperm.xlu0 %3089, %v2784
        %v3091 = vpop.permute.xlu0 %3090
        %3094 = vset.pattern.permute.xlu0 0
        %3095 = vperm.xlu0 %3094, %v2785
        %v3096 = vpop.permute.xlu0 %3095
        %3099 = vset.pattern.permute.xlu0 0
        %3100 = vperm.xlu0 %3099, %v2786
        %v3101 = vpop.permute.xlu0 %3100
        %3104 = vset.pattern.permute.xlu0 0
        %3105 = vperm.xlu0 %3104, %v2787
        %v3106 = vpop.permute.xlu0 %3105
        %v3108 = vmul.f32 %v290, %v2791
        %v3109 = vmul.f32 %v291, %v2791
        %v3110 = vmul.f32 %v292, %v2796
        %v3111 = vmul.f32 %v293, %v2796
        %v3112 = vmul.f32 %v294, %v2801
        %v3113 = vmul.f32 %v295, %v2801
        %v3114 = vmul.f32 %v296, %v2806
        %v3115 = vmul.f32 %v297, %v2806
        %v3116 = vmul.f32 %v298, %v2811
        %v3117 = vmul.f32 %v299, %v2811
        %v3118 = vmul.f32 %v300, %v2816
        %v3119 = vmul.f32 %v301, %v2816
        %v3120 = vmul.f32 %v302, %v2821
        %v3121 = vmul.f32 %v303, %v2821
        %v3122 = vmul.f32 %v304, %v2826
        %v3123 = vmul.f32 %v305, %v2826
        %v3124 = vmul.f32 %v306, %v2831
        %v3125 = vmul.f32 %v307, %v2831
        %v3126 = vmul.f32 %v308, %v2836
        %v3127 = vmul.f32 %v309, %v2836
        %v3128 = vmul.f32 %v310, %v2841
        %v3129 = vmul.f32 %v311, %v2841
        %v3130 = vmul.f32 %v312, %v2846
        %v3131 = vmul.f32 %v313, %v2846
        %v3132 = vmul.f32 %v314, %v2851
        %v3133 = vmul.f32 %v315, %v2851
        %v3134 = vmul.f32 %v316, %v2856
        %v3135 = vmul.f32 %v317, %v2856
        %v3136 = vmul.f32 %v318, %v2861
        %v3137 = vmul.f32 %v319, %v2861
        %v3138 = vmul.f32 %v320, %v2866
        %v3139 = vmul.f32 %v321, %v2866
        %v3140 = vmul.f32 %v322, %v2871
        %v3141 = vmul.f32 %v323, %v2871
        %v3142 = vmul.f32 %v324, %v2876
        %v3143 = vmul.f32 %v325, %v2876
        %v3144 = vmul.f32 %v326, %v2881
        %v3145 = vmul.f32 %v327, %v2881
        %v3146 = vmul.f32 %v328, %v2886
        %v3147 = vmul.f32 %v329, %v2886
        %v3148 = vmul.f32 %v330, %v2891
        %v3149 = vmul.f32 %v331, %v2891
        %v3150 = vmul.f32 %v332, %v2896
        %v3151 = vmul.f32 %v333, %v2896
        %v3152 = vmul.f32 %v334, %v2901
        %v3153 = vmul.f32 %v335, %v2901
        %v3154 = vmul.f32 %v336, %v2906
        %v3155 = vmul.f32 %v337, %v2906
        %v3156 = vmul.f32 %v338, %v2911
        %v3157 = vmul.f32 %v339, %v2911
        %v3158 = vmul.f32 %v340, %v2916
        %v3159 = vmul.f32 %v341, %v2916
        %v3160 = vmul.f32 %v342, %v2921
        %v3161 = vmul.f32 %v343, %v2921
        %v3162 = vmul.f32 %v344, %v2926
        %v3163 = vmul.f32 %v345, %v2926
        %v3164 = vmul.f32 %v346, %v2931
        %v3165 = vmul.f32 %v347, %v2931
        %v3166 = vmul.f32 %v348, %v2936
        %v3167 = vmul.f32 %v349, %v2936
        %v3168 = vmul.f32 %v350, %v2941
        %v3169 = vmul.f32 %v351, %v2941
        %v3170 = vmul.f32 %v352, %v2946
        %v3171 = vmul.f32 %v353, %v2946
        %v3172 = vmul.f32 %v354, %v2951
        %v3173 = vmul.f32 %v355, %v2951
        %v3174 = vmul.f32 %v356, %v2956
        %v3175 = vmul.f32 %v357, %v2956
        %v3176 = vmul.f32 %v358, %v2961
        %v3177 = vmul.f32 %v359, %v2961
        %v3178 = vmul.f32 %v360, %v2966
        %v3179 = vmul.f32 %v361, %v2966
        %v3180 = vmul.f32 %v362, %v2971
        %v3181 = vmul.f32 %v363, %v2971
        %v3182 = vmul.f32 %v364, %v2976
        %v3183 = vmul.f32 %v365, %v2976
        %v3184 = vmul.f32 %v366, %v2981
        %v3185 = vmul.f32 %v367, %v2981
        %v3186 = vmul.f32 %v368, %v2986
        %v3187 = vmul.f32 %v369, %v2986
        %v3188 = vmul.f32 %v370, %v2991
        %v3189 = vmul.f32 %v371, %v2991
        %v3190 = vmul.f32 %v372, %v2996
        %v3191 = vmul.f32 %v373, %v2996
        %v3192 = vmul.f32 %v374, %v3001
        %v3193 = vmul.f32 %v375, %v3001
        %v3194 = vmul.f32 %v376, %v3006
        %v3195 = vmul.f32 %v377, %v3006
        %v3196 = vmul.f32 %v378, %v3011
        %v3197 = vmul.f32 %v379, %v3011
        %v3198 = vmul.f32 %v380, %v3016
        %v3199 = vmul.f32 %v381, %v3016
        %v3200 = vmul.f32 %v382, %v3021
        %v3201 = vmul.f32 %v383, %v3021
        %v3202 = vmul.f32 %v384, %v3026
        %v3203 = vmul.f32 %v385, %v3026
        %v3204 = vmul.f32 %v386, %v3031
        %v3205 = vmul.f32 %v387, %v3031
        %v3206 = vmul.f32 %v388, %v3036
        %v3207 = vmul.f32 %v389, %v3036
        %v3208 = vmul.f32 %v390, %v3041
        %v3209 = vmul.f32 %v391, %v3041
        %v3210 = vmul.f32 %v392, %v3046
        %v3211 = vmul.f32 %v393, %v3046
        %v3212 = vmul.f32 %v394, %v3051
        %v3213 = vmul.f32 %v395, %v3051
        %v3214 = vmul.f32 %v396, %v3056
        %v3215 = vmul.f32 %v397, %v3056
        %v3216 = vmul.f32 %v398, %v3061
        %v3217 = vmul.f32 %v399, %v3061
        %v3218 = vmul.f32 %v400, %v3066
        %v3219 = vmul.f32 %v401, %v3066
        %v3220 = vmul.f32 %v402, %v3071
        %v3221 = vmul.f32 %v403, %v3071
        %v3222 = vmul.f32 %v404, %v3076
        %v3223 = vmul.f32 %v405, %v3076
        %v3224 = vmul.f32 %v406, %v3081
        %v3225 = vmul.f32 %v407, %v3081
        %v3226 = vmul.f32 %v408, %v3086
        %v3227 = vmul.f32 %v409, %v3086
        %v3228 = vmul.f32 %v410, %v3091
        %v3229 = vmul.f32 %v411, %v3091
        %v3230 = vmul.f32 %v412, %v3096
        %v3231 = vmul.f32 %v413, %v3096
        %v3232 = vmul.f32 %v414, %v3101
        %v3233 = vmul.f32 %v415, %v3101
        %v3234 = vmul.f32 %v416, %v3106
        %v3235 = vmul.f32 %v417, %v3106
        %v3236 = vadd.f32 %v3108, %v3110
        %v3237 = vadd.f32 %v3236, %v3112
        %v3238 = vadd.f32 %v3237, %v3114
        %v3239 = vadd.f32 %v3238, %v3116
        %v3240 = vadd.f32 %v3239, %v3118
        %v3241 = vadd.f32 %v3240, %v3120
        %v3242 = vadd.f32 %v3241, %v3122
        %v3243 = vrot.slane %v3242, 4
        %v3244 = vadd.f32 %v3242, %v3243
        %v3245 = vrot.slane %v3244, 2
        %v3246 = vadd.f32 %v3244, %v3245
        %v3247 = vrot.slane %v3246, 1
        %v3248 = vadd.f32 %v3246, %v3247
        %v3249 = vadd.f32 %v3109, %v3111
        %v3250 = vadd.f32 %v3249, %v3113
        %v3251 = vadd.f32 %v3250, %v3115
        %v3252 = vadd.f32 %v3251, %v3117
        %v3253 = vadd.f32 %v3252, %v3119
        %v3254 = vadd.f32 %v3253, %v3121
        %v3255 = vadd.f32 %v3254, %v3123
        %v3256 = vrot.slane %v3255, 4
        %v3257 = vadd.f32 %v3255, %v3256
        %v3258 = vrot.slane %v3257, 2
        %v3259 = vadd.f32 %v3257, %v3258
        %v3260 = vrot.slane %v3259, 1
        %v3261 = vadd.f32 %v3259, %v3260
        %v3262 = vadd.f32 %v3124, %v3126
        %v3263 = vadd.f32 %v3262, %v3128
        %v3264 = vadd.f32 %v3263, %v3130
        %v3265 = vadd.f32 %v3264, %v3132
        %v3266 = vadd.f32 %v3265, %v3134
        %v3267 = vadd.f32 %v3266, %v3136
        %v3268 = vadd.f32 %v3267, %v3138
        %v3269 = vrot.slane %v3268, 4
        %v3270 = vadd.f32 %v3268, %v3269
        %v3271 = vrot.slane %v3270, 2
        %v3272 = vadd.f32 %v3270, %v3271
        %v3273 = vrot.slane %v3272, 1
        %v3274 = vadd.f32 %v3272, %v3273
        %v3275 = vadd.f32 %v3125, %v3127
        %v3276 = vadd.f32 %v3275, %v3129
        %v3277 = vadd.f32 %v3276, %v3131
        %v3278 = vadd.f32 %v3277, %v3133
        %v3279 = vadd.f32 %v3278, %v3135
        %v3280 = vadd.f32 %v3279, %v3137
        %v3281 = vadd.f32 %v3280, %v3139
        %v3282 = vrot.slane %v3281, 4
        %v3283 = vadd.f32 %v3281, %v3282
        %v3284 = vrot.slane %v3283, 2
        %v3285 = vadd.f32 %v3283, %v3284
        %v3286 = vrot.slane %v3285, 1
        %v3287 = vadd.f32 %v3285, %v3286
        %v3288 = vadd.f32 %v3140, %v3142
        %v3289 = vadd.f32 %v3288, %v3144
        %v3290 = vadd.f32 %v3289, %v3146
        %v3291 = vadd.f32 %v3290, %v3148
        %v3292 = vadd.f32 %v3291, %v3150
        %v3293 = vadd.f32 %v3292, %v3152
        %v3294 = vadd.f32 %v3293, %v3154
        %v3295 = vrot.slane %v3294, 4
        %v3296 = vadd.f32 %v3294, %v3295
        %v3297 = vrot.slane %v3296, 2
        %v3298 = vadd.f32 %v3296, %v3297
        %v3299 = vrot.slane %v3298, 1
        %v3300 = vadd.f32 %v3298, %v3299
        %v3301 = vadd.f32 %v3141, %v3143
        %v3302 = vadd.f32 %v3301, %v3145
        %v3303 = vadd.f32 %v3302, %v3147
        %v3304 = vadd.f32 %v3303, %v3149
        %v3305 = vadd.f32 %v3304, %v3151
        %v3306 = vadd.f32 %v3305, %v3153
        %v3307 = vadd.f32 %v3306, %v3155
        %v3308 = vrot.slane %v3307, 4
        %v3309 = vadd.f32 %v3307, %v3308
        %v3310 = vrot.slane %v3309, 2
        %v3311 = vadd.f32 %v3309, %v3310
        %v3312 = vrot.slane %v3311, 1
        %v3313 = vadd.f32 %v3311, %v3312
        %v3314 = vadd.f32 %v3156, %v3158
        %v3315 = vadd.f32 %v3314, %v3160
        %v3316 = vadd.f32 %v3315, %v3162
        %v3317 = vadd.f32 %v3316, %v3164
        %v3318 = vadd.f32 %v3317, %v3166
        %v3319 = vadd.f32 %v3318, %v3168
        %v3320 = vadd.f32 %v3319, %v3170
        %v3321 = vrot.slane %v3320, 4
        %v3322 = vadd.f32 %v3320, %v3321
        %v3323 = vrot.slane %v3322, 2
        %v3324 = vadd.f32 %v3322, %v3323
        %v3325 = vrot.slane %v3324, 1
        %v3326 = vadd.f32 %v3324, %v3325
        %v3327 = vadd.f32 %v3157, %v3159
        %v3328 = vadd.f32 %v3327, %v3161
        %v3329 = vadd.f32 %v3328, %v3163
        %v3330 = vadd.f32 %v3329, %v3165
        %v3331 = vadd.f32 %v3330, %v3167
        %v3332 = vadd.f32 %v3331, %v3169
        %v3333 = vadd.f32 %v3332, %v3171
        %v3334 = vrot.slane %v3333, 4
        %v3335 = vadd.f32 %v3333, %v3334
        %v3336 = vrot.slane %v3335, 2
        %v3337 = vadd.f32 %v3335, %v3336
        %v3338 = vrot.slane %v3337, 1
        %v3339 = vadd.f32 %v3337, %v3338
        %v3340 = vadd.f32 %v3172, %v3174
        %v3341 = vadd.f32 %v3340, %v3176
        %v3342 = vadd.f32 %v3341, %v3178
        %v3343 = vadd.f32 %v3342, %v3180
        %v3344 = vadd.f32 %v3343, %v3182
        %v3345 = vadd.f32 %v3344, %v3184
        %v3346 = vadd.f32 %v3345, %v3186
        %v3347 = vrot.slane %v3346, 4
        %v3348 = vadd.f32 %v3346, %v3347
        %v3349 = vrot.slane %v3348, 2
        %v3350 = vadd.f32 %v3348, %v3349
        %v3351 = vrot.slane %v3350, 1
        %v3352 = vadd.f32 %v3350, %v3351
        %v3353 = vadd.f32 %v3173, %v3175
        %v3354 = vadd.f32 %v3353, %v3177
        %v3355 = vadd.f32 %v3354, %v3179
        %v3356 = vadd.f32 %v3355, %v3181
        %v3357 = vadd.f32 %v3356, %v3183
        %v3358 = vadd.f32 %v3357, %v3185
        %v3359 = vadd.f32 %v3358, %v3187
        %v3360 = vrot.slane %v3359, 4
        %v3361 = vadd.f32 %v3359, %v3360
        %v3362 = vrot.slane %v3361, 2
        %v3363 = vadd.f32 %v3361, %v3362
        %v3364 = vrot.slane %v3363, 1
        %v3365 = vadd.f32 %v3363, %v3364
        %v3366 = vadd.f32 %v3188, %v3190
        %v3367 = vadd.f32 %v3366, %v3192
        %v3368 = vadd.f32 %v3367, %v3194
        %v3369 = vadd.f32 %v3368, %v3196
        %v3370 = vadd.f32 %v3369, %v3198
        %v3371 = vadd.f32 %v3370, %v3200
        %v3372 = vadd.f32 %v3371, %v3202
        %v3373 = vrot.slane %v3372, 4
        %v3374 = vadd.f32 %v3372, %v3373
        %v3375 = vrot.slane %v3374, 2
        %v3376 = vadd.f32 %v3374, %v3375
        %v3377 = vrot.slane %v3376, 1
        %v3378 = vadd.f32 %v3376, %v3377
        %v3379 = vadd.f32 %v3189, %v3191
        %v3380 = vadd.f32 %v3379, %v3193
        %v3381 = vadd.f32 %v3380, %v3195
        %v3382 = vadd.f32 %v3381, %v3197
        %v3383 = vadd.f32 %v3382, %v3199
        %v3384 = vadd.f32 %v3383, %v3201
        %v3385 = vadd.f32 %v3384, %v3203
        %v3386 = vrot.slane %v3385, 4
        %v3387 = vadd.f32 %v3385, %v3386
        %v3388 = vrot.slane %v3387, 2
        %v3389 = vadd.f32 %v3387, %v3388
        %v3390 = vrot.slane %v3389, 1
        %v3391 = vadd.f32 %v3389, %v3390
        %v3392 = vadd.f32 %v3204, %v3206
        %v3393 = vadd.f32 %v3392, %v3208
        %v3394 = vadd.f32 %v3393, %v3210
        %v3395 = vadd.f32 %v3394, %v3212
        %v3396 = vadd.f32 %v3395, %v3214
        %v3397 = vadd.f32 %v3396, %v3216
        %v3398 = vadd.f32 %v3397, %v3218
        %v3399 = vrot.slane %v3398, 4
        %v3400 = vadd.f32 %v3398, %v3399
        %v3401 = vrot.slane %v3400, 2
        %v3402 = vadd.f32 %v3400, %v3401
        %v3403 = vrot.slane %v3402, 1
        %v3404 = vadd.f32 %v3402, %v3403
        %v3405 = vadd.f32 %v3205, %v3207
        %v3406 = vadd.f32 %v3405, %v3209
        %v3407 = vadd.f32 %v3406, %v3211
        %v3408 = vadd.f32 %v3407, %v3213
        %v3409 = vadd.f32 %v3408, %v3215
        %v3410 = vadd.f32 %v3409, %v3217
        %v3411 = vadd.f32 %v3410, %v3219
        %v3412 = vrot.slane %v3411, 4
        %v3413 = vadd.f32 %v3411, %v3412
        %v3414 = vrot.slane %v3413, 2
        %v3415 = vadd.f32 %v3413, %v3414
        %v3416 = vrot.slane %v3415, 1
        %v3417 = vadd.f32 %v3415, %v3416
        %v3418 = vadd.f32 %v3220, %v3222
        %v3419 = vadd.f32 %v3418, %v3224
        %v3420 = vadd.f32 %v3419, %v3226
        %v3421 = vadd.f32 %v3420, %v3228
        %v3422 = vadd.f32 %v3421, %v3230
        %v3423 = vadd.f32 %v3422, %v3232
        %v3424 = vadd.f32 %v3423, %v3234
        %v3425 = vrot.slane %v3424, 4
        %v3426 = vadd.f32 %v3424, %v3425
        %v3427 = vrot.slane %v3426, 2
        %v3428 = vadd.f32 %v3426, %v3427
        %v3429 = vrot.slane %v3428, 1
        %v3430 = vadd.f32 %v3428, %v3429
        %v3431 = vadd.f32 %v3221, %v3223
        %v3432 = vadd.f32 %v3431, %v3225
        %v3433 = vadd.f32 %v3432, %v3227
        %v3434 = vadd.f32 %v3433, %v3229
        %v3435 = vadd.f32 %v3434, %v3231
        %v3436 = vadd.f32 %v3435, %v3233
        %v3437 = vadd.f32 %v3436, %v3235
        %v3438 = vrot.slane %v3437, 4
        %v3439 = vadd.f32 %v3437, %v3438
        %v3440 = vrot.slane %v3439, 2
        %v3441 = vadd.f32 %v3439, %v3440
        %v3442 = vrot.slane %v3441, 1
        %v3443 = vadd.f32 %v3441, %v3442
        %v3460 = vsel %vm1851, %v3274, %v3248
        %v3461 = vsel %vm1853, %v3300, %v3460
        %v3462 = vsel %vm1855, %v3326, %v3461
        %v3463 = vsel %vm1857, %v3352, %v3462
        %v3464 = vsel %vm1859, %v3378, %v3463
        %v3465 = vsel %vm1861, %v3404, %v3464
        %v3466 = vsel %vm1863, %v3430, %v3465
        %v3467 = vsel %vm1851, %v3287, %v3261
        %v3468 = vsel %vm1853, %v3313, %v3467
        %v3469 = vsel %vm1855, %v3339, %v3468
        %v3470 = vsel %vm1857, %v3365, %v3469
        %v3471 = vsel %vm1859, %v3391, %v3470
        %v3472 = vsel %vm1861, %v3417, %v3471
        %v3473 = vsel %vm1863, %v3443, %v3472
        %3476 = vst [vmem:[%s275] sm:$0xff] %v3466
        %3477 = vst [vmem:[%s275 + $0x8] sm:$0xff] %v3473
        %v3478 = vlaneseq
        %v3479 = vshrl.u32 %v3478, 7
        %v3480 = vsub.s32 %v1524, %v3479
        %v3481 = vrot.slane %v2791, %v3480
        %v3482 = vlaneseq
        %v3483 = vshrl.u32 %v3482, 7
        %v3484 = vsub.s32 %v1529, %v3483
        %v3485 = vrot.slane %v2796, %v3484
        %v3486 = vsel %vm1534, %v3485, %v3481
        %v3487 = vlaneseq
        %v3488 = vshrl.u32 %v3487, 7
        %v3489 = vsub.s32 %v1536, %v3488
        %v3490 = vrot.slane %v2801, %v3489
        %v3491 = vsel %vm1541, %v3490, %v3486
        %v3492 = vlaneseq
        %v3493 = vshrl.u32 %v3492, 7
        %v3494 = vsub.s32 %v1543, %v3493
        %v3495 = vrot.slane %v2806, %v3494
        %v3496 = vsel %vm1548, %v3495, %v3491
        %v3497 = vlaneseq
        %v3498 = vshrl.u32 %v3497, 7
        %v3499 = vsub.s32 %v1550, %v3498
        %v3500 = vrot.slane %v2811, %v3499
        %v3501 = vsel %vm1555, %v3500, %v3496
        %v3502 = vlaneseq
        %v3503 = vshrl.u32 %v3502, 7
        %v3504 = vsub.s32 %v1557, %v3503
        %v3505 = vrot.slane %v2816, %v3504
        %v3506 = vsel %vm1562, %v3505, %v3501
        %v3507 = vlaneseq
        %v3508 = vshrl.u32 %v3507, 7
        %v3509 = vsub.s32 %v1564, %v3508
        %v3510 = vrot.slane %v2821, %v3509
        %v3511 = vsel %vm1569, %v3510, %v3506
        %v3512 = vlaneseq
        %v3513 = vshrl.u32 %v3512, 7
        %v3514 = vsub.s32 %v1571, %v3513
        %v3515 = vrot.slane %v2826, %v3514
        %v3516 = vsel %vm1576, %v3515, %v3511
        %v3517 = vlaneseq
        %v3518 = vshrl.u32 %v3517, 7
        %v3519 = vsub.s32 %v1524, %v3518
        %v3520 = vrot.slane %v2831, %v3519
        %v3521 = vlaneseq
        %v3522 = vshrl.u32 %v3521, 7
        %v3523 = vsub.s32 %v1529, %v3522
        %v3524 = vrot.slane %v2836, %v3523
        %v3525 = vsel %vm1534, %v3524, %v3520
        %v3526 = vlaneseq
        %v3527 = vshrl.u32 %v3526, 7
        %v3528 = vsub.s32 %v1536, %v3527
        %v3529 = vrot.slane %v2841, %v3528
        %v3530 = vsel %vm1541, %v3529, %v3525
        %v3531 = vlaneseq
        %v3532 = vshrl.u32 %v3531, 7
        %v3533 = vsub.s32 %v1543, %v3532
        %v3534 = vrot.slane %v2846, %v3533
        %v3535 = vsel %vm1548, %v3534, %v3530
        %v3536 = vlaneseq
        %v3537 = vshrl.u32 %v3536, 7
        %v3538 = vsub.s32 %v1550, %v3537
        %v3539 = vrot.slane %v2851, %v3538
        %v3540 = vsel %vm1555, %v3539, %v3535
        %v3541 = vlaneseq
        %v3542 = vshrl.u32 %v3541, 7
        %v3543 = vsub.s32 %v1557, %v3542
        %v3544 = vrot.slane %v2856, %v3543
        %v3545 = vsel %vm1562, %v3544, %v3540
        %v3546 = vlaneseq
        %v3547 = vshrl.u32 %v3546, 7
        %v3548 = vsub.s32 %v1564, %v3547
        %v3549 = vrot.slane %v2861, %v3548
        %v3550 = vsel %vm1569, %v3549, %v3545
        %v3551 = vlaneseq
        %v3552 = vshrl.u32 %v3551, 7
        %v3553 = vsub.s32 %v1571, %v3552
        %v3554 = vrot.slane %v2866, %v3553
        %v3555 = vsel %vm1576, %v3554, %v3550
        %v3556 = vlaneseq
        %v3557 = vshrl.u32 %v3556, 7
        %v3558 = vsub.s32 %v1524, %v3557
        %v3559 = vrot.slane %v2871, %v3558
        %v3560 = vlaneseq
        %v3561 = vshrl.u32 %v3560, 7
        %v3562 = vsub.s32 %v1529, %v3561
        %v3563 = vrot.slane %v2876, %v3562
        %v3564 = vsel %vm1534, %v3563, %v3559
        %v3565 = vlaneseq
        %v3566 = vshrl.u32 %v3565, 7
        %v3567 = vsub.s32 %v1536, %v3566
        %v3568 = vrot.slane %v2881, %v3567
        %v3569 = vsel %vm1541, %v3568, %v3564
        %v3570 = vlaneseq
        %v3571 = vshrl.u32 %v3570, 7
        %v3572 = vsub.s32 %v1543, %v3571
        %v3573 = vrot.slane %v2886, %v3572
        %v3574 = vsel %vm1548, %v3573, %v3569
        %v3575 = vlaneseq
        %v3576 = vshrl.u32 %v3575, 7
        %v3577 = vsub.s32 %v1550, %v3576
        %v3578 = vrot.slane %v2891, %v3577
        %v3579 = vsel %vm1555, %v3578, %v3574
        %v3580 = vlaneseq
        %v3581 = vshrl.u32 %v3580, 7
        %v3582 = vsub.s32 %v1557, %v3581
        %v3583 = vrot.slane %v2896, %v3582
        %v3584 = vsel %vm1562, %v3583, %v3579
        %v3585 = vlaneseq
        %v3586 = vshrl.u32 %v3585, 7
        %v3587 = vsub.s32 %v1564, %v3586
        %v3588 = vrot.slane %v2901, %v3587
        %v3589 = vsel %vm1569, %v3588, %v3584
        %v3590 = vlaneseq
        %v3591 = vshrl.u32 %v3590, 7
        %v3592 = vsub.s32 %v1571, %v3591
        %v3593 = vrot.slane %v2906, %v3592
        %v3594 = vsel %vm1576, %v3593, %v3589
        %v3595 = vlaneseq
        %v3596 = vshrl.u32 %v3595, 7
        %v3597 = vsub.s32 %v1524, %v3596
        %v3598 = vrot.slane %v2911, %v3597
        %v3599 = vlaneseq
        %v3600 = vshrl.u32 %v3599, 7
        %v3601 = vsub.s32 %v1529, %v3600
        %v3602 = vrot.slane %v2916, %v3601
        %v3603 = vsel %vm1534, %v3602, %v3598
        %v3604 = vlaneseq
        %v3605 = vshrl.u32 %v3604, 7
        %v3606 = vsub.s32 %v1536, %v3605
        %v3607 = vrot.slane %v2921, %v3606
        %v3608 = vsel %vm1541, %v3607, %v3603
        %v3609 = vlaneseq
        %v3610 = vshrl.u32 %v3609, 7
        %v3611 = vsub.s32 %v1543, %v3610
        %v3612 = vrot.slane %v2926, %v3611
        %v3613 = vsel %vm1548, %v3612, %v3608
        %v3614 = vlaneseq
        %v3615 = vshrl.u32 %v3614, 7
        %v3616 = vsub.s32 %v1550, %v3615
        %v3617 = vrot.slane %v2931, %v3616
        %v3618 = vsel %vm1555, %v3617, %v3613
        %v3619 = vlaneseq
        %v3620 = vshrl.u32 %v3619, 7
        %v3621 = vsub.s32 %v1557, %v3620
        %v3622 = vrot.slane %v2936, %v3621
        %v3623 = vsel %vm1562, %v3622, %v3618
        %v3624 = vlaneseq
        %v3625 = vshrl.u32 %v3624, 7
        %v3626 = vsub.s32 %v1564, %v3625
        %v3627 = vrot.slane %v2941, %v3626
        %v3628 = vsel %vm1569, %v3627, %v3623
        %v3629 = vlaneseq
        %v3630 = vshrl.u32 %v3629, 7
        %v3631 = vsub.s32 %v1571, %v3630
        %v3632 = vrot.slane %v2946, %v3631
        %v3633 = vsel %vm1576, %v3632, %v3628
        %v3634 = vlaneseq
        %v3635 = vshrl.u32 %v3634, 7
        %v3636 = vsub.s32 %v1524, %v3635
        %v3637 = vrot.slane %v2951, %v3636
        %v3638 = vlaneseq
        %v3639 = vshrl.u32 %v3638, 7
        %v3640 = vsub.s32 %v1529, %v3639
        %v3641 = vrot.slane %v2956, %v3640
        %v3642 = vsel %vm1534, %v3641, %v3637
        %v3643 = vlaneseq
        %v3644 = vshrl.u32 %v3643, 7
        %v3645 = vsub.s32 %v1536, %v3644
        %v3646 = vrot.slane %v2961, %v3645
        %v3647 = vsel %vm1541, %v3646, %v3642
        %v3648 = vlaneseq
        %v3649 = vshrl.u32 %v3648, 7
        %v3650 = vsub.s32 %v1543, %v3649
        %v3651 = vrot.slane %v2966, %v3650
        %v3652 = vsel %vm1548, %v3651, %v3647
        %v3653 = vlaneseq
        %v3654 = vshrl.u32 %v3653, 7
        %v3655 = vsub.s32 %v1550, %v3654
        %v3656 = vrot.slane %v2971, %v3655
        %v3657 = vsel %vm1555, %v3656, %v3652
        %v3658 = vlaneseq
        %v3659 = vshrl.u32 %v3658, 7
        %v3660 = vsub.s32 %v1557, %v3659
        %v3661 = vrot.slane %v2976, %v3660
        %v3662 = vsel %vm1562, %v3661, %v3657
        %v3663 = vlaneseq
        %v3664 = vshrl.u32 %v3663, 7
        %v3665 = vsub.s32 %v1564, %v3664
        %v3666 = vrot.slane %v2981, %v3665
        %v3667 = vsel %vm1569, %v3666, %v3662
        %v3668 = vlaneseq
        %v3669 = vshrl.u32 %v3668, 7
        %v3670 = vsub.s32 %v1571, %v3669
        %v3671 = vrot.slane %v2986, %v3670
        %v3672 = vsel %vm1576, %v3671, %v3667
        %v3673 = vlaneseq
        %v3674 = vshrl.u32 %v3673, 7
        %v3675 = vsub.s32 %v1524, %v3674
        %v3676 = vrot.slane %v2991, %v3675
        %v3677 = vlaneseq
        %v3678 = vshrl.u32 %v3677, 7
        %v3679 = vsub.s32 %v1529, %v3678
        %v3680 = vrot.slane %v2996, %v3679
        %v3681 = vsel %vm1534, %v3680, %v3676
        %v3682 = vlaneseq
        %v3683 = vshrl.u32 %v3682, 7
        %v3684 = vsub.s32 %v1536, %v3683
        %v3685 = vrot.slane %v3001, %v3684
        %v3686 = vsel %vm1541, %v3685, %v3681
        %v3687 = vlaneseq
        %v3688 = vshrl.u32 %v3687, 7
        %v3689 = vsub.s32 %v1543, %v3688
        %v3690 = vrot.slane %v3006, %v3689
        %v3691 = vsel %vm1548, %v3690, %v3686
        %v3692 = vlaneseq
        %v3693 = vshrl.u32 %v3692, 7
        %v3694 = vsub.s32 %v1550, %v3693
        %v3695 = vrot.slane %v3011, %v3694
        %v3696 = vsel %vm1555, %v3695, %v3691
        %v3697 = vlaneseq
        %v3698 = vshrl.u32 %v3697, 7
        %v3699 = vsub.s32 %v1557, %v3698
        %v3700 = vrot.slane %v3016, %v3699
        %v3701 = vsel %vm1562, %v3700, %v3696
        %v3702 = vlaneseq
        %v3703 = vshrl.u32 %v3702, 7
        %v3704 = vsub.s32 %v1564, %v3703
        %v3705 = vrot.slane %v3021, %v3704
        %v3706 = vsel %vm1569, %v3705, %v3701
        %v3707 = vlaneseq
        %v3708 = vshrl.u32 %v3707, 7
        %v3709 = vsub.s32 %v1571, %v3708
        %v3710 = vrot.slane %v3026, %v3709
        %v3711 = vsel %vm1576, %v3710, %v3706
        %v3712 = vlaneseq
        %v3713 = vshrl.u32 %v3712, 7
        %v3714 = vsub.s32 %v1524, %v3713
        %v3715 = vrot.slane %v3031, %v3714
        %v3716 = vlaneseq
        %v3717 = vshrl.u32 %v3716, 7
        %v3718 = vsub.s32 %v1529, %v3717
        %v3719 = vrot.slane %v3036, %v3718
        %v3720 = vsel %vm1534, %v3719, %v3715
        %v3721 = vlaneseq
        %v3722 = vshrl.u32 %v3721, 7
        %v3723 = vsub.s32 %v1536, %v3722
        %v3724 = vrot.slane %v3041, %v3723
        %v3725 = vsel %vm1541, %v3724, %v3720
        %v3726 = vlaneseq
        %v3727 = vshrl.u32 %v3726, 7
        %v3728 = vsub.s32 %v1543, %v3727
        %v3729 = vrot.slane %v3046, %v3728
        %v3730 = vsel %vm1548, %v3729, %v3725
        %v3731 = vlaneseq
        %v3732 = vshrl.u32 %v3731, 7
        %v3733 = vsub.s32 %v1550, %v3732
        %v3734 = vrot.slane %v3051, %v3733
        %v3735 = vsel %vm1555, %v3734, %v3730
        %v3736 = vlaneseq
        %v3737 = vshrl.u32 %v3736, 7
        %v3738 = vsub.s32 %v1557, %v3737
        %v3739 = vrot.slane %v3056, %v3738
        %v3740 = vsel %vm1562, %v3739, %v3735
        %v3741 = vlaneseq
        %v3742 = vshrl.u32 %v3741, 7
        %v3743 = vsub.s32 %v1564, %v3742
        %v3744 = vrot.slane %v3061, %v3743
        %v3745 = vsel %vm1569, %v3744, %v3740
        %v3746 = vlaneseq
        %v3747 = vshrl.u32 %v3746, 7
        %v3748 = vsub.s32 %v1571, %v3747
        %v3749 = vrot.slane %v3066, %v3748
        %v3750 = vsel %vm1576, %v3749, %v3745
        %v3751 = vlaneseq
        %v3752 = vshrl.u32 %v3751, 7
        %v3753 = vsub.s32 %v1524, %v3752
        %v3754 = vrot.slane %v3071, %v3753
        %v3755 = vlaneseq
        %v3756 = vshrl.u32 %v3755, 7
        %v3757 = vsub.s32 %v1529, %v3756
        %v3758 = vrot.slane %v3076, %v3757
        %v3759 = vsel %vm1534, %v3758, %v3754
        %v3760 = vlaneseq
        %v3761 = vshrl.u32 %v3760, 7
        %v3762 = vsub.s32 %v1536, %v3761
        %v3763 = vrot.slane %v3081, %v3762
        %v3764 = vsel %vm1541, %v3763, %v3759
        %v3765 = vlaneseq
        %v3766 = vshrl.u32 %v3765, 7
        %v3767 = vsub.s32 %v1543, %v3766
        %v3768 = vrot.slane %v3086, %v3767
        %v3769 = vsel %vm1548, %v3768, %v3764
        %v3770 = vlaneseq
        %v3771 = vshrl.u32 %v3770, 7
        %v3772 = vsub.s32 %v1550, %v3771
        %v3773 = vrot.slane %v3091, %v3772
        %v3774 = vsel %vm1555, %v3773, %v3769
        %v3775 = vlaneseq
        %v3776 = vshrl.u32 %v3775, 7
        %v3777 = vsub.s32 %v1557, %v3776
        %v3778 = vrot.slane %v3096, %v3777
        %v3779 = vsel %vm1562, %v3778, %v3774
        %v3780 = vlaneseq
        %v3781 = vshrl.u32 %v3780, 7
        %v3782 = vsub.s32 %v1564, %v3781
        %v3783 = vrot.slane %v3101, %v3782
        %v3784 = vsel %vm1569, %v3783, %v3779
        %v3785 = vlaneseq
        %v3786 = vshrl.u32 %v3785, 7
        %v3787 = vsub.s32 %v1571, %v3786
        %v3788 = vrot.slane %v3106, %v3787
        %v3789 = vsel %vm1576, %v3788, %v3784
        %v3790 = vsel %vm1851, %v3555, %v3516
        %v3791 = vsel %vm1853, %v3594, %v3790
        %v3792 = vsel %vm1855, %v3633, %v3791
        %v3793 = vsel %vm1857, %v3672, %v3792
        %v3794 = vsel %vm1859, %v3711, %v3793
        %v3795 = vsel %vm1861, %v3750, %v3794
        %v3796 = vsel %vm1863, %v3789, %v3795
        %3798 = vst.msk [vmem:[%s282] sm:$0xff] %vm1866, %v3796
        %s3799 = sand.u32 %s129, 1
        %s3800 = scalar_lea.sflag [#allocation4], %s3799
        %s3801 = sand.u32 %s129, 1
        %s3802 = smul.addr %s3801, 16
        %s3803 = scalar_lea.vmem [#allocation7], %s3802
        %s3804 = sand.u32 %s155, 1
        %s3805 = scalar_lea.sflag [#allocation9], %s3804
        %s3806 = sand.u32 %s155, 1
        %s3807 = smul.addr %s3806, 8
        %s3808 = scalar_lea.vmem [#allocation8], %s3807
        // Predicated region
        $region52: #{attention_pallas.1} parent=35 // pred_check
          %p3809 = pneg %p139
        $region53: #{attention_pallas.1} parent=35 // pred_check_branch
          %3811 = sbr.rel (%p3809) target = $region55
        $region54: #{attention_pallas.1} parent=35 // pred_region
          %s3813 = ssub.s32 256, 256
          %3814 = vsyncadd %s3800, %s3813
          %s3815 = smul.addr %s27, 2
          %s3816 = smul.addr %s3815, 128
          %s3817 = scalar_lea.hbm %s4, %s3816
          %s3819 = sshll.u32 %s3803, 4
          %s3820 = int_to_ptr.vmem [resolvable:$true] %s3819
          %3822 = dma.vmem_to_hbm [thread:$0]  %s3820, 256, %s3817, %s3800
        $region55: #{attention_pallas.1} parent=35 // pred_fallthru
          _
        // Predicated region
        $region56: #{attention_pallas.1} parent=35 // pred_check
          %p3823 = pneg %p165
        $region57: #{attention_pallas.1} parent=35 // pred_check_branch
          %3825 = sbr.rel (%p3823) target = $region59
        $region58: #{attention_pallas.1} parent=35 // pred_region
          %s3827 = ssub.s32 128, 128
          %3828 = vsyncadd %s3805, %s3827
          %s3829 = smul.addr %s27, 128
          %s3830 = scalar_lea.hbm %s5, %s3829
          %s3832 = sshll.u32 %s3808, 4
          %s3833 = int_to_ptr.vmem [resolvable:$true] %s3832
          %3835 = dma.vmem_to_hbm [thread:$0]  %s3833, 128, %s3830, %s3805
        $region59: #{attention_pallas.1} parent=35 // pred_fallthru
          _
      $region36: #{attention_pallas.1} parent=5 // pred_fallthru
        _
      %p3836 = scmp.le.s32.totalorder 2, %s22
      // Predicated region
      $region60: #{attention_pallas.1} parent=5 // pred_check
        %p3837 = pneg %p3836
      $region61: #{attention_pallas.1} parent=5 // pred_check_branch
        %3839 = sbr.rel (%p3837) target = $region63
      $region62: #{attention_pallas.1} parent=5 // pred_region
        %s3840 = ssub.s32 %s22, 2
        // Predicated region
        $region64: #{attention_pallas.1} parent=62 // pred_check
          %p3841 = pneg %p145
        $region65: #{attention_pallas.1} parent=62 // pred_check_branch
          %3843 = sbr.rel (%p3841) target = $region67
        $region66: #{attention_pallas.1} parent=62 // pred_region
          %s3844 = sand.u32 %s130, 1
          %s3845 = scalar_lea.sflag [#allocation4], %s3844
          %s3846 = sand.u32 %s130, 1
          %s3847 = smul.addr %s3846, 16
          %s3848 = scalar_lea.vmem [#allocation7], %s3847
          %3849 = dma.done %s3845, 256
        $region67: #{attention_pallas.1} parent=62 // pred_fallthru
          _
        // Predicated region
        $region68: #{attention_pallas.1} parent=62 // pred_check
          %p3850 = pneg %p171
        $region69: #{attention_pallas.1} parent=62 // pred_check_branch
          %3852 = sbr.rel (%p3850) target = $region71
        $region70: #{attention_pallas.1} parent=62 // pred_region
          %s3853 = sand.u32 %s156, 1
          %s3854 = scalar_lea.sflag [#allocation9], %s3853
          %s3855 = sand.u32 %s156, 1
          %s3856 = smul.addr %s3855, 8
          %s3857 = scalar_lea.vmem [#allocation8], %s3856
          %3858 = dma.done %s3854, 128
        $region71: #{attention_pallas.1} parent=62 // pred_fallthru
          _
      $region63: #{attention_pallas.1} parent=5 // pred_fallthru
        _
    $region6: #{attention_pallas.1} parent=1 // loop_footer
      %s26 = sadd.s32 1, %s22
    $region7: #{attention_pallas.1} parent=1 // loop_footer_branch
      %21 = sbr.rel target = $region3
    $region8: #{attention_pallas.1} parent=1 // loop_exit
      _
    %3859 = vsyncpa [#allocation3], 1
    %s3860 = scalar_lea.sflag [#allocation3], 1
    %3861 = vsyncpa %s3860, 1
    %3862 = vsyncpa [#allocation6], 1
    %3863 = vsyncpa [#allocation4], 1
    %s3864 = scalar_lea.sflag [#allocation4], 1
    %3865 = vsyncpa %s3864, 1
    %3866 = vsyncpa [#allocation9], 1
    %s3867 = scalar_lea.sflag [#allocation9], 1
    %3868 = vsyncpa %s3867, 1

</llo_original>
